<compile_context>
chip_gen: v5e
topology: v5e:2x2
jax: 0.10.0
libtpu: 0.0.40
codegen_flags: <defaults>
</compile_context>

<pallas_src>
import functools

import jax
import jax.numpy as jnp
from jax.experimental import pallas as pl
from jax.experimental.pallas import tpu as pltpu

_LANE = 128          # running top-k scratches are one 128-lane vreg wide
_SMALL_C_MAX = 16    # <= this many channels: VPU broadcast-MAC path (no MXU)


def _knn_merge_kernel(q_ref, kt_ref, idx_ref,
                      sc_ref, runv_ref, runi_ref, newv_ref, newi_ref,
                      *, k: int, n_real: int, small_c: bool):
    """One (batch, row-tile, key-tile) grid step.

    q_ref:   (1, TILE_M, C)    f32 queries (unit-norm), resident across key tiles
    kt_ref:  (1, C, TILE_N)    f32 keys for this key tile (pre-transposed in XLA)
    idx_ref: (1, TILE_M, k)    i32 neighbor indices (stored on the last key tile)
    sc_ref:  (TILE_M, TILE_N)  f32 score slab, masked in place
    runv_ref/runi_ref: (TILE_M, 128) running top-k values / global indices
    newv_ref/newi_ref: (TILE_M, 128) this merge's winners (written per pass)
    """
    tile_n = sc_ref.shape[-1]
    n_idx = pl.program_id(2)
    n_start = n_idx * tile_n

    neg_inf = jnp.float32(-jnp.inf)
    big_id = jnp.int32(2 ** 30)

    @pl.when(n_idx == 0)
    def _init():
        runv_ref[...] = jnp.full_like(runv_ref, neg_inf)
        runi_ref[...] = jnp.full_like(runi_ref, -1)

    q = q_ref[0]            # (TILE_M, C)
    kt = kt_ref[0]          # (C, TILE_N)
    if small_c:
        # Tiny contraction: C broadcast multiply-adds on the VPU; skips the MXU
        # (and the zero-padded HBM/VMEM traffic the old version paid).
        s = q[:, 0:1] * kt[0:1, :]
        for c in range(1, q.shape[-1]):
            s = s + q[:, c:c + 1] * kt[c:c + 1, :]
    else:
        s = jnp.dot(q, kt, preferred_element_type=jnp.float32)

    # Global column ids of this key tile; padded columns (>= n_real) -> -inf.
    col_ids = n_start + jax.lax.broadcasted_iota(jnp.int32, (1, tile_n), 1)
    sc_ref[...] = jnp.where(col_ids < n_real, s, neg_inf)

    # k merge passes over {running top-k} U {this key tile}.  Each pass:
    # value max, min-over-global-id among the maxima (deterministic smallest-
    # index tie-break), in-place -inf mask of the winner at its source, and a
    # single-lane write of the winner into the "new" scratches.
    # TODO(synk): if the serial XLU reduces saturate at large k, switch to a
    # two-level (per-128-lane chunk maxima) reduction scheme.
    for kk in range(k):
        sc = sc_ref[...]
        rv = runv_ref[...]
        ri = runi_ref[...]
        v = jnp.maximum(jnp.max(sc, axis=-1, keepdims=True),
                        jnp.max(rv, axis=-1, keepdims=True))        # (TILE_M, 1)
        g_tile = jnp.min(jnp.where(sc == v, col_ids, big_id),
                         axis=-1, keepdims=True)
        g_run = jnp.min(jnp.where(rv == v, ri, big_id),
                        axis=-1, keepdims=True)
        g = jnp.minimum(g_tile, g_run)                               # (TILE_M, 1)
        newv_ref[:, kk:kk + 1] = v
        newi_ref[:, kk:kk + 1] = g
        if kk + 1 < k:
            sc_ref[...] = jnp.where(col_ids == g, neg_inf, sc)
            runv_ref[...] = jnp.where(ri == g, neg_inf, rv)

    # Publish the merged top-k as the running state for the next key tile.
    lane = jax.lax.broadcasted_iota(jnp.int32, (1, _LANE), 1)
    runv_ref[...] = jnp.where(lane < k, newv_ref[...], neg_inf)
    runi_ref[...] = jnp.where(lane < k, newi_ref[...], -1)

    @pl.when(n_idx == pl.num_programs(2) - 1)
    def _emit():
        # Tiny (TILE_M, k) store once per row tile; score-slab work dominates.
        idx_ref[0] = runi_ref[:, :k]


def _largest_tile(n: int, candidates) -> int:
    for t in candidates:
        if n % t == 0:
            return t
    return 128


def _vmem_capacity_bytes() -> int:
    try:
        info = pltpu.get_tpu_info()
        cap = getattr(info, "vmem_capacity_bytes", None)
        if cap:
            return int(cap)
    except Exception:
        pass
    return 64 * 1024 * 1024        # conservative (v7x-sized) fallback


def dense_dilated_knn_graph(x_nchw, k: int):
    """JAX/Pallas equivalent of DenseDilatedKnnGraph(k).forward(x).

    x_nchw: (B, C, N, 1) float array.
    Returns edge_idx: (2, B, N, k) int32 (stack of nn_idx and center_idx).
    """
    B, C, N, one = x_nchw.shape
    assert one == 1, "expected trailing singleton spatial dim (B, C, N, 1)"
    assert 1 <= k <= N, "k must be in [1, num_points]"
    assert k <= _LANE, "running top-k state is one 128-lane vreg wide"

    # --- XLA-side prep (cheap, O(B*N*C)): layout, normalize, pad points. ---
    x_bnc = jnp.transpose(x_nchw[..., 0], (0, 2, 1)).astype(jnp.float32)  # (B,N,C)
    norm = jnp.sqrt(jnp.sum(x_bnc * x_bnc, axis=-1, keepdims=True))
    xn = x_bnc / jnp.maximum(norm, 1e-12)          # F.normalize(p=2, dim=C)
    # TODO(synk): optionally cast xn to bfloat16 (halves DMA/VMEM, 2x MXU) at
    # the cost of ~1e-3 score perturbation / near-tie reordering.

    small_c = C <= _SMALL_C_MAX
    c_pad = C if small_c else ((C + 127) // 128) * 128   # no HBM pad for tiny C
    n_pad = ((N + 127) // 128) * 128

    xq = jnp.pad(xn, ((0, 0), (0, n_pad - N), (0, c_pad - C)))    # (B,n_pad,c_pad)
    keys_t = jnp.transpose(xq, (0, 2, 1))                         # (B,c_pad,n_pad)

    vmem_cap = int(_vmem_capacity_bytes() * 3 // 4)    # leave compiler headroom

    # Bigger row tiles on 128 MiB parts (v5e/v6e); smaller on 64 MiB v7x.
    m_cands = (1024, 512, 256, 128) if vmem_cap >= (80 << 20) else (512, 256, 128)
    tile_m = _largest_tile(n_pad, m_cands)
    tile_n = _largest_tile(n_pad, (2048, 1024, 512, 256, 128))
    num_m = n_pad // tile_m
    num_n = n_pad // tile_n
    # TODO(synk): for N with no large 128-multiple divisor this degrades to
    # 128x128 tiles; a cdiv grid with masked edge tiles would allow bigger ones.

    slab = tile_m * tile_n * 4
    vmem_est = (3 * slab                               # score scratch + temporaries
                + 4 * tile_m * _LANE * 4               # running/new top-k scratches
                + 2 * tile_m * max(c_pad, _LANE) * 4   # queries (double-buffered)
                + 2 * max(c_pad, 8) * tile_n * 4       # keys (double-buffered)
                + 2 * tile_m * _LANE * 4               # index output (double-buffered)
                + (4 << 20))
    vmem_limit = int(min(vmem_cap, max(vmem_est, 16 << 20)))

    kernel = functools.partial(_knn_merge_kernel, k=k, n_real=N, small_c=small_c)
    nn_idx_pad = pl.pallas_call(
        kernel,
        out_shape=jax.ShapeDtypeStruct((B, n_pad, k), jnp.int32),
        grid_spec=pltpu.PrefetchScalarGridSpec(
            num_scalar_prefetch=0,
            grid=(B, num_m, num_n),              # key-tile axis last ("arbitrary")
            in_specs=[
                pl.BlockSpec((1, tile_m, c_pad), lambda b, m, n: (b, m, 0)),
                pl.BlockSpec((1, c_pad, tile_n), lambda b, m, n: (b, 0, n)),
            ],
            out_specs=pl.BlockSpec((1, tile_m, k), lambda b, m, n: (b, m, 0)),
            scratch_shapes=[
                pltpu.VMEM((tile_m, tile_n), jnp.float32),   # score slab
                pltpu.VMEM((tile_m, _LANE), jnp.float32),    # running values
                pltpu.VMEM((tile_m, _LANE), jnp.int32),      # running indices
                pltpu.VMEM((tile_m, _LANE), jnp.float32),    # new values
                pltpu.VMEM((tile_m, _LANE), jnp.int32),      # new indices
            ],
        ),
        compiler_params=pltpu.CompilerParams(
            dimension_semantics=("parallel", "parallel", "arbitrary"),
            vmem_limit_bytes=vmem_limit),
    )(xq, keys_t)

    nn_idx = nn_idx_pad[:, :N, :]                    # drop padded query rows

    # TODO(synk): torch.topk/arange give int64 indices; int32 is TPU-native.
    center_idx = jnp.broadcast_to(
        jnp.arange(N, dtype=jnp.int32)[None, :, None], (B, N, k))
    return jnp.stack((nn_idx, center_idx), axis=0)   # (2, B, N, k)


def _reference_dist(x_nchw):
    """Plain-JAX pairwise distance (value-level sanity check)."""
    x = jnp.transpose(x_nchw[..., 0], (0, 2, 1)).astype(jnp.float32)  # (B,N,C)
    norm = jnp.sqrt(jnp.sum(x * x, axis=-1, keepdims=True))
    xn = x / jnp.maximum(norm, 1e-12)
    x_sq = jnp.sum(xn * xn, axis=-1, keepdims=True)
    inner = jnp.einsum("bnc,bmc->bnm", xn, xn)
    return x_sq - 2.0 * inner + jnp.transpose(x_sq, (0, 2, 1))


def _check(x, k):
    B, C, N, _ = x.shape
    edge_idx = jax.block_until_ready(dense_dilated_knn_graph(x, k))
    assert edge_idx.shape == (2, B, N, k), edge_idx.shape
    assert edge_idx.dtype == jnp.int32
    dist = _reference_dist(x)
    ref_vals, _ = jax.lax.top_k(-dist, k)                        # (B, N, k)
    got_vals = jnp.take_along_axis(-dist, edge_idx[0], axis=-1)  # (B, N, k)
    assert jnp.allclose(ref_vals, got_vals, atol=1e-4), "top-k values mismatch"
    assert jnp.all(edge_idx[1] ==
                   jnp.arange(N, dtype=jnp.int32)[None, :, None])


if __name__ == "__main__":
    key = jax.random.PRNGKey(0)
    k1, k2 = jax.random.split(key)
    # Small shape implied by the module: (B, C, N, 1) = (2, 4, 16, 1), k=4.
    _check(jax.random.normal(k1, (2, 4, 16, 1), dtype=jnp.float32), 4)
    # A second small case that exercises row/key tiling, the running-top-k
    # merge and N-padding (N=300 -> n_pad=384, 3x3 tiles per batch).
    _check(jax.random.normal(k2, (2, 4, 300, 1), dtype=jnp.float32), 6)
    print("KERNEL_OK")
</pallas_src>

<mosaic_0001>
module attributes {stable_mosaic.version = 11 : i64} {
  func.func @_knn_merge_kernel(%arg0: i32, %arg1: i32, %arg2: i32, %arg3: memref<1x128x4xf32, #tpu.memory_space<vmem>>, %arg4: memref<1x4x128xf32, #tpu.memory_space<vmem>>, %arg5: memref<1x128x4xi32, #tpu.memory_space<vmem>>, %arg6: memref<128x128xf32, #tpu.memory_space<vmem>>, %arg7: memref<128x128xf32, #tpu.memory_space<vmem>>, %arg8: memref<128x128xi32, #tpu.memory_space<vmem>>, %arg9: memref<128x128xf32, #tpu.memory_space<vmem>>, %arg10: memref<128x128xi32, #tpu.memory_space<vmem>>) attributes {dimension_semantics = [#tpu.dimension_semantics<parallel>, #tpu.dimension_semantics<parallel>, #tpu.dimension_semantics<arbitrary>], iteration_bounds = array<i64: 2, 1, 1>, scalar_prefetch = 0 : i64, scratch_operands = 5 : i64, tpu.core_type = #tpu.core_type<tc>, window_params = [{transform_indices = @transform_0, window_bounds = array<i64: 1, 128, 4>}, {transform_indices = @transform_1, window_bounds = array<i64: 1, 4, 128>}, {transform_indices = @transform_2, window_bounds = array<i64: 1, 128, 4>}]} {
    %c128_i32 = arith.constant 128 : i32
    %0 = arith.muli %arg2, %c128_i32 : i32
    %c0_i32 = arith.constant 0 : i32
    %1 = arith.cmpi eq, %arg2, %c0_i32 : i32
    %2 = arith.extui %1 : i1 to i32
    %cst = arith.constant 0xFF800000 : f32
    %c0_i32_0 = arith.constant 0 : i32
    %3 = arith.cmpi ne, %2, %c0_i32_0 : i32
    scf.if %3 {
      %194 = vector.broadcast %cst : f32 to vector<128x128xf32>
      %c0_99 = arith.constant 0 : index
      %c0_100 = arith.constant 0 : index
      %195 = vector.load %arg7[%c0_99, %c0_100] : memref<128x128xf32, #tpu.memory_space<vmem>>, vector<128x128xf32>
      tpu.vector_store %arg7[%c0_99, %c0_100], %194 {strides = array<i32>} : memref<128x128xf32, #tpu.memory_space<vmem>>, vector<128x128xf32>,
      %c-1_i32_101 = arith.constant -1 : i32
      %196 = vector.broadcast %c-1_i32_101 : i32 to vector<128x128xi32>
      %c0_102 = arith.constant 0 : index
      %c0_103 = arith.constant 0 : index
      %197 = vector.load %arg8[%c0_102, %c0_103] : memref<128x128xi32, #tpu.memory_space<vmem>>, vector<128x128xi32>
      tpu.vector_store %arg8[%c0_102, %c0_103], %196 {strides = array<i32>} : memref<128x128xi32, #tpu.memory_space<vmem>>, vector<128x128xi32>,
    } else {
    }
    %c0 = arith.constant 0 : index
    %c0_1 = arith.constant 0 : index
    %c0_2 = arith.constant 0 : index
    %4 = vector.load %arg3[%c0, %c0_1, %c0_2] : memref<1x128x4xf32, #tpu.memory_space<vmem>>, vector<1x128x4xf32>
    %5 = vector.shape_cast %4 : vector<1x128x4xf32> to vector<128x4xf32>
    %c0_3 = arith.constant 0 : index
    %c0_4 = arith.constant 0 : index
    %c0_5 = arith.constant 0 : index
    %6 = vector.load %arg4[%c0_3, %c0_4, %c0_5] : memref<1x4x128xf32, #tpu.memory_space<vmem>>, vector<1x4x128xf32>
    %7 = vector.shape_cast %6 : vector<1x4x128xf32> to vector<4x128xf32>
    %8 = vector.extract_strided_slice %5 {offsets = [0, 0], sizes = [128, 1], strides = [1, 1]} : vector<128x4xf32> to vector<128x1xf32>
    %9 = vector.extract_strided_slice %7 {offsets = [0, 0], sizes = [1, 128], strides = [1, 1]} : vector<4x128xf32> to vector<1x128xf32>
    %10 = vector.broadcast %8 : vector<128x1xf32> to vector<128x128xf32>
    %11 = vector.broadcast %9 : vector<1x128xf32> to vector<128x128xf32>
    %12 = arith.mulf %10, %11 : vector<128x128xf32>
    %13 = vector.extract_strided_slice %5 {offsets = [0, 1], sizes = [128, 1], strides = [1, 1]} : vector<128x4xf32> to vector<128x1xf32>
    %14 = vector.extract_strided_slice %7 {offsets = [1, 0], sizes = [1, 128], strides = [1, 1]} : vector<4x128xf32> to vector<1x128xf32>
    %15 = vector.broadcast %13 : vector<128x1xf32> to vector<128x128xf32>
    %16 = vector.broadcast %14 : vector<1x128xf32> to vector<128x128xf32>
    %17 = arith.mulf %15, %16 : vector<128x128xf32>
    %18 = arith.addf %12, %17 : vector<128x128xf32>
    %19 = vector.extract_strided_slice %5 {offsets = [0, 2], sizes = [128, 1], strides = [1, 1]} : vector<128x4xf32> to vector<128x1xf32>
    %20 = vector.extract_strided_slice %7 {offsets = [2, 0], sizes = [1, 128], strides = [1, 1]} : vector<4x128xf32> to vector<1x128xf32>
    %21 = vector.broadcast %19 : vector<128x1xf32> to vector<128x128xf32>
    %22 = vector.broadcast %20 : vector<1x128xf32> to vector<128x128xf32>
    %23 = arith.mulf %21, %22 : vector<128x128xf32>
    %24 = arith.addf %18, %23 : vector<128x128xf32>
    %25 = vector.extract_strided_slice %5 {offsets = [0, 3], sizes = [128, 1], strides = [1, 1]} : vector<128x4xf32> to vector<128x1xf32>
    %26 = vector.extract_strided_slice %7 {offsets = [3, 0], sizes = [1, 128], strides = [1, 1]} : vector<4x128xf32> to vector<1x128xf32>
    %27 = vector.broadcast %25 : vector<128x1xf32> to vector<128x128xf32>
    %28 = vector.broadcast %26 : vector<1x128xf32> to vector<128x128xf32>
    %29 = arith.mulf %27, %28 : vector<128x128xf32>
    %30 = arith.addf %24, %29 : vector<128x128xf32>
    %31 = tpu.iota {dimensions = array<i32: 1>} : vector<1x128xi32>
    %32 = vector.broadcast %0 : i32 to vector<1x128xi32>
    %33 = arith.addi %32, %31 : vector<1x128xi32>
    %c16_i32 = arith.constant 16 : i32
    %34 = vector.broadcast %c16_i32 : i32 to vector<1x128xi32>
    %35 = arith.cmpi slt, %33, %34 : vector<1x128xi32>
    %cst_6 = arith.constant 0xFF800000 : f32
    %36 = vector.shape_cast %35 : vector<1x128xi1> to vector<1x128xi1>
    %37 = vector.broadcast %36 : vector<1x128xi1> to vector<128x128xi1>
    %38 = vector.broadcast %cst_6 : f32 to vector<128x128xf32>
    %39 = arith.select %37, %30, %38 : vector<128x128xi1>, vector<128x128xf32>
    %c0_7 = arith.constant 0 : index
    %c0_8 = arith.constant 0 : index
    %40 = vector.load %arg6[%c0_7, %c0_8] : memref<128x128xf32, #tpu.memory_space<vmem>>, vector<128x128xf32>
    tpu.vector_store %arg6[%c0_7, %c0_8], %39 {strides = array<i32>} : memref<128x128xf32, #tpu.memory_space<vmem>>, vector<128x128xf32>,
    %c0_9 = arith.constant 0 : index
    %c0_10 = arith.constant 0 : index
    %41 = vector.load %arg6[%c0_9, %c0_10] : memref<128x128xf32, #tpu.memory_space<vmem>>, vector<128x128xf32>
    %c0_11 = arith.constant 0 : index
    %c0_12 = arith.constant 0 : index
    %42 = vector.load %arg7[%c0_11, %c0_12] : memref<128x128xf32, #tpu.memory_space<vmem>>, vector<128x128xf32>
    %c0_13 = arith.constant 0 : index
    %c0_14 = arith.constant 0 : index
    %43 = vector.load %arg8[%c0_13, %c0_14] : memref<128x128xi32, #tpu.memory_space<vmem>>, vector<128x128xi32>
    %cst_15 = arith.constant dense<0xFF800000> : vector<128xf32>
    %44 = vector.multi_reduction <maximumf>, %41, %cst_15 [1] : vector<128x128xf32> to vector<128xf32>
    %45 = vector.shape_cast %44 : vector<128xf32> to vector<128x1xf32>
    %cst_16 = arith.constant dense<0xFF800000> : vector<128xf32>
    %46 = vector.multi_reduction <maximumf>, %42, %cst_16 [1] : vector<128x128xf32> to vector<128xf32>
    %47 = vector.shape_cast %46 : vector<128xf32> to vector<128x1xf32>
    %48 = arith.maximumf %45, %47 : vector<128x1xf32>
    %49 = vector.broadcast %48 : vector<128x1xf32> to vector<128x128xf32>
    %50 = arith.cmpf oeq, %41, %49 : vector<128x128xf32>
    %c1073741824_i32 = arith.constant 1073741824 : i32
    %51 = vector.shape_cast %33 : vector<1x128xi32> to vector<1x128xi32>
    %52 = vector.broadcast %51 : vector<1x128xi32> to vector<128x128xi32>
    %53 = vector.broadcast %c1073741824_i32 : i32 to vector<128x128xi32>
    %54 = arith.select %50, %52, %53 : vector<128x128xi1>, vector<128x128xi32>
    %cst_17 = arith.constant dense<2147483647> : vector<128xi32>
    %55 = vector.multi_reduction <minsi>, %54, %cst_17 [1] : vector<128x128xi32> to vector<128xi32>
    %56 = vector.shape_cast %55 : vector<128xi32> to vector<128x1xi32>
    %57 = vector.broadcast %48 : vector<128x1xf32> to vector<128x128xf32>
    %58 = arith.cmpf oeq, %42, %57 : vector<128x128xf32>
    %c1073741824_i32_18 = arith.constant 1073741824 : i32
    %59 = vector.broadcast %c1073741824_i32_18 : i32 to vector<128x128xi32>
    %60 = arith.select %58, %43, %59 : vector<128x128xi1>, vector<128x128xi32>
    %cst_19 = arith.constant dense<2147483647> : vector<128xi32>
    %61 = vector.multi_reduction <minsi>, %60, %cst_19 [1] : vector<128x128xi32> to vector<128xi32>
    %62 = vector.shape_cast %61 : vector<128xi32> to vector<128x1xi32>
    %63 = arith.minsi %56, %62 : vector<128x1xi32>
    %c0_20 = arith.constant 0 : index
    %c0_21 = arith.constant 0 : index
    %64 = vector.load %arg9[%c0_20, %c0_21] : memref<128x128xf32, #tpu.memory_space<vmem>>, vector<128x1xf32>
    tpu.vector_store %arg9[%c0_20, %c0_21], %48 {strides = array<i32>} : memref<128x128xf32, #tpu.memory_space<vmem>>, vector<128x1xf32>,
    %c0_22 = arith.constant 0 : index
    %c0_23 = arith.constant 0 : index
    %65 = vector.load %arg10[%c0_22, %c0_23] : memref<128x128xi32, #tpu.memory_space<vmem>>, vector<128x1xi32>
    tpu.vector_store %arg10[%c0_22, %c0_23], %63 {strides = array<i32>} : memref<128x128xi32, #tpu.memory_space<vmem>>, vector<128x1xi32>,
    %66 = vector.broadcast %33 : vector<1x128xi32> to vector<128x128xi32>
    %67 = vector.broadcast %63 : vector<128x1xi32> to vector<128x128xi32>
    %68 = arith.cmpi eq, %66, %67 : vector<128x128xi32>
    %cst_24 = arith.constant 0xFF800000 : f32
    %69 = vector.broadcast %cst_24 : f32 to vector<128x128xf32>
    %70 = arith.select %68, %69, %41 : vector<128x128xi1>, vector<128x128xf32>
    %c0_25 = arith.constant 0 : index
    %c0_26 = arith.constant 0 : index
    %71 = vector.load %arg6[%c0_25, %c0_26] : memref<128x128xf32, #tpu.memory_space<vmem>>, vector<128x128xf32>
    tpu.vector_store %arg6[%c0_25, %c0_26], %70 {strides = array<i32>} : memref<128x128xf32, #tpu.memory_space<vmem>>, vector<128x128xf32>,
    %72 = vector.broadcast %63 : vector<128x1xi32> to vector<128x128xi32>
    %73 = arith.cmpi eq, %43, %72 : vector<128x128xi32>
    %cst_27 = arith.constant 0xFF800000 : f32
    %74 = vector.broadcast %cst_27 : f32 to vector<128x128xf32>
    %75 = arith.select %73, %74, %42 : vector<128x128xi1>, vector<128x128xf32>
    %c0_28 = arith.constant 0 : index
    %c0_29 = arith.constant 0 : index
    %76 = vector.load %arg7[%c0_28, %c0_29] : memref<128x128xf32, #tpu.memory_space<vmem>>, vector<128x128xf32>
    tpu.vector_store %arg7[%c0_28, %c0_29], %75 {strides = array<i32>} : memref<128x128xf32, #tpu.memory_space<vmem>>, vector<128x128xf32>,
    %c0_30 = arith.constant 0 : index
    %c0_31 = arith.constant 0 : index
    %77 = vector.load %arg6[%c0_30, %c0_31] : memref<128x128xf32, #tpu.memory_space<vmem>>, vector<128x128xf32>
    %c0_32 = arith.constant 0 : index
    %c0_33 = arith.constant 0 : index
    %78 = vector.load %arg7[%c0_32, %c0_33] : memref<128x128xf32, #tpu.memory_space<vmem>>, vector<128x128xf32>
    %c0_34 = arith.constant 0 : index
    %c0_35 = arith.constant 0 : index
    %79 = vector.load %arg8[%c0_34, %c0_35] : memref<128x128xi32, #tpu.memory_space<vmem>>, vector<128x128xi32>
    %cst_36 = arith.constant dense<0xFF800000> : vector<128xf32>
    %80 = vector.multi_reduction <maximumf>, %77, %cst_36 [1] : vector<128x128xf32> to vector<128xf32>
    %81 = vector.shape_cast %80 : vector<128xf32> to vector<128x1xf32>
    %cst_37 = arith.constant dense<0xFF800000> : vector<128xf32>
    %82 = vector.multi_reduction <maximumf>, %78, %cst_37 [1] : vector<128x128xf32> to vector<128xf32>
    %83 = vector.shape_cast %82 : vector<128xf32> to vector<128x1xf32>
    %84 = arith.maximumf %81, %83 : vector<128x1xf32>
    %85 = vector.broadcast %84 : vector<128x1xf32> to vector<128x128xf32>
    %86 = arith.cmpf oeq, %77, %85 : vector<128x128xf32>
    %c1073741824_i32_38 = arith.constant 1073741824 : i32
    %87 = vector.shape_cast %33 : vector<1x128xi32> to vector<1x128xi32>
    %88 = vector.broadcast %87 : vector<1x128xi32> to vector<128x128xi32>
    %89 = vector.broadcast %c1073741824_i32_38 : i32 to vector<128x128xi32>
    %90 = arith.select %86, %88, %89 : vector<128x128xi1>, vector<128x128xi32>
    %cst_39 = arith.constant dense<2147483647> : vector<128xi32>
    %91 = vector.multi_reduction <minsi>, %90, %cst_39 [1] : vector<128x128xi32> to vector<128xi32>
    %92 = vector.shape_cast %91 : vector<128xi32> to vector<128x1xi32>
    %93 = vector.broadcast %84 : vector<128x1xf32> to vector<128x128xf32>
    %94 = arith.cmpf oeq, %78, %93 : vector<128x128xf32>
    %c1073741824_i32_40 = arith.constant 1073741824 : i32
    %95 = vector.broadcast %c1073741824_i32_40 : i32 to vector<128x128xi32>
    %96 = arith.select %94, %79, %95 : vector<128x128xi1>, vector<128x128xi32>
    %cst_41 = arith.constant dense<2147483647> : vector<128xi32>
    %97 = vector.multi_reduction <minsi>, %96, %cst_41 [1] : vector<128x128xi32> to vector<128xi32>
    %98 = vector.shape_cast %97 : vector<128xi32> to vector<128x1xi32>
    %99 = arith.minsi %92, %98 : vector<128x1xi32>
    %c0_42 = arith.constant 0 : index
    %c1 = arith.constant 1 : index
    %100 = vector.load %arg9[%c0_42, %c1] : memref<128x128xf32, #tpu.memory_space<vmem>>, vector<128x1xf32>
    tpu.vector_store %arg9[%c0_42, %c1], %84 {strides = array<i32>} : memref<128x128xf32, #tpu.memory_space<vmem>>, vector<128x1xf32>,
    %c0_43 = arith.constant 0 : index
    %c1_44 = arith.constant 1 : index
    %101 = vector.load %arg10[%c0_43, %c1_44] : memref<128x128xi32, #tpu.memory_space<vmem>>, vector<128x1xi32>
    tpu.vector_store %arg10[%c0_43, %c1_44], %99 {strides = array<i32>} : memref<128x128xi32, #tpu.memory_space<vmem>>, vector<128x1xi32>,
    %102 = vector.broadcast %33 : vector<1x128xi32> to vector<128x128xi32>
    %103 = vector.broadcast %99 : vector<128x1xi32> to vector<128x128xi32>
    %104 = arith.cmpi eq, %102, %103 : vector<128x128xi32>
    %cst_45 = arith.constant 0xFF800000 : f32
    %105 = vector.broadcast %cst_45 : f32 to vector<128x128xf32>
    %106 = arith.select %104, %105, %77 : vector<128x128xi1>, vector<128x128xf32>
    %c0_46 = arith.constant 0 : index
    %c0_47 = arith.constant 0 : index
    %107 = vector.load %arg6[%c0_46, %c0_47] : memref<128x128xf32, #tpu.memory_space<vmem>>, vector<128x128xf32>
    tpu.vector_store %arg6[%c0_46, %c0_47], %106 {strides = array<i32>} : memref<128x128xf32, #tpu.memory_space<vmem>>, vector<128x128xf32>,
    %108 = vector.broadcast %99 : vector<128x1xi32> to vector<128x128xi32>
    %109 = arith.cmpi eq, %79, %108 : vector<128x128xi32>
    %cst_48 = arith.constant 0xFF800000 : f32
    %110 = vector.broadcast %cst_48 : f32 to vector<128x128xf32>
    %111 = arith.select %109, %110, %78 : vector<128x128xi1>, vector<128x128xf32>
    %c0_49 = arith.constant 0 : index
    %c0_50 = arith.constant 0 : index
    %112 = vector.load %arg7[%c0_49, %c0_50] : memref<128x128xf32, #tpu.memory_space<vmem>>, vector<128x128xf32>
    tpu.vector_store %arg7[%c0_49, %c0_50], %111 {strides = array<i32>} : memref<128x128xf32, #tpu.memory_space<vmem>>, vector<128x128xf32>,
    %c0_51 = arith.constant 0 : index
    %c0_52 = arith.constant 0 : index
    %113 = vector.load %arg6[%c0_51, %c0_52] : memref<128x128xf32, #tpu.memory_space<vmem>>, vector<128x128xf32>
    %c0_53 = arith.constant 0 : index
    %c0_54 = arith.constant 0 : index
    %114 = vector.load %arg7[%c0_53, %c0_54] : memref<128x128xf32, #tpu.memory_space<vmem>>, vector<128x128xf32>
    %c0_55 = arith.constant 0 : index
    %c0_56 = arith.constant 0 : index
    %115 = vector.load %arg8[%c0_55, %c0_56] : memref<128x128xi32, #tpu.memory_space<vmem>>, vector<128x128xi32>
    %cst_57 = arith.constant dense<0xFF800000> : vector<128xf32>
    %116 = vector.multi_reduction <maximumf>, %113, %cst_57 [1] : vector<128x128xf32> to vector<128xf32>
    %117 = vector.shape_cast %116 : vector<128xf32> to vector<128x1xf32>
    %cst_58 = arith.constant dense<0xFF800000> : vector<128xf32>
    %118 = vector.multi_reduction <maximumf>, %114, %cst_58 [1] : vector<128x128xf32> to vector<128xf32>
    %119 = vector.shape_cast %118 : vector<128xf32> to vector<128x1xf32>
    %120 = arith.maximumf %117, %119 : vector<128x1xf32>
    %121 = vector.broadcast %120 : vector<128x1xf32> to vector<128x128xf32>
    %122 = arith.cmpf oeq, %113, %121 : vector<128x128xf32>
    %c1073741824_i32_59 = arith.constant 1073741824 : i32
    %123 = vector.shape_cast %33 : vector<1x128xi32> to vector<1x128xi32>
    %124 = vector.broadcast %123 : vector<1x128xi32> to vector<128x128xi32>
    %125 = vector.broadcast %c1073741824_i32_59 : i32 to vector<128x128xi32>
    %126 = arith.select %122, %124, %125 : vector<128x128xi1>, vector<128x128xi32>
    %cst_60 = arith.constant dense<2147483647> : vector<128xi32>
    %127 = vector.multi_reduction <minsi>, %126, %cst_60 [1] : vector<128x128xi32> to vector<128xi32>
    %128 = vector.shape_cast %127 : vector<128xi32> to vector<128x1xi32>
    %129 = vector.broadcast %120 : vector<128x1xf32> to vector<128x128xf32>
    %130 = arith.cmpf oeq, %114, %129 : vector<128x128xf32>
    %c1073741824_i32_61 = arith.constant 1073741824 : i32
    %131 = vector.broadcast %c1073741824_i32_61 : i32 to vector<128x128xi32>
    %132 = arith.select %130, %115, %131 : vector<128x128xi1>, vector<128x128xi32>
    %cst_62 = arith.constant dense<2147483647> : vector<128xi32>
    %133 = vector.multi_reduction <minsi>, %132, %cst_62 [1] : vector<128x128xi32> to vector<128xi32>
    %134 = vector.shape_cast %133 : vector<128xi32> to vector<128x1xi32>
    %135 = arith.minsi %128, %134 : vector<128x1xi32>
    %c0_63 = arith.constant 0 : index
    %c2 = arith.constant 2 : index
    %136 = vector.load %arg9[%c0_63, %c2] : memref<128x128xf32, #tpu.memory_space<vmem>>, vector<128x1xf32>
    tpu.vector_store %arg9[%c0_63, %c2], %120 {strides = array<i32>} : memref<128x128xf32, #tpu.memory_space<vmem>>, vector<128x1xf32>,
    %c0_64 = arith.constant 0 : index
    %c2_65 = arith.constant 2 : index
    %137 = vector.load %arg10[%c0_64, %c2_65] : memref<128x128xi32, #tpu.memory_space<vmem>>, vector<128x1xi32>
    tpu.vector_store %arg10[%c0_64, %c2_65], %135 {strides = array<i32>} : memref<128x128xi32, #tpu.memory_space<vmem>>, vector<128x1xi32>,
    %138 = vector.broadcast %33 : vector<1x128xi32> to vector<128x128xi32>
    %139 = vector.broadcast %135 : vector<128x1xi32> to vector<128x128xi32>
    %140 = arith.cmpi eq, %138, %139 : vector<128x128xi32>
    %cst_66 = arith.constant 0xFF800000 : f32
    %141 = vector.broadcast %cst_66 : f32 to vector<128x128xf32>
    %142 = arith.select %140, %141, %113 : vector<128x128xi1>, vector<128x128xf32>
    %c0_67 = arith.constant 0 : index
    %c0_68 = arith.constant 0 : index
    %143 = vector.load %arg6[%c0_67, %c0_68] : memref<128x128xf32, #tpu.memory_space<vmem>>, vector<128x128xf32>
    tpu.vector_store %arg6[%c0_67, %c0_68], %142 {strides = array<i32>} : memref<128x128xf32, #tpu.memory_space<vmem>>, vector<128x128xf32>,
    %144 = vector.broadcast %135 : vector<128x1xi32> to vector<128x128xi32>
    %145 = arith.cmpi eq, %115, %144 : vector<128x128xi32>
    %cst_69 = arith.constant 0xFF800000 : f32
    %146 = vector.broadcast %cst_69 : f32 to vector<128x128xf32>
    %147 = arith.select %145, %146, %114 : vector<128x128xi1>, vector<128x128xf32>
    %c0_70 = arith.constant 0 : index
    %c0_71 = arith.constant 0 : index
    %148 = vector.load %arg7[%c0_70, %c0_71] : memref<128x128xf32, #tpu.memory_space<vmem>>, vector<128x128xf32>
    tpu.vector_store %arg7[%c0_70, %c0_71], %147 {strides = array<i32>} : memref<128x128xf32, #tpu.memory_space<vmem>>, vector<128x128xf32>,
    %c0_72 = arith.constant 0 : index
    %c0_73 = arith.constant 0 : index
    %149 = vector.load %arg6[%c0_72, %c0_73] : memref<128x128xf32, #tpu.memory_space<vmem>>, vector<128x128xf32>
    %c0_74 = arith.constant 0 : index
    %c0_75 = arith.constant 0 : index
    %150 = vector.load %arg7[%c0_74, %c0_75] : memref<128x128xf32, #tpu.memory_space<vmem>>, vector<128x128xf32>
    %c0_76 = arith.constant 0 : index
    %c0_77 = arith.constant 0 : index
    %151 = vector.load %arg8[%c0_76, %c0_77] : memref<128x128xi32, #tpu.memory_space<vmem>>, vector<128x128xi32>
    %cst_78 = arith.constant dense<0xFF800000> : vector<128xf32>
    %152 = vector.multi_reduction <maximumf>, %149, %cst_78 [1] : vector<128x128xf32> to vector<128xf32>
    %153 = vector.shape_cast %152 : vector<128xf32> to vector<128x1xf32>
    %cst_79 = arith.constant dense<0xFF800000> : vector<128xf32>
    %154 = vector.multi_reduction <maximumf>, %150, %cst_79 [1] : vector<128x128xf32> to vector<128xf32>
    %155 = vector.shape_cast %154 : vector<128xf32> to vector<128x1xf32>
    %156 = arith.maximumf %153, %155 : vector<128x1xf32>
    %157 = vector.broadcast %156 : vector<128x1xf32> to vector<128x128xf32>
    %158 = arith.cmpf oeq, %149, %157 : vector<128x128xf32>
    %c1073741824_i32_80 = arith.constant 1073741824 : i32
    %159 = vector.shape_cast %33 : vector<1x128xi32> to vector<1x128xi32>
    %160 = vector.broadcast %159 : vector<1x128xi32> to vector<128x128xi32>
    %161 = vector.broadcast %c1073741824_i32_80 : i32 to vector<128x128xi32>
    %162 = arith.select %158, %160, %161 : vector<128x128xi1>, vector<128x128xi32>
    %cst_81 = arith.constant dense<2147483647> : vector<128xi32>
    %163 = vector.multi_reduction <minsi>, %162, %cst_81 [1] : vector<128x128xi32> to vector<128xi32>
    %164 = vector.shape_cast %163 : vector<128xi32> to vector<128x1xi32>
    %165 = vector.broadcast %156 : vector<128x1xf32> to vector<128x128xf32>
    %166 = arith.cmpf oeq, %150, %165 : vector<128x128xf32>
    %c1073741824_i32_82 = arith.constant 1073741824 : i32
    %167 = vector.broadcast %c1073741824_i32_82 : i32 to vector<128x128xi32>
    %168 = arith.select %166, %151, %167 : vector<128x128xi1>, vector<128x128xi32>
    %cst_83 = arith.constant dense<2147483647> : vector<128xi32>
    %169 = vector.multi_reduction <minsi>, %168, %cst_83 [1] : vector<128x128xi32> to vector<128xi32>
    %170 = vector.shape_cast %169 : vector<128xi32> to vector<128x1xi32>
    %171 = arith.minsi %164, %170 : vector<128x1xi32>
    %c0_84 = arith.constant 0 : index
    %c3 = arith.constant 3 : index
    %172 = vector.load %arg9[%c0_84, %c3] : memref<128x128xf32, #tpu.memory_space<vmem>>, vector<128x1xf32>
    tpu.vector_store %arg9[%c0_84, %c3], %156 {strides = array<i32>} : memref<128x128xf32, #tpu.memory_space<vmem>>, vector<128x1xf32>,
    %c0_85 = arith.constant 0 : index
    %c3_86 = arith.constant 3 : index
    %173 = vector.load %arg10[%c0_85, %c3_86] : memref<128x128xi32, #tpu.memory_space<vmem>>, vector<128x1xi32>
    tpu.vector_store %arg10[%c0_85, %c3_86], %171 {strides = array<i32>} : memref<128x128xi32, #tpu.memory_space<vmem>>, vector<128x1xi32>,
    %174 = tpu.iota {dimensions = array<i32: 1>} : vector<1x128xi32>
    %c4_i32 = arith.constant 4 : i32
    %175 = vector.broadcast %c4_i32 : i32 to vector<1x128xi32>
    %176 = arith.cmpi slt, %174, %175 : vector<1x128xi32>
    %c0_87 = arith.constant 0 : index
    %c0_88 = arith.constant 0 : index
    %177 = vector.load %arg9[%c0_87, %c0_88] : memref<128x128xf32, #tpu.memory_space<vmem>>, vector<128x128xf32>
    %cst_89 = arith.constant 0xFF800000 : f32
    %178 = vector.shape_cast %176 : vector<1x128xi1> to vector<1x128xi1>
    %179 = vector.broadcast %178 : vector<1x128xi1> to vector<128x128xi1>
    %180 = vector.broadcast %cst_89 : f32 to vector<128x128xf32>
    %181 = arith.select %179, %177, %180 : vector<128x128xi1>, vector<128x128xf32>
    %c0_90 = arith.constant 0 : index
    %c0_91 = arith.constant 0 : index
    %182 = vector.load %arg7[%c0_90, %c0_91] : memref<128x128xf32, #tpu.memory_space<vmem>>, vector<128x128xf32>
    tpu.vector_store %arg7[%c0_90, %c0_91], %181 {strides = array<i32>} : memref<128x128xf32, #tpu.memory_space<vmem>>, vector<128x128xf32>,
    %c4_i32_92 = arith.constant 4 : i32
    %183 = vector.broadcast %c4_i32_92 : i32 to vector<1x128xi32>
    %184 = arith.cmpi slt, %174, %183 : vector<1x128xi32>
    %c0_93 = arith.constant 0 : index
    %c0_94 = arith.constant 0 : index
    %185 = vector.load %arg10[%c0_93, %c0_94] : memref<128x128xi32, #tpu.memory_space<vmem>>, vector<128x128xi32>
    %c-1_i32 = arith.constant -1 : i32
    %186 = vector.shape_cast %184 : vector<1x128xi1> to vector<1x128xi1>
    %187 = vector.broadcast %186 : vector<1x128xi1> to vector<128x128xi1>
    %188 = vector.broadcast %c-1_i32 : i32 to vector<128x128xi32>
    %189 = arith.select %187, %185, %188 : vector<128x128xi1>, vector<128x128xi32>
    %c0_95 = arith.constant 0 : index
    %c0_96 = arith.constant 0 : index
    %190 = vector.load %arg8[%c0_95, %c0_96] : memref<128x128xi32, #tpu.memory_space<vmem>>, vector<128x128xi32>
    tpu.vector_store %arg8[%c0_95, %c0_96], %189 {strides = array<i32>} : memref<128x128xi32, #tpu.memory_space<vmem>>, vector<128x128xi32>,
    %c0_i32_97 = arith.constant 0 : i32
    %191 = arith.cmpi eq, %arg2, %c0_i32_97 : i32
    %192 = arith.extui %191 : i1 to i32
    %c0_i32_98 = arith.constant 0 : i32
    %193 = arith.cmpi ne, %192, %c0_i32_98 : i32
    scf.if %193 {
      %c0_99 = arith.constant 0 : index
      %c0_100 = arith.constant 0 : index
      %194 = vector.load %arg8[%c0_99, %c0_100] : memref<128x128xi32, #tpu.memory_space<vmem>>, vector<128x4xi32>
      %c0_101 = arith.constant 0 : index
      %c0_102 = arith.constant 0 : index
      %c0_103 = arith.constant 0 : index
      %195 = vector.load %arg5[%c0_101, %c0_102, %c0_103] : memref<1x128x4xi32, #tpu.memory_space<vmem>>, vector<1x128x4xi32>
      %196 = vector.shape_cast %195 : vector<1x128x4xi32> to vector<128x4xi32>
      %197 = vector.shape_cast %194 : vector<128x4xi32> to vector<1x128x4xi32>
      tpu.vector_store %arg5[%c0_101, %c0_102, %c0_103], %197 {strides = array<i32>} : memref<1x128x4xi32, #tpu.memory_space<vmem>>, vector<1x128x4xi32>,
    } else {
    }
    return
  }
  func.func @transform_0(%arg0: i32, %arg1: i32, %arg2: i32) -> (i32, i32, i32) {
    %c0_i32 = arith.constant 0 : i32
    %c0_i32_0 = arith.constant 0 : i32
    return %arg0, %arg1, %c0_i32 : i32, i32, i32
  }
  func.func @transform_1(%arg0: i32, %arg1: i32, %arg2: i32) -> (i32, i32, i32) {
    %c0_i32 = arith.constant 0 : i32
    %c0_i32_0 = arith.constant 0 : i32
    return %arg0, %c0_i32, %arg2 : i32, i32, i32
  }
  func.func @transform_2(%arg0: i32, %arg1: i32, %arg2: i32) -> (i32, i32, i32) {
    %c0_i32 = arith.constant 0 : i32
    %c0_i32_0 = arith.constant 0 : i32
    return %arg0, %arg1, %c0_i32 : i32, i32, i32
  }
}

</mosaic_0001>

<llo_original>
// kernel: tpu_custom_call.1
$region0: #{tpu_custom_call.1}
  #allocation0 [shape = 'u32[]', space=smem, size = 0x4, offset = 0x4, fixed_abs, tag = 'smem constant byte address 0x4 - core index']
  #allocation1 [shape = 'u32[72,128]{1,0:T(1,128)}', space=vmem, size = 0x9000, scoped, tag = 'internal scratch']
  #allocation2 [shape = 'f32[128,128]{1,0:T(8,128)}', space=vmem, size = 0x10000, scoped, tag = 'scratch operand']
  #allocation3 [shape = 'f32[128,128]{1,0:T(8,128)}', space=vmem, size = 0x10000, scoped, tag = 'scratch operand']
  #allocation4 [shape = 's32[128,128]{1,0:T(8,128)}', space=vmem, size = 0x10000, scoped, tag = 'scratch operand']
  #allocation5 [shape = 'f32[128,128]{1,0:T(8,128)}', space=vmem, size = 0x10000, scoped, tag = 'scratch operand']
  #allocation6 [shape = 's32[128,128]{1,0:T(8,128)}', space=vmem, size = 0x10000, scoped, tag = 'scratch operand']
  %s0 = inlined_call_operand.vmem [shape: f32[2,128,4], index: 0, kind: input, shape index: {}]
  %s1 = inlined_call_operand.vmem [shape: f32[2,4,128], index: 1, kind: input, shape index: {}]
  %s2 = inlined_call_operand.vmem [shape: s32[2,128,4], index: 2, kind: output, shape index: {}]
  %s3 = sld [smem:[#allocation0]]
  $region49: #{tpu_custom_call.1} parent=0
    _
  %s5 = ssub.s32 1, %s3
  %s6 = scalar_select 0, %s5, %s3
  loop: start=0, step=1, limit=4
  $region2: #{tpu_custom_call.1} parent=0 // loop_pre_header
    _
  $region3: #{tpu_custom_call.1} parent=0 // loop_header
    %s8 = sphi 0, %s12
    %p9 = scmp.ge.s32.totalorder %s8, 4
    %s15 = sphi 0, %s34
    %s16 = sphi 0, %s30
    %s17 = sphi 0, %s26
    %s18 = sphi 0, %s15
    %s19 = sphi 0, %s16
    %s20 = sphi 0, %s17
    %s21 = sphi 0, %s18
    %s22 = sphi 0, %s19
    %s23 = sphi 0, %s20
    %s39 = sphi 0, %s41
    %s42 = sphi 0, %s39
    %s43 = sphi 0, %s42
    %s59 = sphi 0, %s43
    %s67 = sphi 0, %s69
    %s70 = sphi 0, %s67
    %s71 = sphi 0, %s70
    %s87 = sphi 0, %s71
    %s95 = sphi 0, %s97
    %s98 = sphi 0, %s95
    %s99 = sphi 0, %s98
    %s115 = sphi 0, %s99
  $region4: #{tpu_custom_call.1} parent=0 // loop_header_branch
    %11 = sbr.rel (%p9) target = $region8
  $region5: #{tpu_custom_call.1} parent=0 // loop_body
    %s13 = ssub.s32 %s8, 1
    %s14 = ssub.s32 %s8, 2
    %s24 = sadd.s32 1, %s17
    %p25 = scmp.ge.s32.totalorder %s24, 1
    %s26 = scalar_select %p25, 0, %s24
    %s27 = sadd.s32 1, %s16
    %s28 = scalar_select %p25, %s27, %s16
    %p29 = scmp.ge.s32.totalorder %s28, 1
    %s30 = scalar_select %p29, 0, %s28
    %s31 = sadd.s32 1, %s15
    %s32 = scalar_select %p29, %s31, %s15
    %p33 = scmp.ge.s32.totalorder %s32, 2
    %s34 = scalar_select %p33, 0, %s32
    %s35 = ssub.s32 %s15, %s34
    %s36 = ssub.s32 %s16, %s30
    %s37 = sor.u32 %s35, %s36
    %p38 = scmp.eq.s32.totalorder %s37, 0
    %s40 = sadd.s32 %s39, 1
    %s41 = scalar_select %p38, %s39, %s40
    %p44 = pneg %p38
    %p45 = scmp.eq.s32.totalorder %s8, 1
    %p46 = por %p44, %p45
    %p47 = scmp.ne.s32.totalorder %s39, %s42
    %p48 = scmp.eq.s32.totalorder %s8, 0
    %p49 = por %p47, %p48
    %p50 = scmp.ne.s32.totalorder %s39, %s42
    %p51 = scmp.eq.s32.totalorder %s13, 1
    %p52 = por %p50, %p51
    %p53 = scmp.ne.s32.totalorder %s42, %s43
    %p54 = scmp.eq.s32.totalorder %s13, 0
    %p55 = por %p53, %p54
    %p56 = scmp.ne.s32.totalorder %s42, %s43
    %p57 = scmp.eq.s32.totalorder %s14, 1
    %p58 = por %p56, %p57
    %p60 = scmp.ne.s32.totalorder %s43, %s59
    %p61 = scmp.eq.s32.totalorder %s14, 0
    %p62 = por %p60, %p61
    %s63 = ssub.s32 %s15, %s34
    %s64 = ssub.s32 %s17, %s26
    %s65 = sor.u32 %s63, %s64
    %p66 = scmp.eq.s32.totalorder %s65, 0
    %s68 = sadd.s32 %s67, 1
    %s69 = scalar_select %p66, %s67, %s68
    %p72 = pneg %p66
    %p73 = scmp.eq.s32.totalorder %s8, 1
    %p74 = por %p72, %p73
    %p75 = scmp.ne.s32.totalorder %s67, %s70
    %p76 = scmp.eq.s32.totalorder %s8, 0
    %p77 = por %p75, %p76
    %p78 = scmp.ne.s32.totalorder %s67, %s70
    %p79 = scmp.eq.s32.totalorder %s13, 1
    %p80 = por %p78, %p79
    %p81 = scmp.ne.s32.totalorder %s70, %s71
    %p82 = scmp.eq.s32.totalorder %s13, 0
    %p83 = por %p81, %p82
    %p84 = scmp.ne.s32.totalorder %s70, %s71
    %p85 = scmp.eq.s32.totalorder %s14, 1
    %p86 = por %p84, %p85
    %p88 = scmp.ne.s32.totalorder %s71, %s87
    %p89 = scmp.eq.s32.totalorder %s14, 0
    %p90 = por %p88, %p89
    %s91 = ssub.s32 %s15, %s34
    %s92 = ssub.s32 %s16, %s30
    %s93 = sor.u32 %s91, %s92
    %p94 = scmp.eq.s32.totalorder %s93, 0
    %s96 = sadd.s32 %s95, 1
    %s97 = scalar_select %p94, %s95, %s96
    %p100 = pneg %p94
    %p101 = scmp.eq.s32.totalorder %s8, 1
    %p102 = por %p100, %p101
    %p103 = scmp.ne.s32.totalorder %s95, %s98
    %p104 = scmp.eq.s32.totalorder %s8, 0
    %p105 = por %p103, %p104
    %p106 = scmp.ne.s32.totalorder %s95, %s98
    %p107 = scmp.eq.s32.totalorder %s13, 1
    %p108 = por %p106, %p107
    %p109 = scmp.ne.s32.totalorder %s98, %s99
    %p110 = scmp.eq.s32.totalorder %s13, 0
    %p111 = por %p109, %p110
    %p112 = scmp.ne.s32.totalorder %s98, %s99
    %p113 = scmp.eq.s32.totalorder %s14, 1
    %p114 = por %p112, %p113
    %p116 = scmp.ne.s32.totalorder %s99, %s115
    %p117 = scmp.eq.s32.totalorder %s14, 0
    %p118 = por %p116, %p117
    %p119 = scmp.le.s32.totalorder 1, %s8
    %p120 = scmp.lt.s32.totalorder %s8, 3
    %p121 = pnand %p119, %p120
    %p122 = pneg %p121
    // Predicated region
    $region9: #{tpu_custom_call.1} parent=5 // pred_check
      _
    $region10: #{tpu_custom_call.1} parent=5 // pred_check_branch
      %124 = sbr.rel (%p121) target = $region12
    $region11: #{tpu_custom_call.1} parent=5 // pred_region
      %s125 = ssub.s32 %s8, 1
    $region12: #{tpu_custom_call.1} parent=5 // pred_fallthru
      _
    %p126 = scmp.lt.s32.totalorder %s8, 2
    // Predicated region
    $region13: #{tpu_custom_call.1} parent=5 // pred_check
      %p127 = pneg %p126
    $region14: #{tpu_custom_call.1} parent=5 // pred_check_branch
      %129 = sbr.rel (%p127) target = $region16
    $region15: #{tpu_custom_call.1} parent=5 // pred_region
      // Predicated region
      $region17: #{tpu_custom_call.1} parent=15 // pred_check
        %p130 = pneg %p49
      $region18: #{tpu_custom_call.1} parent=15 // pred_check_branch
        %132 = sbr.rel (%p130) target = $region20
      $region19: #{tpu_custom_call.1} parent=15 // pred_region
        %s133 = smul.u32 16, %s16
        %p134 = scmp.lt.s32.totalorder %s15, 1
        %s135 = scalar_select %p134, %s15, 1
        %p136 = scmp.lt.s32.totalorder %s133, 15
        %s137 = scalar_select %p136, %s133, 15
        %s138 = smul.addr %s135, 16
        %s139 = sadd.s32 %s137, %s138
        %s140 = smul.addr %s139, 8
        %s141 = scalar_lea.vmem %s0, %s140
        %s142 = smul.u32 16, %s16
      $region20: #{tpu_custom_call.1} parent=15 // pred_fallthru
        _
      // Predicated region
      $region21: #{tpu_custom_call.1} parent=15 // pred_check
        %p143 = pneg %p77
      $region22: #{tpu_custom_call.1} parent=15 // pred_check_branch
        %145 = sbr.rel (%p143) target = $region24
      $region23: #{tpu_custom_call.1} parent=15 // pred_region
        %p146 = scmp.lt.s32.totalorder %s15, 1
        %s147 = scalar_select %p146, %s15, 1
        %p148 = scmp.lt.s32.totalorder %s17, 0
        %s149 = scalar_select %p148, %s17, 0
        %s150 = sadd.s32 %s149, %s147
        %s151 = smul.addr %s150, 4
        %s152 = scalar_lea.vmem %s1, %s151
      $region24: #{tpu_custom_call.1} parent=15 // pred_fallthru
        _
    $region16: #{tpu_custom_call.1} parent=5 // pred_fallthru
      _
    %p153 = scmp.le.s32.totalorder 1, %s8
    %p154 = scmp.lt.s32.totalorder %s8, 3
    %p155 = pnand %p153, %p154
    %p156 = pneg %p155
    // Predicated region
    $region25: #{tpu_custom_call.1} parent=5 // pred_check
      _
    $region26: #{tpu_custom_call.1} parent=5 // pred_check_branch
      %158 = sbr.rel (%p155) target = $region28
    $region27: #{tpu_custom_call.1} parent=5 // pred_region
      %s159 = ssub.s32 %s8, 1
      %s160 = smul.u32 16, %s19
      %p161 = scmp.lt.s32.totalorder %s18, 1
      %s162 = scalar_select %p161, %s18, 1
      %p163 = scmp.lt.s32.totalorder %s160, 15
      %s164 = scalar_select %p163, %s160, 15
      %s165 = smul.addr %s162, 16
      %s166 = sadd.s32 %s164, %s165
      %s167 = smul.addr %s166, 8
      %s168 = scalar_lea.vmem %s0, %s167
      %p169 = pneg %p55
      %p170 = pneg %p52
      %p171 = scmp.lt.s32.totalorder %s18, 1
      %s172 = scalar_select %p171, %s18, 1
      %p173 = scmp.lt.s32.totalorder %s20, 0
      %s174 = scalar_select %p173, %s20, 0
      %s175 = sadd.s32 %s174, %s172
      %s176 = smul.addr %s175, 4
      %s177 = scalar_lea.vmem %s1, %s176
      %p178 = pneg %p83
      %p179 = pneg %p80
      %p180 = pneg %p111
      %p181 = pneg %p108
      %s182 = smul.u32 16, %s19
      %p183 = scmp.lt.s32.totalorder %s18, 1
      %s184 = scalar_select %p183, %s18, 1
      %p185 = scmp.lt.s32.totalorder %s182, 15
      %s186 = scalar_select %p185, %s182, 15
      %s187 = smul.addr %s184, 16
      %s188 = sadd.s32 %s186, %s187
      %s189 = smul.addr %s188, 8
      %s190 = scalar_lea.vmem %s2, %s189
      %s191 = smul.u32 16, %s19
      %p192 = scmp.lt.s32.totalorder %s18, 1
      %s193 = scalar_select %p192, %s18, 1
      %p194 = scmp.lt.s32.totalorder %s191, 15
      %s195 = scalar_select %p194, %s191, 15
      %s196 = smul.addr %s193, 16
      %s197 = sadd.s32 %s195, %s196
      %s198 = smul.addr %s197, 8
      %s199 = scalar_lea.vmem %s0, %s198
      %s200 = smul.u32 16, %s19
      %p201 = scmp.lt.s32.totalorder %s18, 1
      %s202 = scalar_select %p201, %s18, 1
      %p203 = scmp.lt.s32.totalorder %s20, 0
      %s204 = scalar_select %p203, %s20, 0
      %s205 = sadd.s32 %s204, %s202
      %s206 = smul.addr %s205, 4
      %s207 = scalar_lea.vmem %s1, %s206
      %s208 = smul.u32 16, %s19
      %p209 = scmp.lt.s32.totalorder %s18, 1
      %s210 = scalar_select %p209, %s18, 1
      %p211 = scmp.lt.s32.totalorder %s208, 15
      %s212 = scalar_select %p211, %s208, 15
      %s213 = smul.addr %s210, 16
      %s214 = sadd.s32 %s212, %s213
      %s215 = smul.addr %s214, 8
      %s216 = scalar_lea.vmem %s2, %s215
      %s217 = smul.u32 16, %s19
      %s218 = smul.u32 %s20, 128
      %p219 = scmp.eq.s32.totalorder %s20, 0
      // Predicated region
      $region29: #{tpu_custom_call.1} parent=27 // pred_check
        %p220 = pneg %p219
      $region30: #{tpu_custom_call.1} parent=27 // pred_check_branch
        %222 = sbr.rel (%p220) target = $region32
      $region31: #{tpu_custom_call.1} parent=27 // pred_region
        %223 = vst [vmem:[#allocation3] sm:$0xff] -inf
        %224 = vst [vmem:[#allocation3 + $0x8] sm:$0xff] -inf
        %225 = vst [vmem:[#allocation3 + $0x10] sm:$0xff] -inf
        %226 = vst [vmem:[#allocation3 + $0x18] sm:$0xff] -inf
        %227 = vst [vmem:[#allocation3 + $0x20] sm:$0xff] -inf
        %228 = vst [vmem:[#allocation3 + $0x28] sm:$0xff] -inf
        %229 = vst [vmem:[#allocation3 + $0x30] sm:$0xff] -inf
        %230 = vst [vmem:[#allocation3 + $0x38] sm:$0xff] -inf
        %231 = vst [vmem:[#allocation3 + $0x40] sm:$0xff] -inf
        %232 = vst [vmem:[#allocation3 + $0x48] sm:$0xff] -inf
        %233 = vst [vmem:[#allocation3 + $0x50] sm:$0xff] -inf
        %234 = vst [vmem:[#allocation3 + $0x58] sm:$0xff] -inf
        %235 = vst [vmem:[#allocation3 + $0x60] sm:$0xff] -inf
        %236 = vst [vmem:[#allocation3 + $0x68] sm:$0xff] -inf
        %237 = vst [vmem:[#allocation3 + $0x70] sm:$0xff] -inf
        %238 = vst [vmem:[#allocation3 + $0x78] sm:$0xff] -inf
        %239 = vst [vmem:[#allocation4] sm:$0xff] 4294967295
        %240 = vst [vmem:[#allocation4 + $0x8] sm:$0xff] 4294967295
        %241 = vst [vmem:[#allocation4 + $0x10] sm:$0xff] 4294967295
        %242 = vst [vmem:[#allocation4 + $0x18] sm:$0xff] 4294967295
        %243 = vst [vmem:[#allocation4 + $0x20] sm:$0xff] 4294967295
        %244 = vst [vmem:[#allocation4 + $0x28] sm:$0xff] 4294967295
        %245 = vst [vmem:[#allocation4 + $0x30] sm:$0xff] 4294967295
        %246 = vst [vmem:[#allocation4 + $0x38] sm:$0xff] 4294967295
        %247 = vst [vmem:[#allocation4 + $0x40] sm:$0xff] 4294967295
        %248 = vst [vmem:[#allocation4 + $0x48] sm:$0xff] 4294967295
        %249 = vst [vmem:[#allocation4 + $0x50] sm:$0xff] 4294967295
        %250 = vst [vmem:[#allocation4 + $0x58] sm:$0xff] 4294967295
        %251 = vst [vmem:[#allocation4 + $0x60] sm:$0xff] 4294967295
        %252 = vst [vmem:[#allocation4 + $0x68] sm:$0xff] 4294967295
        %253 = vst [vmem:[#allocation4 + $0x70] sm:$0xff] 4294967295
        %254 = vst [vmem:[#allocation4 + $0x78] sm:$0xff] 4294967295
      $region32: #{tpu_custom_call.1} parent=27 // pred_fallthru
        _
      %v255 = vld [vmem:[%s199] sm:$0xff]
      %v256 = vld [vmem:[%s199 + $0x8] sm:$0xff]
      %v257 = vld [vmem:[%s199 + $0x10] sm:$0xff]
      %v258 = vld [vmem:[%s199 + $0x18] sm:$0xff]
      %v259 = vld [vmem:[%s199 + $0x20] sm:$0xff]
      %v260 = vld [vmem:[%s199 + $0x28] sm:$0xff]
      %v261 = vld [vmem:[%s199 + $0x30] sm:$0xff]
      %v262 = vld [vmem:[%s199 + $0x38] sm:$0xff]
      %v263 = vld [vmem:[%s199 + $0x40] sm:$0xff]
      %v264 = vld [vmem:[%s199 + $0x48] sm:$0xff]
      %v265 = vld [vmem:[%s199 + $0x50] sm:$0xff]
      %v266 = vld [vmem:[%s199 + $0x58] sm:$0xff]
      %v267 = vld [vmem:[%s199 + $0x60] sm:$0xff]
      %v268 = vld [vmem:[%s199 + $0x68] sm:$0xff]
      %v269 = vld [vmem:[%s199 + $0x70] sm:$0xff]
      %v270 = vld [vmem:[%s199 + $0x78] sm:$0xff]
      %v271 = vld [vmem:[%s207] sm:$0xf]
      %273 = vset.pattern.permute.xlu0 0
      %274 = vperm.xlu0 %273, %v255
      %v275 = vpop.permute.xlu0 %274
      %278 = vset.pattern.permute.xlu0 0
      %279 = vperm.xlu0 %278, %v256
      %v280 = vpop.permute.xlu0 %279
      %283 = vset.pattern.permute.xlu0 0
      %284 = vperm.xlu0 %283, %v257
      %v285 = vpop.permute.xlu0 %284
      %288 = vset.pattern.permute.xlu0 0
      %289 = vperm.xlu0 %288, %v258
      %v290 = vpop.permute.xlu0 %289
      %293 = vset.pattern.permute.xlu0 0
      %294 = vperm.xlu0 %293, %v259
      %v295 = vpop.permute.xlu0 %294
      %298 = vset.pattern.permute.xlu0 0
      %299 = vperm.xlu0 %298, %v260
      %v300 = vpop.permute.xlu0 %299
      %303 = vset.pattern.permute.xlu0 0
      %304 = vperm.xlu0 %303, %v261
      %v305 = vpop.permute.xlu0 %304
      %308 = vset.pattern.permute.xlu0 0
      %309 = vperm.xlu0 %308, %v262
      %v310 = vpop.permute.xlu0 %309
      %313 = vset.pattern.permute.xlu0 0
      %314 = vperm.xlu0 %313, %v263
      %v315 = vpop.permute.xlu0 %314
      %318 = vset.pattern.permute.xlu0 0
      %319 = vperm.xlu0 %318, %v264
      %v320 = vpop.permute.xlu0 %319
      %323 = vset.pattern.permute.xlu0 0
      %324 = vperm.xlu0 %323, %v265
      %v325 = vpop.permute.xlu0 %324
      %328 = vset.pattern.permute.xlu0 0
      %329 = vperm.xlu0 %328, %v266
      %v330 = vpop.permute.xlu0 %329
      %333 = vset.pattern.permute.xlu0 0
      %334 = vperm.xlu0 %333, %v267
      %v335 = vpop.permute.xlu0 %334
      %338 = vset.pattern.permute.xlu0 0
      %339 = vperm.xlu0 %338, %v268
      %v340 = vpop.permute.xlu0 %339
      %343 = vset.pattern.permute.xlu0 0
      %344 = vperm.xlu0 %343, %v269
      %v345 = vpop.permute.xlu0 %344
      %348 = vset.pattern.permute.xlu0 0
      %349 = vperm.xlu0 %348, %v270
      %v350 = vpop.permute.xlu0 %349
      %v352 = vperm.slane %v271, 0
      %v353 = vmul.f32 %v275, %v352
      %v354 = vmul.f32 %v280, %v352
      %v355 = vmul.f32 %v285, %v352
      %v356 = vmul.f32 %v290, %v352
      %v357 = vmul.f32 %v295, %v352
      %v358 = vmul.f32 %v300, %v352
      %v359 = vmul.f32 %v305, %v352
      %v360 = vmul.f32 %v310, %v352
      %v361 = vmul.f32 %v315, %v352
      %v362 = vmul.f32 %v320, %v352
      %v363 = vmul.f32 %v325, %v352
      %v364 = vmul.f32 %v330, %v352
      %v365 = vmul.f32 %v335, %v352
      %v366 = vmul.f32 %v340, %v352
      %v367 = vmul.f32 %v345, %v352
      %v368 = vmul.f32 %v350, %v352
      %369 = vset.pattern.permute.xlu0 1
      %370 = vperm.xlu0 %369, %v255
      %v371 = vpop.permute.xlu0 %370
      %373 = vset.pattern.permute.xlu0 1
      %374 = vperm.xlu0 %373, %v256
      %v375 = vpop.permute.xlu0 %374
      %377 = vset.pattern.permute.xlu0 1
      %378 = vperm.xlu0 %377, %v257
      %v379 = vpop.permute.xlu0 %378
      %381 = vset.pattern.permute.xlu0 1
      %382 = vperm.xlu0 %381, %v258
      %v383 = vpop.permute.xlu0 %382
      %385 = vset.pattern.permute.xlu0 1
      %386 = vperm.xlu0 %385, %v259
      %v387 = vpop.permute.xlu0 %386
      %389 = vset.pattern.permute.xlu0 1
      %390 = vperm.xlu0 %389, %v260
      %v391 = vpop.permute.xlu0 %390
      %393 = vset.pattern.permute.xlu0 1
      %394 = vperm.xlu0 %393, %v261
      %v395 = vpop.permute.xlu0 %394
      %397 = vset.pattern.permute.xlu0 1
      %398 = vperm.xlu0 %397, %v262
      %v399 = vpop.permute.xlu0 %398
      %401 = vset.pattern.permute.xlu0 1
      %402 = vperm.xlu0 %401, %v263
      %v403 = vpop.permute.xlu0 %402
      %405 = vset.pattern.permute.xlu0 1
      %406 = vperm.xlu0 %405, %v264
      %v407 = vpop.permute.xlu0 %406
      %409 = vset.pattern.permute.xlu0 1
      %410 = vperm.xlu0 %409, %v265
      %v411 = vpop.permute.xlu0 %410
      %413 = vset.pattern.permute.xlu0 1
      %414 = vperm.xlu0 %413, %v266
      %v415 = vpop.permute.xlu0 %414
      %417 = vset.pattern.permute.xlu0 1
      %418 = vperm.xlu0 %417, %v267
      %v419 = vpop.permute.xlu0 %418
      %421 = vset.pattern.permute.xlu0 1
      %422 = vperm.xlu0 %421, %v268
      %v423 = vpop.permute.xlu0 %422
      %425 = vset.pattern.permute.xlu0 1
      %426 = vperm.xlu0 %425, %v269
      %v427 = vpop.permute.xlu0 %426
      %429 = vset.pattern.permute.xlu0 1
      %430 = vperm.xlu0 %429, %v270
      %v431 = vpop.permute.xlu0 %430
      %v433 = vperm.slane %v271, 1
      %v434 = vmul.f32 %v371, %v433
      %v435 = vmul.f32 %v375, %v433
      %v436 = vmul.f32 %v379, %v433
      %v437 = vmul.f32 %v383, %v433
      %v438 = vmul.f32 %v387, %v433
      %v439 = vmul.f32 %v391, %v433
      %v440 = vmul.f32 %v395, %v433
      %v441 = vmul.f32 %v399, %v433
      %v442 = vmul.f32 %v403, %v433
      %v443 = vmul.f32 %v407, %v433
      %v444 = vmul.f32 %v411, %v433
      %v445 = vmul.f32 %v415, %v433
      %v446 = vmul.f32 %v419, %v433
      %v447 = vmul.f32 %v423, %v433
      %v448 = vmul.f32 %v427, %v433
      %v449 = vmul.f32 %v431, %v433
      %v450 = vadd.f32 %v353, %v434
      %v451 = vadd.f32 %v354, %v435
      %v452 = vadd.f32 %v355, %v436
      %v453 = vadd.f32 %v356, %v437
      %v454 = vadd.f32 %v357, %v438
      %v455 = vadd.f32 %v358, %v439
      %v456 = vadd.f32 %v359, %v440
      %v457 = vadd.f32 %v360, %v441
      %v458 = vadd.f32 %v361, %v442
      %v459 = vadd.f32 %v362, %v443
      %v460 = vadd.f32 %v363, %v444
      %v461 = vadd.f32 %v364, %v445
      %v462 = vadd.f32 %v365, %v446
      %v463 = vadd.f32 %v366, %v447
      %v464 = vadd.f32 %v367, %v448
      %v465 = vadd.f32 %v368, %v449
      %466 = vset.pattern.permute.xlu0 2
      %467 = vperm.xlu0 %466, %v255
      %v468 = vpop.permute.xlu0 %467
      %470 = vset.pattern.permute.xlu0 2
      %471 = vperm.xlu0 %470, %v256
      %v472 = vpop.permute.xlu0 %471
      %474 = vset.pattern.permute.xlu0 2
      %475 = vperm.xlu0 %474, %v257
      %v476 = vpop.permute.xlu0 %475
      %478 = vset.pattern.permute.xlu0 2
      %479 = vperm.xlu0 %478, %v258
      %v480 = vpop.permute.xlu0 %479
      %482 = vset.pattern.permute.xlu0 2
      %483 = vperm.xlu0 %482, %v259
      %v484 = vpop.permute.xlu0 %483
      %486 = vset.pattern.permute.xlu0 2
      %487 = vperm.xlu0 %486, %v260
      %v488 = vpop.permute.xlu0 %487
      %490 = vset.pattern.permute.xlu0 2
      %491 = vperm.xlu0 %490, %v261
      %v492 = vpop.permute.xlu0 %491
      %494 = vset.pattern.permute.xlu0 2
      %495 = vperm.xlu0 %494, %v262
      %v496 = vpop.permute.xlu0 %495
      %498 = vset.pattern.permute.xlu0 2
      %499 = vperm.xlu0 %498, %v263
      %v500 = vpop.permute.xlu0 %499
      %502 = vset.pattern.permute.xlu0 2
      %503 = vperm.xlu0 %502, %v264
      %v504 = vpop.permute.xlu0 %503
      %506 = vset.pattern.permute.xlu0 2
      %507 = vperm.xlu0 %506, %v265
      %v508 = vpop.permute.xlu0 %507
      %510 = vset.pattern.permute.xlu0 2
      %511 = vperm.xlu0 %510, %v266
      %v512 = vpop.permute.xlu0 %511
      %514 = vset.pattern.permute.xlu0 2
      %515 = vperm.xlu0 %514, %v267
      %v516 = vpop.permute.xlu0 %515
      %518 = vset.pattern.permute.xlu0 2
      %519 = vperm.xlu0 %518, %v268
      %v520 = vpop.permute.xlu0 %519
      %522 = vset.pattern.permute.xlu0 2
      %523 = vperm.xlu0 %522, %v269
      %v524 = vpop.permute.xlu0 %523
      %526 = vset.pattern.permute.xlu0 2
      %527 = vperm.xlu0 %526, %v270
      %v528 = vpop.permute.xlu0 %527
      %v530 = vperm.slane %v271, 2
      %v531 = vmul.f32 %v468, %v530
      %v532 = vmul.f32 %v472, %v530
      %v533 = vmul.f32 %v476, %v530
      %v534 = vmul.f32 %v480, %v530
      %v535 = vmul.f32 %v484, %v530
      %v536 = vmul.f32 %v488, %v530
      %v537 = vmul.f32 %v492, %v530
      %v538 = vmul.f32 %v496, %v530
      %v539 = vmul.f32 %v500, %v530
      %v540 = vmul.f32 %v504, %v530
      %v541 = vmul.f32 %v508, %v530
      %v542 = vmul.f32 %v512, %v530
      %v543 = vmul.f32 %v516, %v530
      %v544 = vmul.f32 %v520, %v530
      %v545 = vmul.f32 %v524, %v530
      %v546 = vmul.f32 %v528, %v530
      %v547 = vadd.f32 %v450, %v531
      %v548 = vadd.f32 %v451, %v532
      %v549 = vadd.f32 %v452, %v533
      %v550 = vadd.f32 %v453, %v534
      %v551 = vadd.f32 %v454, %v535
      %v552 = vadd.f32 %v455, %v536
      %v553 = vadd.f32 %v456, %v537
      %v554 = vadd.f32 %v457, %v538
      %v555 = vadd.f32 %v458, %v539
      %v556 = vadd.f32 %v459, %v540
      %v557 = vadd.f32 %v460, %v541
      %v558 = vadd.f32 %v461, %v542
      %v559 = vadd.f32 %v462, %v543
      %v560 = vadd.f32 %v463, %v544
      %v561 = vadd.f32 %v464, %v545
      %v562 = vadd.f32 %v465, %v546
      %563 = vset.pattern.permute.xlu0 3
      %564 = vperm.xlu0 %563, %v255
      %v565 = vpop.permute.xlu0 %564
      %567 = vset.pattern.permute.xlu0 3
      %568 = vperm.xlu0 %567, %v256
      %v569 = vpop.permute.xlu0 %568
      %571 = vset.pattern.permute.xlu0 3
      %572 = vperm.xlu0 %571, %v257
      %v573 = vpop.permute.xlu0 %572
      %575 = vset.pattern.permute.xlu0 3
      %576 = vperm.xlu0 %575, %v258
      %v577 = vpop.permute.xlu0 %576
      %579 = vset.pattern.permute.xlu0 3
      %580 = vperm.xlu0 %579, %v259
      %v581 = vpop.permute.xlu0 %580
      %583 = vset.pattern.permute.xlu0 3
      %584 = vperm.xlu0 %583, %v260
      %v585 = vpop.permute.xlu0 %584
      %587 = vset.pattern.permute.xlu0 3
      %588 = vperm.xlu0 %587, %v261
      %v589 = vpop.permute.xlu0 %588
      %591 = vset.pattern.permute.xlu0 3
      %592 = vperm.xlu0 %591, %v262
      %v593 = vpop.permute.xlu0 %592
      %595 = vset.pattern.permute.xlu0 3
      %596 = vperm.xlu0 %595, %v263
      %v597 = vpop.permute.xlu0 %596
      %599 = vset.pattern.permute.xlu0 3
      %600 = vperm.xlu0 %599, %v264
      %v601 = vpop.permute.xlu0 %600
      %603 = vset.pattern.permute.xlu0 3
      %604 = vperm.xlu0 %603, %v265
      %v605 = vpop.permute.xlu0 %604
      %607 = vset.pattern.permute.xlu0 3
      %608 = vperm.xlu0 %607, %v266
      %v609 = vpop.permute.xlu0 %608
      %611 = vset.pattern.permute.xlu0 3
      %612 = vperm.xlu0 %611, %v267
      %v613 = vpop.permute.xlu0 %612
      %615 = vset.pattern.permute.xlu0 3
      %616 = vperm.xlu0 %615, %v268
      %v617 = vpop.permute.xlu0 %616
      %619 = vset.pattern.permute.xlu0 3
      %620 = vperm.xlu0 %619, %v269
      %v621 = vpop.permute.xlu0 %620
      %623 = vset.pattern.permute.xlu0 3
      %624 = vperm.xlu0 %623, %v270
      %v625 = vpop.permute.xlu0 %624
      %v627 = vperm.slane %v271, 3
      %v628 = vmul.f32 %v565, %v627
      %v629 = vmul.f32 %v569, %v627
      %v630 = vmul.f32 %v573, %v627
      %v631 = vmul.f32 %v577, %v627
      %v632 = vmul.f32 %v581, %v627
      %v633 = vmul.f32 %v585, %v627
      %v634 = vmul.f32 %v589, %v627
      %v635 = vmul.f32 %v593, %v627
      %v636 = vmul.f32 %v597, %v627
      %v637 = vmul.f32 %v601, %v627
      %v638 = vmul.f32 %v605, %v627
      %v639 = vmul.f32 %v609, %v627
      %v640 = vmul.f32 %v613, %v627
      %v641 = vmul.f32 %v617, %v627
      %v642 = vmul.f32 %v621, %v627
      %v643 = vmul.f32 %v625, %v627
      %v644 = vadd.f32 %v547, %v628
      %v645 = vadd.f32 %v548, %v629
      %v646 = vadd.f32 %v549, %v630
      %v647 = vadd.f32 %v550, %v631
      %v648 = vadd.f32 %v551, %v632
      %v649 = vadd.f32 %v552, %v633
      %v650 = vadd.f32 %v553, %v634
      %v651 = vadd.f32 %v554, %v635
      %v652 = vadd.f32 %v555, %v636
      %v653 = vadd.f32 %v556, %v637
      %v654 = vadd.f32 %v557, %v638
      %v655 = vadd.f32 %v558, %v639
      %v656 = vadd.f32 %v559, %v640
      %v657 = vadd.f32 %v560, %v641
      %v658 = vadd.f32 %v561, %v642
      %v659 = vadd.f32 %v562, %v643
      %v660 = vlaneseq
      %v661 = vand.u32 %v660, 127
      %v662 = vstv %s218
      %v663 = vadd.s32 %v662, %v661
      %vm664 = vcmp.lt.s32.totalorder %v663, 16
      %v665 = vsel %vm664, 1, 0
      %vm666 = vcmp.eq.s32.totalorder %v665, 1
      %v667 = vsel %vm666, %v644, -inf
      %v668 = vsel %vm666, %v645, -inf
      %v669 = vsel %vm666, %v646, -inf
      %v670 = vsel %vm666, %v647, -inf
      %v671 = vsel %vm666, %v648, -inf
      %v672 = vsel %vm666, %v649, -inf
      %v673 = vsel %vm666, %v650, -inf
      %v674 = vsel %vm666, %v651, -inf
      %v675 = vsel %vm666, %v652, -inf
      %v676 = vsel %vm666, %v653, -inf
      %v677 = vsel %vm666, %v654, -inf
      %v678 = vsel %vm666, %v655, -inf
      %v679 = vsel %vm666, %v656, -inf
      %v680 = vsel %vm666, %v657, -inf
      %v681 = vsel %vm666, %v658, -inf
      %v682 = vsel %vm666, %v659, -inf
      %683 = vst [vmem:[#allocation2] sm:$0xff] %v667
      %684 = vst [vmem:[#allocation2 + $0x8] sm:$0xff] %v668
      %685 = vst [vmem:[#allocation2 + $0x10] sm:$0xff] %v669
      %686 = vst [vmem:[#allocation2 + $0x18] sm:$0xff] %v670
      %687 = vst [vmem:[#allocation2 + $0x20] sm:$0xff] %v671
      %688 = vst [vmem:[#allocation2 + $0x28] sm:$0xff] %v672
      %689 = vst [vmem:[#allocation2 + $0x30] sm:$0xff] %v673
      %690 = vst [vmem:[#allocation2 + $0x38] sm:$0xff] %v674
      %691 = vst [vmem:[#allocation2 + $0x40] sm:$0xff] %v675
      %692 = vst [vmem:[#allocation2 + $0x48] sm:$0xff] %v676
      %693 = vst [vmem:[#allocation2 + $0x50] sm:$0xff] %v677
      %694 = vst [vmem:[#allocation2 + $0x58] sm:$0xff] %v678
      %695 = vst [vmem:[#allocation2 + $0x60] sm:$0xff] %v679
      %696 = vst [vmem:[#allocation2 + $0x68] sm:$0xff] %v680
      %697 = vst [vmem:[#allocation2 + $0x70] sm:$0xff] %v681
      %698 = vst [vmem:[#allocation2 + $0x78] sm:$0xff] %v682
      %v699 = vld [vmem:[#allocation2] sm:$0xff]
      %v700 = vld [vmem:[#allocation2 + $0x8] sm:$0xff]
      %v701 = vld [vmem:[#allocation2 + $0x10] sm:$0xff]
      %v702 = vld [vmem:[#allocation2 + $0x18] sm:$0xff]
      %v703 = vld [vmem:[#allocation2 + $0x20] sm:$0xff]
      %v704 = vld [vmem:[#allocation2 + $0x28] sm:$0xff]
      %v705 = vld [vmem:[#allocation2 + $0x30] sm:$0xff]
      %v706 = vld [vmem:[#allocation2 + $0x38] sm:$0xff]
      %v707 = vld [vmem:[#allocation2 + $0x40] sm:$0xff]
      %v708 = vld [vmem:[#allocation2 + $0x48] sm:$0xff]
      %v709 = vld [vmem:[#allocation2 + $0x50] sm:$0xff]
      %v710 = vld [vmem:[#allocation2 + $0x58] sm:$0xff]
      %v711 = vld [vmem:[#allocation2 + $0x60] sm:$0xff]
      %v712 = vld [vmem:[#allocation2 + $0x68] sm:$0xff]
      %v713 = vld [vmem:[#allocation2 + $0x70] sm:$0xff]
      %v714 = vld [vmem:[#allocation2 + $0x78] sm:$0xff]
      %v715 = vld [vmem:[#allocation3] sm:$0xff]
      %v716 = vld [vmem:[#allocation3 + $0x8] sm:$0xff]
      %v717 = vld [vmem:[#allocation3 + $0x10] sm:$0xff]
      %v718 = vld [vmem:[#allocation3 + $0x18] sm:$0xff]
      %v719 = vld [vmem:[#allocation3 + $0x20] sm:$0xff]
      %v720 = vld [vmem:[#allocation3 + $0x28] sm:$0xff]
      %v721 = vld [vmem:[#allocation3 + $0x30] sm:$0xff]
      %v722 = vld [vmem:[#allocation3 + $0x38] sm:$0xff]
      %v723 = vld [vmem:[#allocation3 + $0x40] sm:$0xff]
      %v724 = vld [vmem:[#allocation3 + $0x48] sm:$0xff]
      %v725 = vld [vmem:[#allocation3 + $0x50] sm:$0xff]
      %v726 = vld [vmem:[#allocation3 + $0x58] sm:$0xff]
      %v727 = vld [vmem:[#allocation3 + $0x60] sm:$0xff]
      %v728 = vld [vmem:[#allocation3 + $0x68] sm:$0xff]
      %v729 = vld [vmem:[#allocation3 + $0x70] sm:$0xff]
      %v730 = vld [vmem:[#allocation3 + $0x78] sm:$0xff]
      %v731 = vld [vmem:[#allocation4] sm:$0xff]
      %v732 = vld [vmem:[#allocation4 + $0x8] sm:$0xff]
      %v733 = vld [vmem:[#allocation4 + $0x10] sm:$0xff]
      %v734 = vld [vmem:[#allocation4 + $0x18] sm:$0xff]
      %v735 = vld [vmem:[#allocation4 + $0x20] sm:$0xff]
      %v736 = vld [vmem:[#allocation4 + $0x28] sm:$0xff]
      %v737 = vld [vmem:[#allocation4 + $0x30] sm:$0xff]
      %v738 = vld [vmem:[#allocation4 + $0x38] sm:$0xff]
      %v739 = vld [vmem:[#allocation4 + $0x40] sm:$0xff]
      %v740 = vld [vmem:[#allocation4 + $0x48] sm:$0xff]
      %v741 = vld [vmem:[#allocation4 + $0x50] sm:$0xff]
      %v742 = vld [vmem:[#allocation4 + $0x58] sm:$0xff]
      %v743 = vld [vmem:[#allocation4 + $0x60] sm:$0xff]
      %v744 = vld [vmem:[#allocation4 + $0x68] sm:$0xff]
      %v745 = vld [vmem:[#allocation4 + $0x70] sm:$0xff]
      %v746 = vld [vmem:[#allocation4 + $0x78] sm:$0xff]
      %747 = vmax.xlane.f32.xlu0 %v699
      %v748 = vpop.xlane.xlu0 %747
      %749 = vmax.xlane.f32.xlu0 %v700
      %v750 = vpop.xlane.xlu0 %749
      %751 = vmax.xlane.f32.xlu0 %v701
      %v752 = vpop.xlane.xlu0 %751
      %753 = vmax.xlane.f32.xlu0 %v702
      %v754 = vpop.xlane.xlu0 %753
      %755 = vmax.xlane.f32.xlu0 %v703
      %v756 = vpop.xlane.xlu0 %755
      %757 = vmax.xlane.f32.xlu0 %v704
      %v758 = vpop.xlane.xlu0 %757
      %759 = vmax.xlane.f32.xlu0 %v705
      %v760 = vpop.xlane.xlu0 %759
      %761 = vmax.xlane.f32.xlu0 %v706
      %v762 = vpop.xlane.xlu0 %761
      %763 = vmax.xlane.f32.xlu0 %v707
      %v764 = vpop.xlane.xlu0 %763
      %765 = vmax.xlane.f32.xlu0 %v708
      %v766 = vpop.xlane.xlu0 %765
      %767 = vmax.xlane.f32.xlu0 %v709
      %v768 = vpop.xlane.xlu0 %767
      %769 = vmax.xlane.f32.xlu0 %v710
      %v770 = vpop.xlane.xlu0 %769
      %771 = vmax.xlane.f32.xlu0 %v711
      %v772 = vpop.xlane.xlu0 %771
      %773 = vmax.xlane.f32.xlu0 %v712
      %v774 = vpop.xlane.xlu0 %773
      %775 = vmax.xlane.f32.xlu0 %v713
      %v776 = vpop.xlane.xlu0 %775
      %777 = vmax.xlane.f32.xlu0 %v714
      %v778 = vpop.xlane.xlu0 %777
      %779 = vmax.xlane.f32.xlu0 %v715
      %v780 = vpop.xlane.xlu0 %779
      %781 = vmax.xlane.f32.xlu0 %v716
      %v782 = vpop.xlane.xlu0 %781
      %783 = vmax.xlane.f32.xlu0 %v717
      %v784 = vpop.xlane.xlu0 %783
      %785 = vmax.xlane.f32.xlu0 %v718
      %v786 = vpop.xlane.xlu0 %785
      %787 = vmax.xlane.f32.xlu0 %v719
      %v788 = vpop.xlane.xlu0 %787
      %789 = vmax.xlane.f32.xlu0 %v720
      %v790 = vpop.xlane.xlu0 %789
      %791 = vmax.xlane.f32.xlu0 %v721
      %v792 = vpop.xlane.xlu0 %791
      %793 = vmax.xlane.f32.xlu0 %v722
      %v794 = vpop.xlane.xlu0 %793
      %795 = vmax.xlane.f32.xlu0 %v723
      %v796 = vpop.xlane.xlu0 %795
      %797 = vmax.xlane.f32.xlu0 %v724
      %v798 = vpop.xlane.xlu0 %797
      %799 = vmax.xlane.f32.xlu0 %v725
      %v800 = vpop.xlane.xlu0 %799
      %801 = vmax.xlane.f32.xlu0 %v726
      %v802 = vpop.xlane.xlu0 %801
      %803 = vmax.xlane.f32.xlu0 %v727
      %v804 = vpop.xlane.xlu0 %803
      %805 = vmax.xlane.f32.xlu0 %v728
      %v806 = vpop.xlane.xlu0 %805
      %807 = vmax.xlane.f32.xlu0 %v729
      %v808 = vpop.xlane.xlu0 %807
      %809 = vmax.xlane.f32.xlu0 %v730
      %v810 = vpop.xlane.xlu0 %809
      %v811 = vmax.f32 %v748, %v780
      %v812 = vmax.f32 %v750, %v782
      %v813 = vmax.f32 %v752, %v784
      %v814 = vmax.f32 %v754, %v786
      %v815 = vmax.f32 %v756, %v788
      %v816 = vmax.f32 %v758, %v790
      %v817 = vmax.f32 %v760, %v792
      %v818 = vmax.f32 %v762, %v794
      %v819 = vmax.f32 %v764, %v796
      %v820 = vmax.f32 %v766, %v798
      %v821 = vmax.f32 %v768, %v800
      %v822 = vmax.f32 %v770, %v802
      %v823 = vmax.f32 %v772, %v804
      %v824 = vmax.f32 %v774, %v806
      %v825 = vmax.f32 %v776, %v808
      %v826 = vmax.f32 %v778, %v810
      %vm827 = vcmp.eq.f32.partialorder %v699, %v811
      %vm828 = vcmp.eq.f32.partialorder %v700, %v812
      %vm829 = vcmp.eq.f32.partialorder %v701, %v813
      %vm830 = vcmp.eq.f32.partialorder %v702, %v814
      %vm831 = vcmp.eq.f32.partialorder %v703, %v815
      %vm832 = vcmp.eq.f32.partialorder %v704, %v816
      %vm833 = vcmp.eq.f32.partialorder %v705, %v817
      %vm834 = vcmp.eq.f32.partialorder %v706, %v818
      %vm835 = vcmp.eq.f32.partialorder %v707, %v819
      %vm836 = vcmp.eq.f32.partialorder %v708, %v820
      %vm837 = vcmp.eq.f32.partialorder %v709, %v821
      %vm838 = vcmp.eq.f32.partialorder %v710, %v822
      %vm839 = vcmp.eq.f32.partialorder %v711, %v823
      %vm840 = vcmp.eq.f32.partialorder %v712, %v824
      %vm841 = vcmp.eq.f32.partialorder %v713, %v825
      %vm842 = vcmp.eq.f32.partialorder %v714, %v826
      %v843 = vsel %vm827, %v663, 1073741824
      %v844 = vsel %vm828, %v663, 1073741824
      %v845 = vsel %vm829, %v663, 1073741824
      %v846 = vsel %vm830, %v663, 1073741824
      %v847 = vsel %vm831, %v663, 1073741824
      %v848 = vsel %vm832, %v663, 1073741824
      %v849 = vsel %vm833, %v663, 1073741824
      %v850 = vsel %vm834, %v663, 1073741824
      %v851 = vsel %vm835, %v663, 1073741824
      %v852 = vsel %vm836, %v663, 1073741824
      %v853 = vsel %vm837, %v663, 1073741824
      %v854 = vsel %vm838, %v663, 1073741824
      %v855 = vsel %vm839, %v663, 1073741824
      %v856 = vsel %vm840, %v663, 1073741824
      %v857 = vsel %vm841, %v663, 1073741824
      %v858 = vsel %vm842, %v663, 1073741824
      %v859 = vand.u32 %v843, 65535
      %v860 = vshra.s32 %v843, 16
      %v861 = vcvt.s32.f32 %v859
      %v862 = vcvt.s32.f32 %v860
      %863 = vmin.xlane.f32.xlu0 %v862
      %v864 = vpop.xlane.xlu0 %863
      %vm865 = vcmp.eq.f32.partialorder %v862, %v864
      %v866 = vsel %vm865, %v861, inf
      %867 = vmin.xlane.f32.xlu0 %v866
      %v868 = vpop.xlane.xlu0 %867
      %v869 = vcvt.f32.s32 %v868
      %v870 = vcvt.f32.s32 %v864
      %v871 = vshll.u32 %v870, 16
      %v872 = vadd.s32 %v871, %v869
      %v873 = vand.u32 %v844, 65535
      %v874 = vshra.s32 %v844, 16
      %v875 = vcvt.s32.f32 %v873
      %v876 = vcvt.s32.f32 %v874
      %877 = vmin.xlane.f32.xlu0 %v876
      %v878 = vpop.xlane.xlu0 %877
      %vm879 = vcmp.eq.f32.partialorder %v876, %v878
      %v880 = vsel %vm879, %v875, inf
      %881 = vmin.xlane.f32.xlu0 %v880
      %v882 = vpop.xlane.xlu0 %881
      %v883 = vcvt.f32.s32 %v882
      %v884 = vcvt.f32.s32 %v878
      %v885 = vshll.u32 %v884, 16
      %v886 = vadd.s32 %v885, %v883
      %v887 = vand.u32 %v845, 65535
      %v888 = vshra.s32 %v845, 16
      %v889 = vcvt.s32.f32 %v887
      %v890 = vcvt.s32.f32 %v888
      %891 = vmin.xlane.f32.xlu0 %v890
      %v892 = vpop.xlane.xlu0 %891
      %vm893 = vcmp.eq.f32.partialorder %v890, %v892
      %v894 = vsel %vm893, %v889, inf
      %895 = vmin.xlane.f32.xlu0 %v894
      %v896 = vpop.xlane.xlu0 %895
      %v897 = vcvt.f32.s32 %v896
      %v898 = vcvt.f32.s32 %v892
      %v899 = vshll.u32 %v898, 16
      %v900 = vadd.s32 %v899, %v897
      %v901 = vand.u32 %v846, 65535
      %v902 = vshra.s32 %v846, 16
      %v903 = vcvt.s32.f32 %v901
      %v904 = vcvt.s32.f32 %v902
      %905 = vmin.xlane.f32.xlu0 %v904
      %v906 = vpop.xlane.xlu0 %905
      %vm907 = vcmp.eq.f32.partialorder %v904, %v906
      %v908 = vsel %vm907, %v903, inf
      %909 = vmin.xlane.f32.xlu0 %v908
      %v910 = vpop.xlane.xlu0 %909
      %v911 = vcvt.f32.s32 %v910
      %v912 = vcvt.f32.s32 %v906
      %v913 = vshll.u32 %v912, 16
      %v914 = vadd.s32 %v913, %v911
      %v915 = vand.u32 %v847, 65535
      %v916 = vshra.s32 %v847, 16
      %v917 = vcvt.s32.f32 %v915
      %v918 = vcvt.s32.f32 %v916
      %919 = vmin.xlane.f32.xlu0 %v918
      %v920 = vpop.xlane.xlu0 %919
      %vm921 = vcmp.eq.f32.partialorder %v918, %v920
      %v922 = vsel %vm921, %v917, inf
      %923 = vmin.xlane.f32.xlu0 %v922
      %v924 = vpop.xlane.xlu0 %923
      %v925 = vcvt.f32.s32 %v924
      %v926 = vcvt.f32.s32 %v920
      %v927 = vshll.u32 %v926, 16
      %v928 = vadd.s32 %v927, %v925
      %v929 = vand.u32 %v848, 65535
      %v930 = vshra.s32 %v848, 16
      %v931 = vcvt.s32.f32 %v929
      %v932 = vcvt.s32.f32 %v930
      %933 = vmin.xlane.f32.xlu0 %v932
      %v934 = vpop.xlane.xlu0 %933
      %vm935 = vcmp.eq.f32.partialorder %v932, %v934
      %v936 = vsel %vm935, %v931, inf
      %937 = vmin.xlane.f32.xlu0 %v936
      %v938 = vpop.xlane.xlu0 %937
      %v939 = vcvt.f32.s32 %v938
      %v940 = vcvt.f32.s32 %v934
      %v941 = vshll.u32 %v940, 16
      %v942 = vadd.s32 %v941, %v939
      %v943 = vand.u32 %v849, 65535
      %v944 = vshra.s32 %v849, 16
      %v945 = vcvt.s32.f32 %v943
      %v946 = vcvt.s32.f32 %v944
      %947 = vmin.xlane.f32.xlu0 %v946
      %v948 = vpop.xlane.xlu0 %947
      %vm949 = vcmp.eq.f32.partialorder %v946, %v948
      %v950 = vsel %vm949, %v945, inf
      %951 = vmin.xlane.f32.xlu0 %v950
      %v952 = vpop.xlane.xlu0 %951
      %v953 = vcvt.f32.s32 %v952
      %v954 = vcvt.f32.s32 %v948
      %v955 = vshll.u32 %v954, 16
      %v956 = vadd.s32 %v955, %v953
      %v957 = vand.u32 %v850, 65535
      %v958 = vshra.s32 %v850, 16
      %v959 = vcvt.s32.f32 %v957
      %v960 = vcvt.s32.f32 %v958
      %961 = vmin.xlane.f32.xlu0 %v960
      %v962 = vpop.xlane.xlu0 %961
      %vm963 = vcmp.eq.f32.partialorder %v960, %v962
      %v964 = vsel %vm963, %v959, inf
      %965 = vmin.xlane.f32.xlu0 %v964
      %v966 = vpop.xlane.xlu0 %965
      %v967 = vcvt.f32.s32 %v966
      %v968 = vcvt.f32.s32 %v962
      %v969 = vshll.u32 %v968, 16
      %v970 = vadd.s32 %v969, %v967
      %v971 = vand.u32 %v851, 65535
      %v972 = vshra.s32 %v851, 16
      %v973 = vcvt.s32.f32 %v971
      %v974 = vcvt.s32.f32 %v972
      %975 = vmin.xlane.f32.xlu0 %v974
      %v976 = vpop.xlane.xlu0 %975
      %vm977 = vcmp.eq.f32.partialorder %v974, %v976
      %v978 = vsel %vm977, %v973, inf
      %979 = vmin.xlane.f32.xlu0 %v978
      %v980 = vpop.xlane.xlu0 %979
      %v981 = vcvt.f32.s32 %v980
      %v982 = vcvt.f32.s32 %v976
      %v983 = vshll.u32 %v982, 16
      %v984 = vadd.s32 %v983, %v981
      %v985 = vand.u32 %v852, 65535
      %v986 = vshra.s32 %v852, 16
      %v987 = vcvt.s32.f32 %v985
      %v988 = vcvt.s32.f32 %v986
      %989 = vmin.xlane.f32.xlu0 %v988
      %v990 = vpop.xlane.xlu0 %989
      %vm991 = vcmp.eq.f32.partialorder %v988, %v990
      %v992 = vsel %vm991, %v987, inf
      %993 = vmin.xlane.f32.xlu0 %v992
      %v994 = vpop.xlane.xlu0 %993
      %v995 = vcvt.f32.s32 %v994
      %v996 = vcvt.f32.s32 %v990
      %v997 = vshll.u32 %v996, 16
      %v998 = vadd.s32 %v997, %v995
      %v999 = vand.u32 %v853, 65535
      %v1000 = vshra.s32 %v853, 16
      %v1001 = vcvt.s32.f32 %v999
      %v1002 = vcvt.s32.f32 %v1000
      %1003 = vmin.xlane.f32.xlu0 %v1002
      %v1004 = vpop.xlane.xlu0 %1003
      %vm1005 = vcmp.eq.f32.partialorder %v1002, %v1004
      %v1006 = vsel %vm1005, %v1001, inf
      %1007 = vmin.xlane.f32.xlu0 %v1006
      %v1008 = vpop.xlane.xlu0 %1007
      %v1009 = vcvt.f32.s32 %v1008
      %v1010 = vcvt.f32.s32 %v1004
      %v1011 = vshll.u32 %v1010, 16
      %v1012 = vadd.s32 %v1011, %v1009
      %v1013 = vand.u32 %v854, 65535
      %v1014 = vshra.s32 %v854, 16
      %v1015 = vcvt.s32.f32 %v1013
      %v1016 = vcvt.s32.f32 %v1014
      %1017 = vmin.xlane.f32.xlu0 %v1016
      %v1018 = vpop.xlane.xlu0 %1017
      %vm1019 = vcmp.eq.f32.partialorder %v1016, %v1018
      %v1020 = vsel %vm1019, %v1015, inf
      %1021 = vmin.xlane.f32.xlu0 %v1020
      %v1022 = vpop.xlane.xlu0 %1021
      %v1023 = vcvt.f32.s32 %v1022
      %v1024 = vcvt.f32.s32 %v1018
      %v1025 = vshll.u32 %v1024, 16
      %v1026 = vadd.s32 %v1025, %v1023
      %v1027 = vand.u32 %v855, 65535
      %v1028 = vshra.s32 %v855, 16
      %v1029 = vcvt.s32.f32 %v1027
      %v1030 = vcvt.s32.f32 %v1028
      %1031 = vmin.xlane.f32.xlu0 %v1030
      %v1032 = vpop.xlane.xlu0 %1031
      %vm1033 = vcmp.eq.f32.partialorder %v1030, %v1032
      %v1034 = vsel %vm1033, %v1029, inf
      %1035 = vmin.xlane.f32.xlu0 %v1034
      %v1036 = vpop.xlane.xlu0 %1035
      %v1037 = vcvt.f32.s32 %v1036
      %v1038 = vcvt.f32.s32 %v1032
      %v1039 = vshll.u32 %v1038, 16
      %v1040 = vadd.s32 %v1039, %v1037
      %v1041 = vand.u32 %v856, 65535
      %v1042 = vshra.s32 %v856, 16
      %v1043 = vcvt.s32.f32 %v1041
      %v1044 = vcvt.s32.f32 %v1042
      %1045 = vmin.xlane.f32.xlu0 %v1044
      %v1046 = vpop.xlane.xlu0 %1045
      %vm1047 = vcmp.eq.f32.partialorder %v1044, %v1046
      %v1048 = vsel %vm1047, %v1043, inf
      %1049 = vmin.xlane.f32.xlu0 %v1048
      %v1050 = vpop.xlane.xlu0 %1049
      %v1051 = vcvt.f32.s32 %v1050
      %v1052 = vcvt.f32.s32 %v1046
      %v1053 = vshll.u32 %v1052, 16
      %v1054 = vadd.s32 %v1053, %v1051
      %v1055 = vand.u32 %v857, 65535
      %v1056 = vshra.s32 %v857, 16
      %v1057 = vcvt.s32.f32 %v1055
      %v1058 = vcvt.s32.f32 %v1056
      %1059 = vmin.xlane.f32.xlu0 %v1058
      %v1060 = vpop.xlane.xlu0 %1059
      %vm1061 = vcmp.eq.f32.partialorder %v1058, %v1060
      %v1062 = vsel %vm1061, %v1057, inf
      %1063 = vmin.xlane.f32.xlu0 %v1062
      %v1064 = vpop.xlane.xlu0 %1063
      %v1065 = vcvt.f32.s32 %v1064
      %v1066 = vcvt.f32.s32 %v1060
      %v1067 = vshll.u32 %v1066, 16
      %v1068 = vadd.s32 %v1067, %v1065
      %v1069 = vand.u32 %v858, 65535
      %v1070 = vshra.s32 %v858, 16
      %v1071 = vcvt.s32.f32 %v1069
      %v1072 = vcvt.s32.f32 %v1070
      %1073 = vmin.xlane.f32.xlu0 %v1072
      %v1074 = vpop.xlane.xlu0 %1073
      %vm1075 = vcmp.eq.f32.partialorder %v1072, %v1074
      %v1076 = vsel %vm1075, %v1071, inf
      %1077 = vmin.xlane.f32.xlu0 %v1076
      %v1078 = vpop.xlane.xlu0 %1077
      %v1079 = vcvt.f32.s32 %v1078
      %v1080 = vcvt.f32.s32 %v1074
      %v1081 = vshll.u32 %v1080, 16
      %v1082 = vadd.s32 %v1081, %v1079
      %vm1083 = vcmp.eq.f32.partialorder %v715, %v811
      %vm1084 = vcmp.eq.f32.partialorder %v716, %v812
      %vm1085 = vcmp.eq.f32.partialorder %v717, %v813
      %vm1086 = vcmp.eq.f32.partialorder %v718, %v814
      %vm1087 = vcmp.eq.f32.partialorder %v719, %v815
      %vm1088 = vcmp.eq.f32.partialorder %v720, %v816
      %vm1089 = vcmp.eq.f32.partialorder %v721, %v817
      %vm1090 = vcmp.eq.f32.partialorder %v722, %v818
      %vm1091 = vcmp.eq.f32.partialorder %v723, %v819
      %vm1092 = vcmp.eq.f32.partialorder %v724, %v820
      %vm1093 = vcmp.eq.f32.partialorder %v725, %v821
      %vm1094 = vcmp.eq.f32.partialorder %v726, %v822
      %vm1095 = vcmp.eq.f32.partialorder %v727, %v823
      %vm1096 = vcmp.eq.f32.partialorder %v728, %v824
      %vm1097 = vcmp.eq.f32.partialorder %v729, %v825
      %vm1098 = vcmp.eq.f32.partialorder %v730, %v826
      %v1099 = vsel %vm1083, %v731, 1073741824
      %v1100 = vsel %vm1084, %v732, 1073741824
      %v1101 = vsel %vm1085, %v733, 1073741824
      %v1102 = vsel %vm1086, %v734, 1073741824
      %v1103 = vsel %vm1087, %v735, 1073741824
      %v1104 = vsel %vm1088, %v736, 1073741824
      %v1105 = vsel %vm1089, %v737, 1073741824
      %v1106 = vsel %vm1090, %v738, 1073741824
      %v1107 = vsel %vm1091, %v739, 1073741824
      %v1108 = vsel %vm1092, %v740, 1073741824
      %v1109 = vsel %vm1093, %v741, 1073741824
      %v1110 = vsel %vm1094, %v742, 1073741824
      %v1111 = vsel %vm1095, %v743, 1073741824
      %v1112 = vsel %vm1096, %v744, 1073741824
      %v1113 = vsel %vm1097, %v745, 1073741824
      %v1114 = vsel %vm1098, %v746, 1073741824
      %v1115 = vand.u32 %v1099, 65535
      %v1116 = vshra.s32 %v1099, 16
      %v1117 = vcvt.s32.f32 %v1115
      %v1118 = vcvt.s32.f32 %v1116
      %1119 = vmin.xlane.f32.xlu0 %v1118
      %v1120 = vpop.xlane.xlu0 %1119
      %vm1121 = vcmp.eq.f32.partialorder %v1118, %v1120
      %v1122 = vsel %vm1121, %v1117, inf
      %1123 = vmin.xlane.f32.xlu0 %v1122
      %v1124 = vpop.xlane.xlu0 %1123
      %v1125 = vcvt.f32.s32 %v1124
      %v1126 = vcvt.f32.s32 %v1120
      %v1127 = vshll.u32 %v1126, 16
      %v1128 = vadd.s32 %v1127, %v1125
      %v1129 = vand.u32 %v1100, 65535
      %v1130 = vshra.s32 %v1100, 16
      %v1131 = vcvt.s32.f32 %v1129
      %v1132 = vcvt.s32.f32 %v1130
      %1133 = vmin.xlane.f32.xlu0 %v1132
      %v1134 = vpop.xlane.xlu0 %1133
      %vm1135 = vcmp.eq.f32.partialorder %v1132, %v1134
      %v1136 = vsel %vm1135, %v1131, inf
      %1137 = vmin.xlane.f32.xlu0 %v1136
      %v1138 = vpop.xlane.xlu0 %1137
      %v1139 = vcvt.f32.s32 %v1138
      %v1140 = vcvt.f32.s32 %v1134
      %v1141 = vshll.u32 %v1140, 16
      %v1142 = vadd.s32 %v1141, %v1139
      %v1143 = vand.u32 %v1101, 65535
      %v1144 = vshra.s32 %v1101, 16
      %v1145 = vcvt.s32.f32 %v1143
      %v1146 = vcvt.s32.f32 %v1144
      %1147 = vmin.xlane.f32.xlu0 %v1146
      %v1148 = vpop.xlane.xlu0 %1147
      %vm1149 = vcmp.eq.f32.partialorder %v1146, %v1148
      %v1150 = vsel %vm1149, %v1145, inf
      %1151 = vmin.xlane.f32.xlu0 %v1150
      %v1152 = vpop.xlane.xlu0 %1151
      %v1153 = vcvt.f32.s32 %v1152
      %v1154 = vcvt.f32.s32 %v1148
      %v1155 = vshll.u32 %v1154, 16
      %v1156 = vadd.s32 %v1155, %v1153
      %v1157 = vand.u32 %v1102, 65535
      %v1158 = vshra.s32 %v1102, 16
      %v1159 = vcvt.s32.f32 %v1157
      %v1160 = vcvt.s32.f32 %v1158
      %1161 = vmin.xlane.f32.xlu0 %v1160
      %v1162 = vpop.xlane.xlu0 %1161
      %vm1163 = vcmp.eq.f32.partialorder %v1160, %v1162
      %v1164 = vsel %vm1163, %v1159, inf
      %1165 = vmin.xlane.f32.xlu0 %v1164
      %v1166 = vpop.xlane.xlu0 %1165
      %v1167 = vcvt.f32.s32 %v1166
      %v1168 = vcvt.f32.s32 %v1162
      %v1169 = vshll.u32 %v1168, 16
      %v1170 = vadd.s32 %v1169, %v1167
      %v1171 = vand.u32 %v1103, 65535
      %v1172 = vshra.s32 %v1103, 16
      %v1173 = vcvt.s32.f32 %v1171
      %v1174 = vcvt.s32.f32 %v1172
      %1175 = vmin.xlane.f32.xlu0 %v1174
      %v1176 = vpop.xlane.xlu0 %1175
      %vm1177 = vcmp.eq.f32.partialorder %v1174, %v1176
      %v1178 = vsel %vm1177, %v1173, inf
      %1179 = vmin.xlane.f32.xlu0 %v1178
      %v1180 = vpop.xlane.xlu0 %1179
      %v1181 = vcvt.f32.s32 %v1180
      %v1182 = vcvt.f32.s32 %v1176
      %v1183 = vshll.u32 %v1182, 16
      %v1184 = vadd.s32 %v1183, %v1181
      %v1185 = vand.u32 %v1104, 65535
      %v1186 = vshra.s32 %v1104, 16
      %v1187 = vcvt.s32.f32 %v1185
      %v1188 = vcvt.s32.f32 %v1186
      %1189 = vmin.xlane.f32.xlu0 %v1188
      %v1190 = vpop.xlane.xlu0 %1189
      %vm1191 = vcmp.eq.f32.partialorder %v1188, %v1190
      %v1192 = vsel %vm1191, %v1187, inf
      %1193 = vmin.xlane.f32.xlu0 %v1192
      %v1194 = vpop.xlane.xlu0 %1193
      %v1195 = vcvt.f32.s32 %v1194
      %v1196 = vcvt.f32.s32 %v1190
      %v1197 = vshll.u32 %v1196, 16
      %v1198 = vadd.s32 %v1197, %v1195
      %v1199 = vand.u32 %v1105, 65535
      %v1200 = vshra.s32 %v1105, 16
      %v1201 = vcvt.s32.f32 %v1199
      %v1202 = vcvt.s32.f32 %v1200
      %1203 = vmin.xlane.f32.xlu0 %v1202
      %v1204 = vpop.xlane.xlu0 %1203
      %vm1205 = vcmp.eq.f32.partialorder %v1202, %v1204
      %v1206 = vsel %vm1205, %v1201, inf
      %1207 = vmin.xlane.f32.xlu0 %v1206
      %v1208 = vpop.xlane.xlu0 %1207
      %v1209 = vcvt.f32.s32 %v1208
      %v1210 = vcvt.f32.s32 %v1204
      %v1211 = vshll.u32 %v1210, 16
      %v1212 = vadd.s32 %v1211, %v1209
      %v1213 = vand.u32 %v1106, 65535
      %v1214 = vshra.s32 %v1106, 16
      %v1215 = vcvt.s32.f32 %v1213
      %v1216 = vcvt.s32.f32 %v1214
      %1217 = vmin.xlane.f32.xlu0 %v1216
      %v1218 = vpop.xlane.xlu0 %1217
      %vm1219 = vcmp.eq.f32.partialorder %v1216, %v1218
      %v1220 = vsel %vm1219, %v1215, inf
      %1221 = vmin.xlane.f32.xlu0 %v1220
      %v1222 = vpop.xlane.xlu0 %1221
      %v1223 = vcvt.f32.s32 %v1222
      %v1224 = vcvt.f32.s32 %v1218
      %v1225 = vshll.u32 %v1224, 16
      %v1226 = vadd.s32 %v1225, %v1223
      %v1227 = vand.u32 %v1107, 65535
      %v1228 = vshra.s32 %v1107, 16
      %v1229 = vcvt.s32.f32 %v1227
      %v1230 = vcvt.s32.f32 %v1228
      %1231 = vmin.xlane.f32.xlu0 %v1230
      %v1232 = vpop.xlane.xlu0 %1231
      %vm1233 = vcmp.eq.f32.partialorder %v1230, %v1232
      %v1234 = vsel %vm1233, %v1229, inf
      %1235 = vmin.xlane.f32.xlu0 %v1234
      %v1236 = vpop.xlane.xlu0 %1235
      %v1237 = vcvt.f32.s32 %v1236
      %v1238 = vcvt.f32.s32 %v1232
      %v1239 = vshll.u32 %v1238, 16
      %v1240 = vadd.s32 %v1239, %v1237
      %v1241 = vand.u32 %v1108, 65535
      %v1242 = vshra.s32 %v1108, 16
      %v1243 = vcvt.s32.f32 %v1241
      %v1244 = vcvt.s32.f32 %v1242
      %1245 = vmin.xlane.f32.xlu0 %v1244
      %v1246 = vpop.xlane.xlu0 %1245
      %vm1247 = vcmp.eq.f32.partialorder %v1244, %v1246
      %v1248 = vsel %vm1247, %v1243, inf
      %1249 = vmin.xlane.f32.xlu0 %v1248
      %v1250 = vpop.xlane.xlu0 %1249
      %v1251 = vcvt.f32.s32 %v1250
      %v1252 = vcvt.f32.s32 %v1246
      %v1253 = vshll.u32 %v1252, 16
      %v1254 = vadd.s32 %v1253, %v1251
      %v1255 = vand.u32 %v1109, 65535
      %v1256 = vshra.s32 %v1109, 16
      %v1257 = vcvt.s32.f32 %v1255
      %v1258 = vcvt.s32.f32 %v1256
      %1259 = vmin.xlane.f32.xlu0 %v1258
      %v1260 = vpop.xlane.xlu0 %1259
      %vm1261 = vcmp.eq.f32.partialorder %v1258, %v1260
      %v1262 = vsel %vm1261, %v1257, inf
      %1263 = vmin.xlane.f32.xlu0 %v1262
      %v1264 = vpop.xlane.xlu0 %1263
      %v1265 = vcvt.f32.s32 %v1264
      %v1266 = vcvt.f32.s32 %v1260
      %v1267 = vshll.u32 %v1266, 16
      %v1268 = vadd.s32 %v1267, %v1265
      %v1269 = vand.u32 %v1110, 65535
      %v1270 = vshra.s32 %v1110, 16
      %v1271 = vcvt.s32.f32 %v1269
      %v1272 = vcvt.s32.f32 %v1270
      %1273 = vmin.xlane.f32.xlu0 %v1272
      %v1274 = vpop.xlane.xlu0 %1273
      %vm1275 = vcmp.eq.f32.partialorder %v1272, %v1274
      %v1276 = vsel %vm1275, %v1271, inf
      %1277 = vmin.xlane.f32.xlu0 %v1276
      %v1278 = vpop.xlane.xlu0 %1277
      %v1279 = vcvt.f32.s32 %v1278
      %v1280 = vcvt.f32.s32 %v1274
      %v1281 = vshll.u32 %v1280, 16
      %v1282 = vadd.s32 %v1281, %v1279
      %v1283 = vand.u32 %v1111, 65535
      %v1284 = vshra.s32 %v1111, 16
      %v1285 = vcvt.s32.f32 %v1283
      %v1286 = vcvt.s32.f32 %v1284
      %1287 = vmin.xlane.f32.xlu0 %v1286
      %v1288 = vpop.xlane.xlu0 %1287
      %vm1289 = vcmp.eq.f32.partialorder %v1286, %v1288
      %v1290 = vsel %vm1289, %v1285, inf
      %1291 = vmin.xlane.f32.xlu0 %v1290
      %v1292 = vpop.xlane.xlu0 %1291
      %v1293 = vcvt.f32.s32 %v1292
      %v1294 = vcvt.f32.s32 %v1288
      %v1295 = vshll.u32 %v1294, 16
      %v1296 = vadd.s32 %v1295, %v1293
      %v1297 = vand.u32 %v1112, 65535
      %v1298 = vshra.s32 %v1112, 16
      %v1299 = vcvt.s32.f32 %v1297
      %v1300 = vcvt.s32.f32 %v1298
      %1301 = vmin.xlane.f32.xlu0 %v1300
      %v1302 = vpop.xlane.xlu0 %1301
      %vm1303 = vcmp.eq.f32.partialorder %v1300, %v1302
      %v1304 = vsel %vm1303, %v1299, inf
      %1305 = vmin.xlane.f32.xlu0 %v1304
      %v1306 = vpop.xlane.xlu0 %1305
      %v1307 = vcvt.f32.s32 %v1306
      %v1308 = vcvt.f32.s32 %v1302
      %v1309 = vshll.u32 %v1308, 16
      %v1310 = vadd.s32 %v1309, %v1307
      %v1311 = vand.u32 %v1113, 65535
      %v1312 = vshra.s32 %v1113, 16
      %v1313 = vcvt.s32.f32 %v1311
      %v1314 = vcvt.s32.f32 %v1312
      %1315 = vmin.xlane.f32.xlu0 %v1314
      %v1316 = vpop.xlane.xlu0 %1315
      %vm1317 = vcmp.eq.f32.partialorder %v1314, %v1316
      %v1318 = vsel %vm1317, %v1313, inf
      %1319 = vmin.xlane.f32.xlu0 %v1318
      %v1320 = vpop.xlane.xlu0 %1319
      %v1321 = vcvt.f32.s32 %v1320
      %v1322 = vcvt.f32.s32 %v1316
      %v1323 = vshll.u32 %v1322, 16
      %v1324 = vadd.s32 %v1323, %v1321
      %v1325 = vand.u32 %v1114, 65535
      %v1326 = vshra.s32 %v1114, 16
      %v1327 = vcvt.s32.f32 %v1325
      %v1328 = vcvt.s32.f32 %v1326
      %1329 = vmin.xlane.f32.xlu0 %v1328
      %v1330 = vpop.xlane.xlu0 %1329
      %vm1331 = vcmp.eq.f32.partialorder %v1328, %v1330
      %v1332 = vsel %vm1331, %v1327, inf
      %1333 = vmin.xlane.f32.xlu0 %v1332
      %v1334 = vpop.xlane.xlu0 %1333
      %v1335 = vcvt.f32.s32 %v1334
      %v1336 = vcvt.f32.s32 %v1330
      %v1337 = vshll.u32 %v1336, 16
      %v1338 = vadd.s32 %v1337, %v1335
      %vm1339 = vcmp.lt.s32.totalorder %v872, %v1128
      %v1340 = vsel %vm1339, %v872, %v1128
      %vm1341 = vcmp.lt.s32.totalorder %v886, %v1142
      %v1342 = vsel %vm1341, %v886, %v1142
      %vm1343 = vcmp.lt.s32.totalorder %v900, %v1156
      %v1344 = vsel %vm1343, %v900, %v1156
      %vm1345 = vcmp.lt.s32.totalorder %v914, %v1170
      %v1346 = vsel %vm1345, %v914, %v1170
      %vm1347 = vcmp.lt.s32.totalorder %v928, %v1184
      %v1348 = vsel %vm1347, %v928, %v1184
      %vm1349 = vcmp.lt.s32.totalorder %v942, %v1198
      %v1350 = vsel %vm1349, %v942, %v1198
      %vm1351 = vcmp.lt.s32.totalorder %v956, %v1212
      %v1352 = vsel %vm1351, %v956, %v1212
      %vm1353 = vcmp.lt.s32.totalorder %v970, %v1226
      %v1354 = vsel %vm1353, %v970, %v1226
      %vm1355 = vcmp.lt.s32.totalorder %v984, %v1240
      %v1356 = vsel %vm1355, %v984, %v1240
      %vm1357 = vcmp.lt.s32.totalorder %v998, %v1254
      %v1358 = vsel %vm1357, %v998, %v1254
      %vm1359 = vcmp.lt.s32.totalorder %v1012, %v1268
      %v1360 = vsel %vm1359, %v1012, %v1268
      %vm1361 = vcmp.lt.s32.totalorder %v1026, %v1282
      %v1362 = vsel %vm1361, %v1026, %v1282
      %vm1363 = vcmp.lt.s32.totalorder %v1040, %v1296
      %v1364 = vsel %vm1363, %v1040, %v1296
      %vm1365 = vcmp.lt.s32.totalorder %v1054, %v1310
      %v1366 = vsel %vm1365, %v1054, %v1310
      %vm1367 = vcmp.lt.s32.totalorder %v1068, %v1324
      %v1368 = vsel %vm1367, %v1068, %v1324
      %vm1369 = vcmp.lt.s32.totalorder %v1082, %v1338
      %v1370 = vsel %vm1369, %v1082, %v1338
      %vm1371 = vcmask 7168
      %1372 = vst.msk [vmem:[#allocation5] sm:$0xff] %vm1371, %v811
      %1373 = vst.msk [vmem:[#allocation5 + $0x8] sm:$0xff] %vm1371, %v812
      %1374 = vst.msk [vmem:[#allocation5 + $0x10] sm:$0xff] %vm1371, %v813
      %1375 = vst.msk [vmem:[#allocation5 + $0x18] sm:$0xff] %vm1371, %v814
      %1376 = vst.msk [vmem:[#allocation5 + $0x20] sm:$0xff] %vm1371, %v815
      %1377 = vst.msk [vmem:[#allocation5 + $0x28] sm:$0xff] %vm1371, %v816
      %1378 = vst.msk [vmem:[#allocation5 + $0x30] sm:$0xff] %vm1371, %v817
      %1379 = vst.msk [vmem:[#allocation5 + $0x38] sm:$0xff] %vm1371, %v818
      %1380 = vst.msk [vmem:[#allocation5 + $0x40] sm:$0xff] %vm1371, %v819
      %1381 = vst.msk [vmem:[#allocation5 + $0x48] sm:$0xff] %vm1371, %v820
      %1382 = vst.msk [vmem:[#allocation5 + $0x50] sm:$0xff] %vm1371, %v821
      %1383 = vst.msk [vmem:[#allocation5 + $0x58] sm:$0xff] %vm1371, %v822
      %1384 = vst.msk [vmem:[#allocation5 + $0x60] sm:$0xff] %vm1371, %v823
      %1385 = vst.msk [vmem:[#allocation5 + $0x68] sm:$0xff] %vm1371, %v824
      %1386 = vst.msk [vmem:[#allocation5 + $0x70] sm:$0xff] %vm1371, %v825
      %1387 = vst.msk [vmem:[#allocation5 + $0x78] sm:$0xff] %vm1371, %v826
      %1388 = vst.msk [vmem:[#allocation6] sm:$0xff] %vm1371, %v1340
      %1389 = vst.msk [vmem:[#allocation6 + $0x8] sm:$0xff] %vm1371, %v1342
      %1390 = vst.msk [vmem:[#allocation6 + $0x10] sm:$0xff] %vm1371, %v1344
      %1391 = vst.msk [vmem:[#allocation6 + $0x18] sm:$0xff] %vm1371, %v1346
      %1392 = vst.msk [vmem:[#allocation6 + $0x20] sm:$0xff] %vm1371, %v1348
      %1393 = vst.msk [vmem:[#allocation6 + $0x28] sm:$0xff] %vm1371, %v1350
      %1394 = vst.msk [vmem:[#allocation6 + $0x30] sm:$0xff] %vm1371, %v1352
      %1395 = vst.msk [vmem:[#allocation6 + $0x38] sm:$0xff] %vm1371, %v1354
      %1396 = vst.msk [vmem:[#allocation6 + $0x40] sm:$0xff] %vm1371, %v1356
      %1397 = vst.msk [vmem:[#allocation6 + $0x48] sm:$0xff] %vm1371, %v1358
      %1398 = vst.msk [vmem:[#allocation6 + $0x50] sm:$0xff] %vm1371, %v1360
      %1399 = vst.msk [vmem:[#allocation6 + $0x58] sm:$0xff] %vm1371, %v1362
      %1400 = vst.msk [vmem:[#allocation6 + $0x60] sm:$0xff] %vm1371, %v1364
      %1401 = vst.msk [vmem:[#allocation6 + $0x68] sm:$0xff] %vm1371, %v1366
      %1402 = vst.msk [vmem:[#allocation6 + $0x70] sm:$0xff] %vm1371, %v1368
      %1403 = vst.msk [vmem:[#allocation6 + $0x78] sm:$0xff] %vm1371, %v1370
      %vm1404 = vcmp.eq.s32.totalorder %v663, %v1340
      %vm1405 = vcmp.eq.s32.totalorder %v663, %v1342
      %vm1406 = vcmp.eq.s32.totalorder %v663, %v1344
      %vm1407 = vcmp.eq.s32.totalorder %v663, %v1346
      %vm1408 = vcmp.eq.s32.totalorder %v663, %v1348
      %vm1409 = vcmp.eq.s32.totalorder %v663, %v1350
      %vm1410 = vcmp.eq.s32.totalorder %v663, %v1352
      %vm1411 = vcmp.eq.s32.totalorder %v663, %v1354
      %vm1412 = vcmp.eq.s32.totalorder %v663, %v1356
      %vm1413 = vcmp.eq.s32.totalorder %v663, %v1358
      %vm1414 = vcmp.eq.s32.totalorder %v663, %v1360
      %vm1415 = vcmp.eq.s32.totalorder %v663, %v1362
      %vm1416 = vcmp.eq.s32.totalorder %v663, %v1364
      %vm1417 = vcmp.eq.s32.totalorder %v663, %v1366
      %vm1418 = vcmp.eq.s32.totalorder %v663, %v1368
      %vm1419 = vcmp.eq.s32.totalorder %v663, %v1370
      %v1420 = vsel %vm1404, -inf, %v699
      %v1421 = vsel %vm1405, -inf, %v700
      %v1422 = vsel %vm1406, -inf, %v701
      %v1423 = vsel %vm1407, -inf, %v702
      %v1424 = vsel %vm1408, -inf, %v703
      %v1425 = vsel %vm1409, -inf, %v704
      %v1426 = vsel %vm1410, -inf, %v705
      %v1427 = vsel %vm1411, -inf, %v706
      %v1428 = vsel %vm1412, -inf, %v707
      %v1429 = vsel %vm1413, -inf, %v708
      %v1430 = vsel %vm1414, -inf, %v709
      %v1431 = vsel %vm1415, -inf, %v710
      %v1432 = vsel %vm1416, -inf, %v711
      %v1433 = vsel %vm1417, -inf, %v712
      %v1434 = vsel %vm1418, -inf, %v713
      %v1435 = vsel %vm1419, -inf, %v714
      %1436 = vst [vmem:[#allocation2] sm:$0xff] %v1420
      %1437 = vst [vmem:[#allocation2 + $0x8] sm:$0xff] %v1421
      %1438 = vst [vmem:[#allocation2 + $0x10] sm:$0xff] %v1422
      %1439 = vst [vmem:[#allocation2 + $0x18] sm:$0xff] %v1423
      %1440 = vst [vmem:[#allocation2 + $0x20] sm:$0xff] %v1424
      %1441 = vst [vmem:[#allocation2 + $0x28] sm:$0xff] %v1425
      %1442 = vst [vmem:[#allocation2 + $0x30] sm:$0xff] %v1426
      %1443 = vst [vmem:[#allocation2 + $0x38] sm:$0xff] %v1427
      %1444 = vst [vmem:[#allocation2 + $0x40] sm:$0xff] %v1428
      %1445 = vst [vmem:[#allocation2 + $0x48] sm:$0xff] %v1429
      %1446 = vst [vmem:[#allocation2 + $0x50] sm:$0xff] %v1430
      %1447 = vst [vmem:[#allocation2 + $0x58] sm:$0xff] %v1431
      %1448 = vst [vmem:[#allocation2 + $0x60] sm:$0xff] %v1432
      %1449 = vst [vmem:[#allocation2 + $0x68] sm:$0xff] %v1433
      %1450 = vst [vmem:[#allocation2 + $0x70] sm:$0xff] %v1434
      %1451 = vst [vmem:[#allocation2 + $0x78] sm:$0xff] %v1435
      %vm1452 = vcmp.eq.s32.totalorder %v731, %v1340
      %vm1453 = vcmp.eq.s32.totalorder %v732, %v1342
      %vm1454 = vcmp.eq.s32.totalorder %v733, %v1344
      %vm1455 = vcmp.eq.s32.totalorder %v734, %v1346
      %vm1456 = vcmp.eq.s32.totalorder %v735, %v1348
      %vm1457 = vcmp.eq.s32.totalorder %v736, %v1350
      %vm1458 = vcmp.eq.s32.totalorder %v737, %v1352
      %vm1459 = vcmp.eq.s32.totalorder %v738, %v1354
      %vm1460 = vcmp.eq.s32.totalorder %v739, %v1356
      %vm1461 = vcmp.eq.s32.totalorder %v740, %v1358
      %vm1462 = vcmp.eq.s32.totalorder %v741, %v1360
      %vm1463 = vcmp.eq.s32.totalorder %v742, %v1362
      %vm1464 = vcmp.eq.s32.totalorder %v743, %v1364
      %vm1465 = vcmp.eq.s32.totalorder %v744, %v1366
      %vm1466 = vcmp.eq.s32.totalorder %v745, %v1368
      %vm1467 = vcmp.eq.s32.totalorder %v746, %v1370
      %v1468 = vsel %vm1452, -inf, %v715
      %v1469 = vsel %vm1453, -inf, %v716
      %v1470 = vsel %vm1454, -inf, %v717
      %v1471 = vsel %vm1455, -inf, %v718
      %v1472 = vsel %vm1456, -inf, %v719
      %v1473 = vsel %vm1457, -inf, %v720
      %v1474 = vsel %vm1458, -inf, %v721
      %v1475 = vsel %vm1459, -inf, %v722
      %v1476 = vsel %vm1460, -inf, %v723
      %v1477 = vsel %vm1461, -inf, %v724
      %v1478 = vsel %vm1462, -inf, %v725
      %v1479 = vsel %vm1463, -inf, %v726
      %v1480 = vsel %vm1464, -inf, %v727
      %v1481 = vsel %vm1465, -inf, %v728
      %v1482 = vsel %vm1466, -inf, %v729
      %v1483 = vsel %vm1467, -inf, %v730
      %1484 = vst [vmem:[#allocation3] sm:$0xff] %v1468
      %1485 = vst [vmem:[#allocation3 + $0x8] sm:$0xff] %v1469
      %1486 = vst [vmem:[#allocation3 + $0x10] sm:$0xff] %v1470
      %1487 = vst [vmem:[#allocation3 + $0x18] sm:$0xff] %v1471
      %1488 = vst [vmem:[#allocation3 + $0x20] sm:$0xff] %v1472
      %1489 = vst [vmem:[#allocation3 + $0x28] sm:$0xff] %v1473
      %1490 = vst [vmem:[#allocation3 + $0x30] sm:$0xff] %v1474
      %1491 = vst [vmem:[#allocation3 + $0x38] sm:$0xff] %v1475
      %1492 = vst [vmem:[#allocation3 + $0x40] sm:$0xff] %v1476
      %1493 = vst [vmem:[#allocation3 + $0x48] sm:$0xff] %v1477
      %1494 = vst [vmem:[#allocation3 + $0x50] sm:$0xff] %v1478
      %1495 = vst [vmem:[#allocation3 + $0x58] sm:$0xff] %v1479
      %1496 = vst [vmem:[#allocation3 + $0x60] sm:$0xff] %v1480
      %1497 = vst [vmem:[#allocation3 + $0x68] sm:$0xff] %v1481
      %1498 = vst [vmem:[#allocation3 + $0x70] sm:$0xff] %v1482
      %1499 = vst [vmem:[#allocation3 + $0x78] sm:$0xff] %v1483
      %v1500 = vld [vmem:[#allocation2] sm:$0xff]
      %v1501 = vld [vmem:[#allocation2 + $0x8] sm:$0xff]
      %v1502 = vld [vmem:[#allocation2 + $0x10] sm:$0xff]
      %v1503 = vld [vmem:[#allocation2 + $0x18] sm:$0xff]
      %v1504 = vld [vmem:[#allocation2 + $0x20] sm:$0xff]
      %v1505 = vld [vmem:[#allocation2 + $0x28] sm:$0xff]
      %v1506 = vld [vmem:[#allocation2 + $0x30] sm:$0xff]
      %v1507 = vld [vmem:[#allocation2 + $0x38] sm:$0xff]
      %v1508 = vld [vmem:[#allocation2 + $0x40] sm:$0xff]
      %v1509 = vld [vmem:[#allocation2 + $0x48] sm:$0xff]
      %v1510 = vld [vmem:[#allocation2 + $0x50] sm:$0xff]
      %v1511 = vld [vmem:[#allocation2 + $0x58] sm:$0xff]
      %v1512 = vld [vmem:[#allocation2 + $0x60] sm:$0xff]
      %v1513 = vld [vmem:[#allocation2 + $0x68] sm:$0xff]
      %v1514 = vld [vmem:[#allocation2 + $0x70] sm:$0xff]
      %v1515 = vld [vmem:[#allocation2 + $0x78] sm:$0xff]
      %v1516 = vld [vmem:[#allocation3] sm:$0xff]
      %v1517 = vld [vmem:[#allocation3 + $0x8] sm:$0xff]
      %v1518 = vld [vmem:[#allocation3 + $0x10] sm:$0xff]
      %v1519 = vld [vmem:[#allocation3 + $0x18] sm:$0xff]
      %v1520 = vld [vmem:[#allocation3 + $0x20] sm:$0xff]
      %v1521 = vld [vmem:[#allocation3 + $0x28] sm:$0xff]
      %v1522 = vld [vmem:[#allocation3 + $0x30] sm:$0xff]
      %v1523 = vld [vmem:[#allocation3 + $0x38] sm:$0xff]
      %v1524 = vld [vmem:[#allocation3 + $0x40] sm:$0xff]
      %v1525 = vld [vmem:[#allocation3 + $0x48] sm:$0xff]
      %v1526 = vld [vmem:[#allocation3 + $0x50] sm:$0xff]
      %v1527 = vld [vmem:[#allocation3 + $0x58] sm:$0xff]
      %v1528 = vld [vmem:[#allocation3 + $0x60] sm:$0xff]
      %v1529 = vld [vmem:[#allocation3 + $0x68] sm:$0xff]
      %v1530 = vld [vmem:[#allocation3 + $0x70] sm:$0xff]
      %v1531 = vld [vmem:[#allocation3 + $0x78] sm:$0xff]
      %v1532 = vld [vmem:[#allocation4] sm:$0xff]
      %v1533 = vld [vmem:[#allocation4 + $0x8] sm:$0xff]
      %v1534 = vld [vmem:[#allocation4 + $0x10] sm:$0xff]
      %v1535 = vld [vmem:[#allocation4 + $0x18] sm:$0xff]
      %v1536 = vld [vmem:[#allocation4 + $0x20] sm:$0xff]
      %v1537 = vld [vmem:[#allocation4 + $0x28] sm:$0xff]
      %v1538 = vld [vmem:[#allocation4 + $0x30] sm:$0xff]
      %v1539 = vld [vmem:[#allocation4 + $0x38] sm:$0xff]
      %v1540 = vld [vmem:[#allocation4 + $0x40] sm:$0xff]
      %v1541 = vld [vmem:[#allocation4 + $0x48] sm:$0xff]
      %v1542 = vld [vmem:[#allocation4 + $0x50] sm:$0xff]
      %v1543 = vld [vmem:[#allocation4 + $0x58] sm:$0xff]
      %v1544 = vld [vmem:[#allocation4 + $0x60] sm:$0xff]
      %v1545 = vld [vmem:[#allocation4 + $0x68] sm:$0xff]
      %v1546 = vld [vmem:[#allocation4 + $0x70] sm:$0xff]
      %v1547 = vld [vmem:[#allocation4 + $0x78] sm:$0xff]
      %1548 = vmax.xlane.f32.xlu0 %v1500
      %v1549 = vpop.xlane.xlu0 %1548
      %1550 = vmax.xlane.f32.xlu0 %v1501
      %v1551 = vpop.xlane.xlu0 %1550
      %1552 = vmax.xlane.f32.xlu0 %v1502
      %v1553 = vpop.xlane.xlu0 %1552
      %1554 = vmax.xlane.f32.xlu0 %v1503
      %v1555 = vpop.xlane.xlu0 %1554
      %1556 = vmax.xlane.f32.xlu0 %v1504
      %v1557 = vpop.xlane.xlu0 %1556
      %1558 = vmax.xlane.f32.xlu0 %v1505
      %v1559 = vpop.xlane.xlu0 %1558
      %1560 = vmax.xlane.f32.xlu0 %v1506
      %v1561 = vpop.xlane.xlu0 %1560
      %1562 = vmax.xlane.f32.xlu0 %v1507
      %v1563 = vpop.xlane.xlu0 %1562
      %1564 = vmax.xlane.f32.xlu0 %v1508
      %v1565 = vpop.xlane.xlu0 %1564
      %1566 = vmax.xlane.f32.xlu0 %v1509
      %v1567 = vpop.xlane.xlu0 %1566
      %1568 = vmax.xlane.f32.xlu0 %v1510
      %v1569 = vpop.xlane.xlu0 %1568
      %1570 = vmax.xlane.f32.xlu0 %v1511
      %v1571 = vpop.xlane.xlu0 %1570
      %1572 = vmax.xlane.f32.xlu0 %v1512
      %v1573 = vpop.xlane.xlu0 %1572
      %1574 = vmax.xlane.f32.xlu0 %v1513
      %v1575 = vpop.xlane.xlu0 %1574
      %1576 = vmax.xlane.f32.xlu0 %v1514
      %v1577 = vpop.xlane.xlu0 %1576
      %1578 = vmax.xlane.f32.xlu0 %v1515
      %v1579 = vpop.xlane.xlu0 %1578
      %1580 = vmax.xlane.f32.xlu0 %v1516
      %v1581 = vpop.xlane.xlu0 %1580
      %1582 = vmax.xlane.f32.xlu0 %v1517
      %v1583 = vpop.xlane.xlu0 %1582
      %1584 = vmax.xlane.f32.xlu0 %v1518
      %v1585 = vpop.xlane.xlu0 %1584
      %1586 = vmax.xlane.f32.xlu0 %v1519
      %v1587 = vpop.xlane.xlu0 %1586
      %1588 = vmax.xlane.f32.xlu0 %v1520
      %v1589 = vpop.xlane.xlu0 %1588
      %1590 = vmax.xlane.f32.xlu0 %v1521
      %v1591 = vpop.xlane.xlu0 %1590
      %1592 = vmax.xlane.f32.xlu0 %v1522
      %v1593 = vpop.xlane.xlu0 %1592
      %1594 = vmax.xlane.f32.xlu0 %v1523
      %v1595 = vpop.xlane.xlu0 %1594
      %1596 = vmax.xlane.f32.xlu0 %v1524
      %v1597 = vpop.xlane.xlu0 %1596
      %1598 = vmax.xlane.f32.xlu0 %v1525
      %v1599 = vpop.xlane.xlu0 %1598
      %1600 = vmax.xlane.f32.xlu0 %v1526
      %v1601 = vpop.xlane.xlu0 %1600
      %1602 = vmax.xlane.f32.xlu0 %v1527
      %v1603 = vpop.xlane.xlu0 %1602
      %1604 = vmax.xlane.f32.xlu0 %v1528
      %v1605 = vpop.xlane.xlu0 %1604
      %1606 = vmax.xlane.f32.xlu0 %v1529
      %v1607 = vpop.xlane.xlu0 %1606
      %1608 = vmax.xlane.f32.xlu0 %v1530
      %v1609 = vpop.xlane.xlu0 %1608
      %1610 = vmax.xlane.f32.xlu0 %v1531
      %v1611 = vpop.xlane.xlu0 %1610
      %v1612 = vmax.f32 %v1549, %v1581
      %v1613 = vmax.f32 %v1551, %v1583
      %v1614 = vmax.f32 %v1553, %v1585
      %v1615 = vmax.f32 %v1555, %v1587
      %v1616 = vmax.f32 %v1557, %v1589
      %v1617 = vmax.f32 %v1559, %v1591
      %v1618 = vmax.f32 %v1561, %v1593
      %v1619 = vmax.f32 %v1563, %v1595
      %v1620 = vmax.f32 %v1565, %v1597
      %v1621 = vmax.f32 %v1567, %v1599
      %v1622 = vmax.f32 %v1569, %v1601
      %v1623 = vmax.f32 %v1571, %v1603
      %v1624 = vmax.f32 %v1573, %v1605
      %v1625 = vmax.f32 %v1575, %v1607
      %v1626 = vmax.f32 %v1577, %v1609
      %v1627 = vmax.f32 %v1579, %v1611
      %vm1628 = vcmp.eq.f32.partialorder %v1500, %v1612
      %vm1629 = vcmp.eq.f32.partialorder %v1501, %v1613
      %vm1630 = vcmp.eq.f32.partialorder %v1502, %v1614
      %vm1631 = vcmp.eq.f32.partialorder %v1503, %v1615
      %vm1632 = vcmp.eq.f32.partialorder %v1504, %v1616
      %vm1633 = vcmp.eq.f32.partialorder %v1505, %v1617
      %vm1634 = vcmp.eq.f32.partialorder %v1506, %v1618
      %vm1635 = vcmp.eq.f32.partialorder %v1507, %v1619
      %vm1636 = vcmp.eq.f32.partialorder %v1508, %v1620
      %vm1637 = vcmp.eq.f32.partialorder %v1509, %v1621
      %vm1638 = vcmp.eq.f32.partialorder %v1510, %v1622
      %vm1639 = vcmp.eq.f32.partialorder %v1511, %v1623
      %vm1640 = vcmp.eq.f32.partialorder %v1512, %v1624
      %vm1641 = vcmp.eq.f32.partialorder %v1513, %v1625
      %vm1642 = vcmp.eq.f32.partialorder %v1514, %v1626
      %vm1643 = vcmp.eq.f32.partialorder %v1515, %v1627
      %v1644 = vsel %vm1628, %v663, 1073741824
      %v1645 = vsel %vm1629, %v663, 1073741824
      %v1646 = vsel %vm1630, %v663, 1073741824
      %v1647 = vsel %vm1631, %v663, 1073741824
      %v1648 = vsel %vm1632, %v663, 1073741824
      %v1649 = vsel %vm1633, %v663, 1073741824
      %v1650 = vsel %vm1634, %v663, 1073741824
      %v1651 = vsel %vm1635, %v663, 1073741824
      %v1652 = vsel %vm1636, %v663, 1073741824
      %v1653 = vsel %vm1637, %v663, 1073741824
      %v1654 = vsel %vm1638, %v663, 1073741824
      %v1655 = vsel %vm1639, %v663, 1073741824
      %v1656 = vsel %vm1640, %v663, 1073741824
      %v1657 = vsel %vm1641, %v663, 1073741824
      %v1658 = vsel %vm1642, %v663, 1073741824
      %v1659 = vsel %vm1643, %v663, 1073741824
      %v1660 = vand.u32 %v1644, 65535
      %v1661 = vshra.s32 %v1644, 16
      %v1662 = vcvt.s32.f32 %v1660
      %v1663 = vcvt.s32.f32 %v1661
      %1664 = vmin.xlane.f32.xlu0 %v1663
      %v1665 = vpop.xlane.xlu0 %1664
      %vm1666 = vcmp.eq.f32.partialorder %v1663, %v1665
      %v1667 = vsel %vm1666, %v1662, inf
      %1668 = vmin.xlane.f32.xlu0 %v1667
      %v1669 = vpop.xlane.xlu0 %1668
      %v1670 = vcvt.f32.s32 %v1669
      %v1671 = vcvt.f32.s32 %v1665
      %v1672 = vshll.u32 %v1671, 16
      %v1673 = vadd.s32 %v1672, %v1670
      %v1674 = vand.u32 %v1645, 65535
      %v1675 = vshra.s32 %v1645, 16
      %v1676 = vcvt.s32.f32 %v1674
      %v1677 = vcvt.s32.f32 %v1675
      %1678 = vmin.xlane.f32.xlu0 %v1677
      %v1679 = vpop.xlane.xlu0 %1678
      %vm1680 = vcmp.eq.f32.partialorder %v1677, %v1679
      %v1681 = vsel %vm1680, %v1676, inf
      %1682 = vmin.xlane.f32.xlu0 %v1681
      %v1683 = vpop.xlane.xlu0 %1682
      %v1684 = vcvt.f32.s32 %v1683
      %v1685 = vcvt.f32.s32 %v1679
      %v1686 = vshll.u32 %v1685, 16
      %v1687 = vadd.s32 %v1686, %v1684
      %v1688 = vand.u32 %v1646, 65535
      %v1689 = vshra.s32 %v1646, 16
      %v1690 = vcvt.s32.f32 %v1688
      %v1691 = vcvt.s32.f32 %v1689
      %1692 = vmin.xlane.f32.xlu0 %v1691
      %v1693 = vpop.xlane.xlu0 %1692
      %vm1694 = vcmp.eq.f32.partialorder %v1691, %v1693
      %v1695 = vsel %vm1694, %v1690, inf
      %1696 = vmin.xlane.f32.xlu0 %v1695
      %v1697 = vpop.xlane.xlu0 %1696
      %v1698 = vcvt.f32.s32 %v1697
      %v1699 = vcvt.f32.s32 %v1693
      %v1700 = vshll.u32 %v1699, 16
      %v1701 = vadd.s32 %v1700, %v1698
      %v1702 = vand.u32 %v1647, 65535
      %v1703 = vshra.s32 %v1647, 16
      %v1704 = vcvt.s32.f32 %v1702
      %v1705 = vcvt.s32.f32 %v1703
      %1706 = vmin.xlane.f32.xlu0 %v1705
      %v1707 = vpop.xlane.xlu0 %1706
      %vm1708 = vcmp.eq.f32.partialorder %v1705, %v1707
      %v1709 = vsel %vm1708, %v1704, inf
      %1710 = vmin.xlane.f32.xlu0 %v1709
      %v1711 = vpop.xlane.xlu0 %1710
      %v1712 = vcvt.f32.s32 %v1711
      %v1713 = vcvt.f32.s32 %v1707
      %v1714 = vshll.u32 %v1713, 16
      %v1715 = vadd.s32 %v1714, %v1712
      %v1716 = vand.u32 %v1648, 65535
      %v1717 = vshra.s32 %v1648, 16
      %v1718 = vcvt.s32.f32 %v1716
      %v1719 = vcvt.s32.f32 %v1717
      %1720 = vmin.xlane.f32.xlu0 %v1719
      %v1721 = vpop.xlane.xlu0 %1720
      %vm1722 = vcmp.eq.f32.partialorder %v1719, %v1721
      %v1723 = vsel %vm1722, %v1718, inf
      %1724 = vmin.xlane.f32.xlu0 %v1723
      %v1725 = vpop.xlane.xlu0 %1724
      %v1726 = vcvt.f32.s32 %v1725
      %v1727 = vcvt.f32.s32 %v1721
      %v1728 = vshll.u32 %v1727, 16
      %v1729 = vadd.s32 %v1728, %v1726
      %v1730 = vand.u32 %v1649, 65535
      %v1731 = vshra.s32 %v1649, 16
      %v1732 = vcvt.s32.f32 %v1730
      %v1733 = vcvt.s32.f32 %v1731
      %1734 = vmin.xlane.f32.xlu0 %v1733
      %v1735 = vpop.xlane.xlu0 %1734
      %vm1736 = vcmp.eq.f32.partialorder %v1733, %v1735
      %v1737 = vsel %vm1736, %v1732, inf
      %1738 = vmin.xlane.f32.xlu0 %v1737
      %v1739 = vpop.xlane.xlu0 %1738
      %v1740 = vcvt.f32.s32 %v1739
      %v1741 = vcvt.f32.s32 %v1735
      %v1742 = vshll.u32 %v1741, 16
      %v1743 = vadd.s32 %v1742, %v1740
      %v1744 = vand.u32 %v1650, 65535
      %v1745 = vshra.s32 %v1650, 16
      %v1746 = vcvt.s32.f32 %v1744
      %v1747 = vcvt.s32.f32 %v1745
      %1748 = vmin.xlane.f32.xlu0 %v1747
      %v1749 = vpop.xlane.xlu0 %1748
      %vm1750 = vcmp.eq.f32.partialorder %v1747, %v1749
      %v1751 = vsel %vm1750, %v1746, inf
      %1752 = vmin.xlane.f32.xlu0 %v1751
      %v1753 = vpop.xlane.xlu0 %1752
      %v1754 = vcvt.f32.s32 %v1753
      %v1755 = vcvt.f32.s32 %v1749
      %v1756 = vshll.u32 %v1755, 16
      %v1757 = vadd.s32 %v1756, %v1754
      %v1758 = vand.u32 %v1651, 65535
      %v1759 = vshra.s32 %v1651, 16
      %v1760 = vcvt.s32.f32 %v1758
      %v1761 = vcvt.s32.f32 %v1759
      %1762 = vmin.xlane.f32.xlu0 %v1761
      %v1763 = vpop.xlane.xlu0 %1762
      %vm1764 = vcmp.eq.f32.partialorder %v1761, %v1763
      %v1765 = vsel %vm1764, %v1760, inf
      %1766 = vmin.xlane.f32.xlu0 %v1765
      %v1767 = vpop.xlane.xlu0 %1766
      %v1768 = vcvt.f32.s32 %v1767
      %v1769 = vcvt.f32.s32 %v1763
      %v1770 = vshll.u32 %v1769, 16
      %v1771 = vadd.s32 %v1770, %v1768
      %v1772 = vand.u32 %v1652, 65535
      %v1773 = vshra.s32 %v1652, 16
      %v1774 = vcvt.s32.f32 %v1772
      %v1775 = vcvt.s32.f32 %v1773
      %1776 = vmin.xlane.f32.xlu0 %v1775
      %v1777 = vpop.xlane.xlu0 %1776
      %vm1778 = vcmp.eq.f32.partialorder %v1775, %v1777
      %v1779 = vsel %vm1778, %v1774, inf
      %1780 = vmin.xlane.f32.xlu0 %v1779
      %v1781 = vpop.xlane.xlu0 %1780
      %v1782 = vcvt.f32.s32 %v1781
      %v1783 = vcvt.f32.s32 %v1777
      %v1784 = vshll.u32 %v1783, 16
      %v1785 = vadd.s32 %v1784, %v1782
      %v1786 = vand.u32 %v1653, 65535
      %v1787 = vshra.s32 %v1653, 16
      %v1788 = vcvt.s32.f32 %v1786
      %v1789 = vcvt.s32.f32 %v1787
      %1790 = vmin.xlane.f32.xlu0 %v1789
      %v1791 = vpop.xlane.xlu0 %1790
      %vm1792 = vcmp.eq.f32.partialorder %v1789, %v1791
      %v1793 = vsel %vm1792, %v1788, inf
      %1794 = vmin.xlane.f32.xlu0 %v1793
      %v1795 = vpop.xlane.xlu0 %1794
      %v1796 = vcvt.f32.s32 %v1795
      %v1797 = vcvt.f32.s32 %v1791
      %v1798 = vshll.u32 %v1797, 16
      %v1799 = vadd.s32 %v1798, %v1796
      %v1800 = vand.u32 %v1654, 65535
      %v1801 = vshra.s32 %v1654, 16
      %v1802 = vcvt.s32.f32 %v1800
      %v1803 = vcvt.s32.f32 %v1801
      %1804 = vmin.xlane.f32.xlu0 %v1803
      %v1805 = vpop.xlane.xlu0 %1804
      %vm1806 = vcmp.eq.f32.partialorder %v1803, %v1805
      %v1807 = vsel %vm1806, %v1802, inf
      %1808 = vmin.xlane.f32.xlu0 %v1807
      %v1809 = vpop.xlane.xlu0 %1808
      %v1810 = vcvt.f32.s32 %v1809
      %v1811 = vcvt.f32.s32 %v1805
      %v1812 = vshll.u32 %v1811, 16
      %v1813 = vadd.s32 %v1812, %v1810
      %v1814 = vand.u32 %v1655, 65535
      %v1815 = vshra.s32 %v1655, 16
      %v1816 = vcvt.s32.f32 %v1814
      %v1817 = vcvt.s32.f32 %v1815
      %1818 = vmin.xlane.f32.xlu0 %v1817
      %v1819 = vpop.xlane.xlu0 %1818
      %vm1820 = vcmp.eq.f32.partialorder %v1817, %v1819
      %v1821 = vsel %vm1820, %v1816, inf
      %1822 = vmin.xlane.f32.xlu0 %v1821
      %v1823 = vpop.xlane.xlu0 %1822
      %v1824 = vcvt.f32.s32 %v1823
      %v1825 = vcvt.f32.s32 %v1819
      %v1826 = vshll.u32 %v1825, 16
      %v1827 = vadd.s32 %v1826, %v1824
      %v1828 = vand.u32 %v1656, 65535
      %v1829 = vshra.s32 %v1656, 16
      %v1830 = vcvt.s32.f32 %v1828
      %v1831 = vcvt.s32.f32 %v1829
      %1832 = vmin.xlane.f32.xlu0 %v1831
      %v1833 = vpop.xlane.xlu0 %1832
      %vm1834 = vcmp.eq.f32.partialorder %v1831, %v1833
      %v1835 = vsel %vm1834, %v1830, inf
      %1836 = vmin.xlane.f32.xlu0 %v1835
      %v1837 = vpop.xlane.xlu0 %1836
      %v1838 = vcvt.f32.s32 %v1837
      %v1839 = vcvt.f32.s32 %v1833
      %v1840 = vshll.u32 %v1839, 16
      %v1841 = vadd.s32 %v1840, %v1838
      %v1842 = vand.u32 %v1657, 65535
      %v1843 = vshra.s32 %v1657, 16
      %v1844 = vcvt.s32.f32 %v1842
      %v1845 = vcvt.s32.f32 %v1843
      %1846 = vmin.xlane.f32.xlu0 %v1845
      %v1847 = vpop.xlane.xlu0 %1846
      %vm1848 = vcmp.eq.f32.partialorder %v1845, %v1847
      %v1849 = vsel %vm1848, %v1844, inf
      %1850 = vmin.xlane.f32.xlu0 %v1849
      %v1851 = vpop.xlane.xlu0 %1850
      %v1852 = vcvt.f32.s32 %v1851
      %v1853 = vcvt.f32.s32 %v1847
      %v1854 = vshll.u32 %v1853, 16
      %v1855 = vadd.s32 %v1854, %v1852
      %v1856 = vand.u32 %v1658, 65535
      %v1857 = vshra.s32 %v1658, 16
      %v1858 = vcvt.s32.f32 %v1856
      %v1859 = vcvt.s32.f32 %v1857
      %1860 = vmin.xlane.f32.xlu0 %v1859
      %v1861 = vpop.xlane.xlu0 %1860
      %vm1862 = vcmp.eq.f32.partialorder %v1859, %v1861
      %v1863 = vsel %vm1862, %v1858, inf
      %1864 = vmin.xlane.f32.xlu0 %v1863
      %v1865 = vpop.xlane.xlu0 %1864
      %v1866 = vcvt.f32.s32 %v1865
      %v1867 = vcvt.f32.s32 %v1861
      %v1868 = vshll.u32 %v1867, 16
      %v1869 = vadd.s32 %v1868, %v1866
      %v1870 = vand.u32 %v1659, 65535
      %v1871 = vshra.s32 %v1659, 16
      %v1872 = vcvt.s32.f32 %v1870
      %v1873 = vcvt.s32.f32 %v1871
      %1874 = vmin.xlane.f32.xlu0 %v1873
      %v1875 = vpop.xlane.xlu0 %1874
      %vm1876 = vcmp.eq.f32.partialorder %v1873, %v1875
      %v1877 = vsel %vm1876, %v1872, inf
      %1878 = vmin.xlane.f32.xlu0 %v1877
      %v1879 = vpop.xlane.xlu0 %1878
      %v1880 = vcvt.f32.s32 %v1879
      %v1881 = vcvt.f32.s32 %v1875
      %v1882 = vshll.u32 %v1881, 16
      %v1883 = vadd.s32 %v1882, %v1880
      %vm1884 = vcmp.eq.f32.partialorder %v1516, %v1612
      %vm1885 = vcmp.eq.f32.partialorder %v1517, %v1613
      %vm1886 = vcmp.eq.f32.partialorder %v1518, %v1614
      %vm1887 = vcmp.eq.f32.partialorder %v1519, %v1615
      %vm1888 = vcmp.eq.f32.partialorder %v1520, %v1616
      %vm1889 = vcmp.eq.f32.partialorder %v1521, %v1617
      %vm1890 = vcmp.eq.f32.partialorder %v1522, %v1618
      %vm1891 = vcmp.eq.f32.partialorder %v1523, %v1619
      %vm1892 = vcmp.eq.f32.partialorder %v1524, %v1620
      %vm1893 = vcmp.eq.f32.partialorder %v1525, %v1621
      %vm1894 = vcmp.eq.f32.partialorder %v1526, %v1622
      %vm1895 = vcmp.eq.f32.partialorder %v1527, %v1623
      %vm1896 = vcmp.eq.f32.partialorder %v1528, %v1624
      %vm1897 = vcmp.eq.f32.partialorder %v1529, %v1625
      %vm1898 = vcmp.eq.f32.partialorder %v1530, %v1626
      %vm1899 = vcmp.eq.f32.partialorder %v1531, %v1627
      %v1900 = vsel %vm1884, %v1532, 1073741824
      %v1901 = vsel %vm1885, %v1533, 1073741824
      %v1902 = vsel %vm1886, %v1534, 1073741824
      %v1903 = vsel %vm1887, %v1535, 1073741824
      %v1904 = vsel %vm1888, %v1536, 1073741824
      %v1905 = vsel %vm1889, %v1537, 1073741824
      %v1906 = vsel %vm1890, %v1538, 1073741824
      %v1907 = vsel %vm1891, %v1539, 1073741824
      %v1908 = vsel %vm1892, %v1540, 1073741824
      %v1909 = vsel %vm1893, %v1541, 1073741824
      %v1910 = vsel %vm1894, %v1542, 1073741824
      %v1911 = vsel %vm1895, %v1543, 1073741824
      %v1912 = vsel %vm1896, %v1544, 1073741824
      %v1913 = vsel %vm1897, %v1545, 1073741824
      %v1914 = vsel %vm1898, %v1546, 1073741824
      %v1915 = vsel %vm1899, %v1547, 1073741824
      %v1916 = vand.u32 %v1900, 65535
      %v1917 = vshra.s32 %v1900, 16
      %v1918 = vcvt.s32.f32 %v1916
      %v1919 = vcvt.s32.f32 %v1917
      %1920 = vmin.xlane.f32.xlu0 %v1919
      %v1921 = vpop.xlane.xlu0 %1920
      %vm1922 = vcmp.eq.f32.partialorder %v1919, %v1921
      %v1923 = vsel %vm1922, %v1918, inf
      %1924 = vmin.xlane.f32.xlu0 %v1923
      %v1925 = vpop.xlane.xlu0 %1924
      %v1926 = vcvt.f32.s32 %v1925
      %v1927 = vcvt.f32.s32 %v1921
      %v1928 = vshll.u32 %v1927, 16
      %v1929 = vadd.s32 %v1928, %v1926
      %v1930 = vand.u32 %v1901, 65535
      %v1931 = vshra.s32 %v1901, 16
      %v1932 = vcvt.s32.f32 %v1930
      %v1933 = vcvt.s32.f32 %v1931
      %1934 = vmin.xlane.f32.xlu0 %v1933
      %v1935 = vpop.xlane.xlu0 %1934
      %vm1936 = vcmp.eq.f32.partialorder %v1933, %v1935
      %v1937 = vsel %vm1936, %v1932, inf
      %1938 = vmin.xlane.f32.xlu0 %v1937
      %v1939 = vpop.xlane.xlu0 %1938
      %v1940 = vcvt.f32.s32 %v1939
      %v1941 = vcvt.f32.s32 %v1935
      %v1942 = vshll.u32 %v1941, 16
      %v1943 = vadd.s32 %v1942, %v1940
      %v1944 = vand.u32 %v1902, 65535
      %v1945 = vshra.s32 %v1902, 16
      %v1946 = vcvt.s32.f32 %v1944
      %v1947 = vcvt.s32.f32 %v1945
      %1948 = vmin.xlane.f32.xlu0 %v1947
      %v1949 = vpop.xlane.xlu0 %1948
      %vm1950 = vcmp.eq.f32.partialorder %v1947, %v1949
      %v1951 = vsel %vm1950, %v1946, inf
      %1952 = vmin.xlane.f32.xlu0 %v1951
      %v1953 = vpop.xlane.xlu0 %1952
      %v1954 = vcvt.f32.s32 %v1953
      %v1955 = vcvt.f32.s32 %v1949
      %v1956 = vshll.u32 %v1955, 16
      %v1957 = vadd.s32 %v1956, %v1954
      %v1958 = vand.u32 %v1903, 65535
      %v1959 = vshra.s32 %v1903, 16
      %v1960 = vcvt.s32.f32 %v1958
      %v1961 = vcvt.s32.f32 %v1959
      %1962 = vmin.xlane.f32.xlu0 %v1961
      %v1963 = vpop.xlane.xlu0 %1962
      %vm1964 = vcmp.eq.f32.partialorder %v1961, %v1963
      %v1965 = vsel %vm1964, %v1960, inf
      %1966 = vmin.xlane.f32.xlu0 %v1965
      %v1967 = vpop.xlane.xlu0 %1966
      %v1968 = vcvt.f32.s32 %v1967
      %v1969 = vcvt.f32.s32 %v1963
      %v1970 = vshll.u32 %v1969, 16
      %v1971 = vadd.s32 %v1970, %v1968
      %v1972 = vand.u32 %v1904, 65535
      %v1973 = vshra.s32 %v1904, 16
      %v1974 = vcvt.s32.f32 %v1972
      %v1975 = vcvt.s32.f32 %v1973
      %1976 = vmin.xlane.f32.xlu0 %v1975
      %v1977 = vpop.xlane.xlu0 %1976
      %vm1978 = vcmp.eq.f32.partialorder %v1975, %v1977
      %v1979 = vsel %vm1978, %v1974, inf
      %1980 = vmin.xlane.f32.xlu0 %v1979
      %v1981 = vpop.xlane.xlu0 %1980
      %v1982 = vcvt.f32.s32 %v1981
      %v1983 = vcvt.f32.s32 %v1977
      %v1984 = vshll.u32 %v1983, 16
      %v1985 = vadd.s32 %v1984, %v1982
      %v1986 = vand.u32 %v1905, 65535
      %v1987 = vshra.s32 %v1905, 16
      %v1988 = vcvt.s32.f32 %v1986
      %v1989 = vcvt.s32.f32 %v1987
      %1990 = vmin.xlane.f32.xlu0 %v1989
      %v1991 = vpop.xlane.xlu0 %1990
      %vm1992 = vcmp.eq.f32.partialorder %v1989, %v1991
      %v1993 = vsel %vm1992, %v1988, inf
      %1994 = vmin.xlane.f32.xlu0 %v1993
      %v1995 = vpop.xlane.xlu0 %1994
      %v1996 = vcvt.f32.s32 %v1995
      %v1997 = vcvt.f32.s32 %v1991
      %v1998 = vshll.u32 %v1997, 16
      %v1999 = vadd.s32 %v1998, %v1996
      %v2000 = vand.u32 %v1906, 65535
      %v2001 = vshra.s32 %v1906, 16
      %v2002 = vcvt.s32.f32 %v2000
      %v2003 = vcvt.s32.f32 %v2001
      %2004 = vmin.xlane.f32.xlu0 %v2003
      %v2005 = vpop.xlane.xlu0 %2004
      %vm2006 = vcmp.eq.f32.partialorder %v2003, %v2005
      %v2007 = vsel %vm2006, %v2002, inf
      %2008 = vmin.xlane.f32.xlu0 %v2007
      %v2009 = vpop.xlane.xlu0 %2008
      %v2010 = vcvt.f32.s32 %v2009
      %v2011 = vcvt.f32.s32 %v2005
      %v2012 = vshll.u32 %v2011, 16
      %v2013 = vadd.s32 %v2012, %v2010
      %v2014 = vand.u32 %v1907, 65535
      %v2015 = vshra.s32 %v1907, 16
      %v2016 = vcvt.s32.f32 %v2014
      %v2017 = vcvt.s32.f32 %v2015
      %2018 = vmin.xlane.f32.xlu0 %v2017
      %v2019 = vpop.xlane.xlu0 %2018
      %vm2020 = vcmp.eq.f32.partialorder %v2017, %v2019
      %v2021 = vsel %vm2020, %v2016, inf
      %2022 = vmin.xlane.f32.xlu0 %v2021
      %v2023 = vpop.xlane.xlu0 %2022
      %v2024 = vcvt.f32.s32 %v2023
      %v2025 = vcvt.f32.s32 %v2019
      %v2026 = vshll.u32 %v2025, 16
      %v2027 = vadd.s32 %v2026, %v2024
      %v2028 = vand.u32 %v1908, 65535
      %v2029 = vshra.s32 %v1908, 16
      %v2030 = vcvt.s32.f32 %v2028
      %v2031 = vcvt.s32.f32 %v2029
      %2032 = vmin.xlane.f32.xlu0 %v2031
      %v2033 = vpop.xlane.xlu0 %2032
      %vm2034 = vcmp.eq.f32.partialorder %v2031, %v2033
      %v2035 = vsel %vm2034, %v2030, inf
      %2036 = vmin.xlane.f32.xlu0 %v2035
      %v2037 = vpop.xlane.xlu0 %2036
      %v2038 = vcvt.f32.s32 %v2037
      %v2039 = vcvt.f32.s32 %v2033
      %v2040 = vshll.u32 %v2039, 16
      %v2041 = vadd.s32 %v2040, %v2038
      %v2042 = vand.u32 %v1909, 65535
      %v2043 = vshra.s32 %v1909, 16
      %v2044 = vcvt.s32.f32 %v2042
      %v2045 = vcvt.s32.f32 %v2043
      %2046 = vmin.xlane.f32.xlu0 %v2045
      %v2047 = vpop.xlane.xlu0 %2046
      %vm2048 = vcmp.eq.f32.partialorder %v2045, %v2047
      %v2049 = vsel %vm2048, %v2044, inf
      %2050 = vmin.xlane.f32.xlu0 %v2049
      %v2051 = vpop.xlane.xlu0 %2050
      %v2052 = vcvt.f32.s32 %v2051
      %v2053 = vcvt.f32.s32 %v2047
      %v2054 = vshll.u32 %v2053, 16
      %v2055 = vadd.s32 %v2054, %v2052
      %v2056 = vand.u32 %v1910, 65535
      %v2057 = vshra.s32 %v1910, 16
      %v2058 = vcvt.s32.f32 %v2056
      %v2059 = vcvt.s32.f32 %v2057
      %2060 = vmin.xlane.f32.xlu0 %v2059
      %v2061 = vpop.xlane.xlu0 %2060
      %vm2062 = vcmp.eq.f32.partialorder %v2059, %v2061
      %v2063 = vsel %vm2062, %v2058, inf
      %2064 = vmin.xlane.f32.xlu0 %v2063
      %v2065 = vpop.xlane.xlu0 %2064
      %v2066 = vcvt.f32.s32 %v2065
      %v2067 = vcvt.f32.s32 %v2061
      %v2068 = vshll.u32 %v2067, 16
      %v2069 = vadd.s32 %v2068, %v2066
      %v2070 = vand.u32 %v1911, 65535
      %v2071 = vshra.s32 %v1911, 16
      %v2072 = vcvt.s32.f32 %v2070
      %v2073 = vcvt.s32.f32 %v2071
      %2074 = vmin.xlane.f32.xlu0 %v2073
      %v2075 = vpop.xlane.xlu0 %2074
      %vm2076 = vcmp.eq.f32.partialorder %v2073, %v2075
      %v2077 = vsel %vm2076, %v2072, inf
      %2078 = vmin.xlane.f32.xlu0 %v2077
      %v2079 = vpop.xlane.xlu0 %2078
      %v2080 = vcvt.f32.s32 %v2079
      %v2081 = vcvt.f32.s32 %v2075
      %v2082 = vshll.u32 %v2081, 16
      %v2083 = vadd.s32 %v2082, %v2080
      %v2084 = vand.u32 %v1912, 65535
      %v2085 = vshra.s32 %v1912, 16
      %v2086 = vcvt.s32.f32 %v2084
      %v2087 = vcvt.s32.f32 %v2085
      %2088 = vmin.xlane.f32.xlu0 %v2087
      %v2089 = vpop.xlane.xlu0 %2088
      %vm2090 = vcmp.eq.f32.partialorder %v2087, %v2089
      %v2091 = vsel %vm2090, %v2086, inf
      %2092 = vmin.xlane.f32.xlu0 %v2091
      %v2093 = vpop.xlane.xlu0 %2092
      %v2094 = vcvt.f32.s32 %v2093
      %v2095 = vcvt.f32.s32 %v2089
      %v2096 = vshll.u32 %v2095, 16
      %v2097 = vadd.s32 %v2096, %v2094
      %v2098 = vand.u32 %v1913, 65535
      %v2099 = vshra.s32 %v1913, 16
      %v2100 = vcvt.s32.f32 %v2098
      %v2101 = vcvt.s32.f32 %v2099
      %2102 = vmin.xlane.f32.xlu0 %v2101
      %v2103 = vpop.xlane.xlu0 %2102
      %vm2104 = vcmp.eq.f32.partialorder %v2101, %v2103
      %v2105 = vsel %vm2104, %v2100, inf
      %2106 = vmin.xlane.f32.xlu0 %v2105
      %v2107 = vpop.xlane.xlu0 %2106
      %v2108 = vcvt.f32.s32 %v2107
      %v2109 = vcvt.f32.s32 %v2103
      %v2110 = vshll.u32 %v2109, 16
      %v2111 = vadd.s32 %v2110, %v2108
      %v2112 = vand.u32 %v1914, 65535
      %v2113 = vshra.s32 %v1914, 16
      %v2114 = vcvt.s32.f32 %v2112
      %v2115 = vcvt.s32.f32 %v2113
      %2116 = vmin.xlane.f32.xlu0 %v2115
      %v2117 = vpop.xlane.xlu0 %2116
      %vm2118 = vcmp.eq.f32.partialorder %v2115, %v2117
      %v2119 = vsel %vm2118, %v2114, inf
      %2120 = vmin.xlane.f32.xlu0 %v2119
      %v2121 = vpop.xlane.xlu0 %2120
      %v2122 = vcvt.f32.s32 %v2121
      %v2123 = vcvt.f32.s32 %v2117
      %v2124 = vshll.u32 %v2123, 16
      %v2125 = vadd.s32 %v2124, %v2122
      %v2126 = vand.u32 %v1915, 65535
      %v2127 = vshra.s32 %v1915, 16
      %v2128 = vcvt.s32.f32 %v2126
      %v2129 = vcvt.s32.f32 %v2127
      %2130 = vmin.xlane.f32.xlu0 %v2129
      %v2131 = vpop.xlane.xlu0 %2130
      %vm2132 = vcmp.eq.f32.partialorder %v2129, %v2131
      %v2133 = vsel %vm2132, %v2128, inf
      %2134 = vmin.xlane.f32.xlu0 %v2133
      %v2135 = vpop.xlane.xlu0 %2134
      %v2136 = vcvt.f32.s32 %v2135
      %v2137 = vcvt.f32.s32 %v2131
      %v2138 = vshll.u32 %v2137, 16
      %v2139 = vadd.s32 %v2138, %v2136
      %vm2140 = vcmp.lt.s32.totalorder %v1673, %v1929
      %v2141 = vsel %vm2140, %v1673, %v1929
      %vm2142 = vcmp.lt.s32.totalorder %v1687, %v1943
      %v2143 = vsel %vm2142, %v1687, %v1943
      %vm2144 = vcmp.lt.s32.totalorder %v1701, %v1957
      %v2145 = vsel %vm2144, %v1701, %v1957
      %vm2146 = vcmp.lt.s32.totalorder %v1715, %v1971
      %v2147 = vsel %vm2146, %v1715, %v1971
      %vm2148 = vcmp.lt.s32.totalorder %v1729, %v1985
      %v2149 = vsel %vm2148, %v1729, %v1985
      %vm2150 = vcmp.lt.s32.totalorder %v1743, %v1999
      %v2151 = vsel %vm2150, %v1743, %v1999
      %vm2152 = vcmp.lt.s32.totalorder %v1757, %v2013
      %v2153 = vsel %vm2152, %v1757, %v2013
      %vm2154 = vcmp.lt.s32.totalorder %v1771, %v2027
      %v2155 = vsel %vm2154, %v1771, %v2027
      %vm2156 = vcmp.lt.s32.totalorder %v1785, %v2041
      %v2157 = vsel %vm2156, %v1785, %v2041
      %vm2158 = vcmp.lt.s32.totalorder %v1799, %v2055
      %v2159 = vsel %vm2158, %v1799, %v2055
      %vm2160 = vcmp.lt.s32.totalorder %v1813, %v2069
      %v2161 = vsel %vm2160, %v1813, %v2069
      %vm2162 = vcmp.lt.s32.totalorder %v1827, %v2083
      %v2163 = vsel %vm2162, %v1827, %v2083
      %vm2164 = vcmp.lt.s32.totalorder %v1841, %v2097
      %v2165 = vsel %vm2164, %v1841, %v2097
      %vm2166 = vcmp.lt.s32.totalorder %v1855, %v2111
      %v2167 = vsel %vm2166, %v1855, %v2111
      %vm2168 = vcmp.lt.s32.totalorder %v1869, %v2125
      %v2169 = vsel %vm2168, %v1869, %v2125
      %vm2170 = vcmp.lt.s32.totalorder %v1883, %v2139
      %v2171 = vsel %vm2170, %v1883, %v2139
      %vm2172 = vcmask 15368
      %2173 = vst.msk [vmem:[#allocation5] sm:$0xff] %vm2172, %v1612
      %2174 = vst.msk [vmem:[#allocation5 + $0x8] sm:$0xff] %vm2172, %v1613
      %2175 = vst.msk [vmem:[#allocation5 + $0x10] sm:$0xff] %vm2172, %v1614
      %2176 = vst.msk [vmem:[#allocation5 + $0x18] sm:$0xff] %vm2172, %v1615
      %2177 = vst.msk [vmem:[#allocation5 + $0x20] sm:$0xff] %vm2172, %v1616
      %2178 = vst.msk [vmem:[#allocation5 + $0x28] sm:$0xff] %vm2172, %v1617
      %2179 = vst.msk [vmem:[#allocation5 + $0x30] sm:$0xff] %vm2172, %v1618
      %2180 = vst.msk [vmem:[#allocation5 + $0x38] sm:$0xff] %vm2172, %v1619
      %2181 = vst.msk [vmem:[#allocation5 + $0x40] sm:$0xff] %vm2172, %v1620
      %2182 = vst.msk [vmem:[#allocation5 + $0x48] sm:$0xff] %vm2172, %v1621
      %2183 = vst.msk [vmem:[#allocation5 + $0x50] sm:$0xff] %vm2172, %v1622
      %2184 = vst.msk [vmem:[#allocation5 + $0x58] sm:$0xff] %vm2172, %v1623
      %2185 = vst.msk [vmem:[#allocation5 + $0x60] sm:$0xff] %vm2172, %v1624
      %2186 = vst.msk [vmem:[#allocation5 + $0x68] sm:$0xff] %vm2172, %v1625
      %2187 = vst.msk [vmem:[#allocation5 + $0x70] sm:$0xff] %vm2172, %v1626
      %2188 = vst.msk [vmem:[#allocation5 + $0x78] sm:$0xff] %vm2172, %v1627
      %2189 = vst.msk [vmem:[#allocation6] sm:$0xff] %vm2172, %v2141
      %2190 = vst.msk [vmem:[#allocation6 + $0x8] sm:$0xff] %vm2172, %v2143
      %2191 = vst.msk [vmem:[#allocation6 + $0x10] sm:$0xff] %vm2172, %v2145
      %2192 = vst.msk [vmem:[#allocation6 + $0x18] sm:$0xff] %vm2172, %v2147
      %2193 = vst.msk [vmem:[#allocation6 + $0x20] sm:$0xff] %vm2172, %v2149
      %2194 = vst.msk [vmem:[#allocation6 + $0x28] sm:$0xff] %vm2172, %v2151
      %2195 = vst.msk [vmem:[#allocation6 + $0x30] sm:$0xff] %vm2172, %v2153
      %2196 = vst.msk [vmem:[#allocation6 + $0x38] sm:$0xff] %vm2172, %v2155
      %2197 = vst.msk [vmem:[#allocation6 + $0x40] sm:$0xff] %vm2172, %v2157
      %2198 = vst.msk [vmem:[#allocation6 + $0x48] sm:$0xff] %vm2172, %v2159
      %2199 = vst.msk [vmem:[#allocation6 + $0x50] sm:$0xff] %vm2172, %v2161
      %2200 = vst.msk [vmem:[#allocation6 + $0x58] sm:$0xff] %vm2172, %v2163
      %2201 = vst.msk [vmem:[#allocation6 + $0x60] sm:$0xff] %vm2172, %v2165
      %2202 = vst.msk [vmem:[#allocation6 + $0x68] sm:$0xff] %vm2172, %v2167
      %2203 = vst.msk [vmem:[#allocation6 + $0x70] sm:$0xff] %vm2172, %v2169
      %2204 = vst.msk [vmem:[#allocation6 + $0x78] sm:$0xff] %vm2172, %v2171
      %vm2205 = vcmp.eq.s32.totalorder %v663, %v2141
      %vm2206 = vcmp.eq.s32.totalorder %v663, %v2143
      %vm2207 = vcmp.eq.s32.totalorder %v663, %v2145
      %vm2208 = vcmp.eq.s32.totalorder %v663, %v2147
      %vm2209 = vcmp.eq.s32.totalorder %v663, %v2149
      %vm2210 = vcmp.eq.s32.totalorder %v663, %v2151
      %vm2211 = vcmp.eq.s32.totalorder %v663, %v2153
      %vm2212 = vcmp.eq.s32.totalorder %v663, %v2155
      %vm2213 = vcmp.eq.s32.totalorder %v663, %v2157
      %vm2214 = vcmp.eq.s32.totalorder %v663, %v2159
      %vm2215 = vcmp.eq.s32.totalorder %v663, %v2161
      %vm2216 = vcmp.eq.s32.totalorder %v663, %v2163
      %vm2217 = vcmp.eq.s32.totalorder %v663, %v2165
      %vm2218 = vcmp.eq.s32.totalorder %v663, %v2167
      %vm2219 = vcmp.eq.s32.totalorder %v663, %v2169
      %vm2220 = vcmp.eq.s32.totalorder %v663, %v2171
      %v2221 = vsel %vm2205, -inf, %v1500
      %v2222 = vsel %vm2206, -inf, %v1501
      %v2223 = vsel %vm2207, -inf, %v1502
      %v2224 = vsel %vm2208, -inf, %v1503
      %v2225 = vsel %vm2209, -inf, %v1504
      %v2226 = vsel %vm2210, -inf, %v1505
      %v2227 = vsel %vm2211, -inf, %v1506
      %v2228 = vsel %vm2212, -inf, %v1507
      %v2229 = vsel %vm2213, -inf, %v1508
      %v2230 = vsel %vm2214, -inf, %v1509
      %v2231 = vsel %vm2215, -inf, %v1510
      %v2232 = vsel %vm2216, -inf, %v1511
      %v2233 = vsel %vm2217, -inf, %v1512
      %v2234 = vsel %vm2218, -inf, %v1513
      %v2235 = vsel %vm2219, -inf, %v1514
      %v2236 = vsel %vm2220, -inf, %v1515
      %2237 = vst [vmem:[#allocation2] sm:$0xff] %v2221
      %2238 = vst [vmem:[#allocation2 + $0x8] sm:$0xff] %v2222
      %2239 = vst [vmem:[#allocation2 + $0x10] sm:$0xff] %v2223
      %2240 = vst [vmem:[#allocation2 + $0x18] sm:$0xff] %v2224
      %2241 = vst [vmem:[#allocation2 + $0x20] sm:$0xff] %v2225
      %2242 = vst [vmem:[#allocation2 + $0x28] sm:$0xff] %v2226
      %2243 = vst [vmem:[#allocation2 + $0x30] sm:$0xff] %v2227
      %2244 = vst [vmem:[#allocation2 + $0x38] sm:$0xff] %v2228
      %2245 = vst [vmem:[#allocation2 + $0x40] sm:$0xff] %v2229
      %2246 = vst [vmem:[#allocation2 + $0x48] sm:$0xff] %v2230
      %2247 = vst [vmem:[#allocation2 + $0x50] sm:$0xff] %v2231
      %2248 = vst [vmem:[#allocation2 + $0x58] sm:$0xff] %v2232
      %2249 = vst [vmem:[#allocation2 + $0x60] sm:$0xff] %v2233
      %2250 = vst [vmem:[#allocation2 + $0x68] sm:$0xff] %v2234
      %2251 = vst [vmem:[#allocation2 + $0x70] sm:$0xff] %v2235
      %2252 = vst [vmem:[#allocation2 + $0x78] sm:$0xff] %v2236
      %vm2253 = vcmp.eq.s32.totalorder %v1532, %v2141
      %vm2254 = vcmp.eq.s32.totalorder %v1533, %v2143
      %vm2255 = vcmp.eq.s32.totalorder %v1534, %v2145
      %vm2256 = vcmp.eq.s32.totalorder %v1535, %v2147
      %vm2257 = vcmp.eq.s32.totalorder %v1536, %v2149
      %vm2258 = vcmp.eq.s32.totalorder %v1537, %v2151
      %vm2259 = vcmp.eq.s32.totalorder %v1538, %v2153
      %vm2260 = vcmp.eq.s32.totalorder %v1539, %v2155
      %vm2261 = vcmp.eq.s32.totalorder %v1540, %v2157
      %vm2262 = vcmp.eq.s32.totalorder %v1541, %v2159
      %vm2263 = vcmp.eq.s32.totalorder %v1542, %v2161
      %vm2264 = vcmp.eq.s32.totalorder %v1543, %v2163
      %vm2265 = vcmp.eq.s32.totalorder %v1544, %v2165
      %vm2266 = vcmp.eq.s32.totalorder %v1545, %v2167
      %vm2267 = vcmp.eq.s32.totalorder %v1546, %v2169
      %vm2268 = vcmp.eq.s32.totalorder %v1547, %v2171
      %v2269 = vsel %vm2253, -inf, %v1516
      %v2270 = vsel %vm2254, -inf, %v1517
      %v2271 = vsel %vm2255, -inf, %v1518
      %v2272 = vsel %vm2256, -inf, %v1519
      %v2273 = vsel %vm2257, -inf, %v1520
      %v2274 = vsel %vm2258, -inf, %v1521
      %v2275 = vsel %vm2259, -inf, %v1522
      %v2276 = vsel %vm2260, -inf, %v1523
      %v2277 = vsel %vm2261, -inf, %v1524
      %v2278 = vsel %vm2262, -inf, %v1525
      %v2279 = vsel %vm2263, -inf, %v1526
      %v2280 = vsel %vm2264, -inf, %v1527
      %v2281 = vsel %vm2265, -inf, %v1528
      %v2282 = vsel %vm2266, -inf, %v1529
      %v2283 = vsel %vm2267, -inf, %v1530
      %v2284 = vsel %vm2268, -inf, %v1531
      %2285 = vst [vmem:[#allocation3] sm:$0xff] %v2269
      %2286 = vst [vmem:[#allocation3 + $0x8] sm:$0xff] %v2270
      %2287 = vst [vmem:[#allocation3 + $0x10] sm:$0xff] %v2271
      %2288 = vst [vmem:[#allocation3 + $0x18] sm:$0xff] %v2272
      %2289 = vst [vmem:[#allocation3 + $0x20] sm:$0xff] %v2273
      %2290 = vst [vmem:[#allocation3 + $0x28] sm:$0xff] %v2274
      %2291 = vst [vmem:[#allocation3 + $0x30] sm:$0xff] %v2275
      %2292 = vst [vmem:[#allocation3 + $0x38] sm:$0xff] %v2276
      %2293 = vst [vmem:[#allocation3 + $0x40] sm:$0xff] %v2277
      %2294 = vst [vmem:[#allocation3 + $0x48] sm:$0xff] %v2278
      %2295 = vst [vmem:[#allocation3 + $0x50] sm:$0xff] %v2279
      %2296 = vst [vmem:[#allocation3 + $0x58] sm:$0xff] %v2280
      %2297 = vst [vmem:[#allocation3 + $0x60] sm:$0xff] %v2281
      %2298 = vst [vmem:[#allocation3 + $0x68] sm:$0xff] %v2282
      %2299 = vst [vmem:[#allocation3 + $0x70] sm:$0xff] %v2283
      %2300 = vst [vmem:[#allocation3 + $0x78] sm:$0xff] %v2284
      %v2301 = vld [vmem:[#allocation2] sm:$0xff]
      %v2302 = vld [vmem:[#allocation2 + $0x8] sm:$0xff]
      %v2303 = vld [vmem:[#allocation2 + $0x10] sm:$0xff]
      %v2304 = vld [vmem:[#allocation2 + $0x18] sm:$0xff]
      %v2305 = vld [vmem:[#allocation2 + $0x20] sm:$0xff]
      %v2306 = vld [vmem:[#allocation2 + $0x28] sm:$0xff]
      %v2307 = vld [vmem:[#allocation2 + $0x30] sm:$0xff]
      %v2308 = vld [vmem:[#allocation2 + $0x38] sm:$0xff]
      %v2309 = vld [vmem:[#allocation2 + $0x40] sm:$0xff]
      %v2310 = vld [vmem:[#allocation2 + $0x48] sm:$0xff]
      %v2311 = vld [vmem:[#allocation2 + $0x50] sm:$0xff]
      %v2312 = vld [vmem:[#allocation2 + $0x58] sm:$0xff]
      %v2313 = vld [vmem:[#allocation2 + $0x60] sm:$0xff]
      %v2314 = vld [vmem:[#allocation2 + $0x68] sm:$0xff]
      %v2315 = vld [vmem:[#allocation2 + $0x70] sm:$0xff]
      %v2316 = vld [vmem:[#allocation2 + $0x78] sm:$0xff]
      %v2317 = vld [vmem:[#allocation3] sm:$0xff]
      %v2318 = vld [vmem:[#allocation3 + $0x8] sm:$0xff]
      %v2319 = vld [vmem:[#allocation3 + $0x10] sm:$0xff]
      %v2320 = vld [vmem:[#allocation3 + $0x18] sm:$0xff]
      %v2321 = vld [vmem:[#allocation3 + $0x20] sm:$0xff]
      %v2322 = vld [vmem:[#allocation3 + $0x28] sm:$0xff]
      %v2323 = vld [vmem:[#allocation3 + $0x30] sm:$0xff]
      %v2324 = vld [vmem:[#allocation3 + $0x38] sm:$0xff]
      %v2325 = vld [vmem:[#allocation3 + $0x40] sm:$0xff]
      %v2326 = vld [vmem:[#allocation3 + $0x48] sm:$0xff]
      %v2327 = vld [vmem:[#allocation3 + $0x50] sm:$0xff]
      %v2328 = vld [vmem:[#allocation3 + $0x58] sm:$0xff]
      %v2329 = vld [vmem:[#allocation3 + $0x60] sm:$0xff]
      %v2330 = vld [vmem:[#allocation3 + $0x68] sm:$0xff]
      %v2331 = vld [vmem:[#allocation3 + $0x70] sm:$0xff]
      %v2332 = vld [vmem:[#allocation3 + $0x78] sm:$0xff]
      %v2333 = vld [vmem:[#allocation4] sm:$0xff]
      %v2334 = vld [vmem:[#allocation4 + $0x8] sm:$0xff]
      %v2335 = vld [vmem:[#allocation4 + $0x10] sm:$0xff]
      %v2336 = vld [vmem:[#allocation4 + $0x18] sm:$0xff]
      %v2337 = vld [vmem:[#allocation4 + $0x20] sm:$0xff]
      %v2338 = vld [vmem:[#allocation4 + $0x28] sm:$0xff]
      %v2339 = vld [vmem:[#allocation4 + $0x30] sm:$0xff]
      %v2340 = vld [vmem:[#allocation4 + $0x38] sm:$0xff]
      %v2341 = vld [vmem:[#allocation4 + $0x40] sm:$0xff]
      %v2342 = vld [vmem:[#allocation4 + $0x48] sm:$0xff]
      %v2343 = vld [vmem:[#allocation4 + $0x50] sm:$0xff]
      %v2344 = vld [vmem:[#allocation4 + $0x58] sm:$0xff]
      %v2345 = vld [vmem:[#allocation4 + $0x60] sm:$0xff]
      %v2346 = vld [vmem:[#allocation4 + $0x68] sm:$0xff]
      %v2347 = vld [vmem:[#allocation4 + $0x70] sm:$0xff]
      %v2348 = vld [vmem:[#allocation4 + $0x78] sm:$0xff]
      %2349 = vmax.xlane.f32.xlu0 %v2301
      %v2350 = vpop.xlane.xlu0 %2349
      %2351 = vmax.xlane.f32.xlu0 %v2302
      %v2352 = vpop.xlane.xlu0 %2351
      %2353 = vmax.xlane.f32.xlu0 %v2303
      %v2354 = vpop.xlane.xlu0 %2353
      %2355 = vmax.xlane.f32.xlu0 %v2304
      %v2356 = vpop.xlane.xlu0 %2355
      %2357 = vmax.xlane.f32.xlu0 %v2305
      %v2358 = vpop.xlane.xlu0 %2357
      %2359 = vmax.xlane.f32.xlu0 %v2306
      %v2360 = vpop.xlane.xlu0 %2359
      %2361 = vmax.xlane.f32.xlu0 %v2307
      %v2362 = vpop.xlane.xlu0 %2361
      %2363 = vmax.xlane.f32.xlu0 %v2308
      %v2364 = vpop.xlane.xlu0 %2363
      %2365 = vmax.xlane.f32.xlu0 %v2309
      %v2366 = vpop.xlane.xlu0 %2365
      %2367 = vmax.xlane.f32.xlu0 %v2310
      %v2368 = vpop.xlane.xlu0 %2367
      %2369 = vmax.xlane.f32.xlu0 %v2311
      %v2370 = vpop.xlane.xlu0 %2369
      %2371 = vmax.xlane.f32.xlu0 %v2312
      %v2372 = vpop.xlane.xlu0 %2371
      %2373 = vmax.xlane.f32.xlu0 %v2313
      %v2374 = vpop.xlane.xlu0 %2373
      %2375 = vmax.xlane.f32.xlu0 %v2314
      %v2376 = vpop.xlane.xlu0 %2375
      %2377 = vmax.xlane.f32.xlu0 %v2315
      %v2378 = vpop.xlane.xlu0 %2377
      %2379 = vmax.xlane.f32.xlu0 %v2316
      %v2380 = vpop.xlane.xlu0 %2379
      %2381 = vmax.xlane.f32.xlu0 %v2317
      %v2382 = vpop.xlane.xlu0 %2381
      %2383 = vmax.xlane.f32.xlu0 %v2318
      %v2384 = vpop.xlane.xlu0 %2383
      %2385 = vmax.xlane.f32.xlu0 %v2319
      %v2386 = vpop.xlane.xlu0 %2385
      %2387 = vmax.xlane.f32.xlu0 %v2320
      %v2388 = vpop.xlane.xlu0 %2387
      %2389 = vmax.xlane.f32.xlu0 %v2321
      %v2390 = vpop.xlane.xlu0 %2389
      %2391 = vmax.xlane.f32.xlu0 %v2322
      %v2392 = vpop.xlane.xlu0 %2391
      %2393 = vmax.xlane.f32.xlu0 %v2323
      %v2394 = vpop.xlane.xlu0 %2393
      %2395 = vmax.xlane.f32.xlu0 %v2324
      %v2396 = vpop.xlane.xlu0 %2395
      %2397 = vmax.xlane.f32.xlu0 %v2325
      %v2398 = vpop.xlane.xlu0 %2397
      %2399 = vmax.xlane.f32.xlu0 %v2326
      %v2400 = vpop.xlane.xlu0 %2399
      %2401 = vmax.xlane.f32.xlu0 %v2327
      %v2402 = vpop.xlane.xlu0 %2401
      %2403 = vmax.xlane.f32.xlu0 %v2328
      %v2404 = vpop.xlane.xlu0 %2403
      %2405 = vmax.xlane.f32.xlu0 %v2329
      %v2406 = vpop.xlane.xlu0 %2405
      %2407 = vmax.xlane.f32.xlu0 %v2330
      %v2408 = vpop.xlane.xlu0 %2407
      %2409 = vmax.xlane.f32.xlu0 %v2331
      %v2410 = vpop.xlane.xlu0 %2409
      %2411 = vmax.xlane.f32.xlu0 %v2332
      %v2412 = vpop.xlane.xlu0 %2411
      %v2413 = vmax.f32 %v2350, %v2382
      %v2414 = vmax.f32 %v2352, %v2384
      %v2415 = vmax.f32 %v2354, %v2386
      %v2416 = vmax.f32 %v2356, %v2388
      %v2417 = vmax.f32 %v2358, %v2390
      %v2418 = vmax.f32 %v2360, %v2392
      %v2419 = vmax.f32 %v2362, %v2394
      %v2420 = vmax.f32 %v2364, %v2396
      %v2421 = vmax.f32 %v2366, %v2398
      %v2422 = vmax.f32 %v2368, %v2400
      %v2423 = vmax.f32 %v2370, %v2402
      %v2424 = vmax.f32 %v2372, %v2404
      %v2425 = vmax.f32 %v2374, %v2406
      %v2426 = vmax.f32 %v2376, %v2408
      %v2427 = vmax.f32 %v2378, %v2410
      %v2428 = vmax.f32 %v2380, %v2412
      %vm2429 = vcmp.eq.f32.partialorder %v2301, %v2413
      %vm2430 = vcmp.eq.f32.partialorder %v2302, %v2414
      %vm2431 = vcmp.eq.f32.partialorder %v2303, %v2415
      %vm2432 = vcmp.eq.f32.partialorder %v2304, %v2416
      %vm2433 = vcmp.eq.f32.partialorder %v2305, %v2417
      %vm2434 = vcmp.eq.f32.partialorder %v2306, %v2418
      %vm2435 = vcmp.eq.f32.partialorder %v2307, %v2419
      %vm2436 = vcmp.eq.f32.partialorder %v2308, %v2420
      %vm2437 = vcmp.eq.f32.partialorder %v2309, %v2421
      %vm2438 = vcmp.eq.f32.partialorder %v2310, %v2422
      %vm2439 = vcmp.eq.f32.partialorder %v2311, %v2423
      %vm2440 = vcmp.eq.f32.partialorder %v2312, %v2424
      %vm2441 = vcmp.eq.f32.partialorder %v2313, %v2425
      %vm2442 = vcmp.eq.f32.partialorder %v2314, %v2426
      %vm2443 = vcmp.eq.f32.partialorder %v2315, %v2427
      %vm2444 = vcmp.eq.f32.partialorder %v2316, %v2428
      %v2445 = vsel %vm2429, %v663, 1073741824
      %v2446 = vsel %vm2430, %v663, 1073741824
      %v2447 = vsel %vm2431, %v663, 1073741824
      %v2448 = vsel %vm2432, %v663, 1073741824
      %v2449 = vsel %vm2433, %v663, 1073741824
      %v2450 = vsel %vm2434, %v663, 1073741824
      %v2451 = vsel %vm2435, %v663, 1073741824
      %v2452 = vsel %vm2436, %v663, 1073741824
      %v2453 = vsel %vm2437, %v663, 1073741824
      %v2454 = vsel %vm2438, %v663, 1073741824
      %v2455 = vsel %vm2439, %v663, 1073741824
      %v2456 = vsel %vm2440, %v663, 1073741824
      %v2457 = vsel %vm2441, %v663, 1073741824
      %v2458 = vsel %vm2442, %v663, 1073741824
      %v2459 = vsel %vm2443, %v663, 1073741824
      %v2460 = vsel %vm2444, %v663, 1073741824
      %v2461 = vand.u32 %v2445, 65535
      %v2462 = vshra.s32 %v2445, 16
      %v2463 = vcvt.s32.f32 %v2461
      %v2464 = vcvt.s32.f32 %v2462
      %2465 = vmin.xlane.f32.xlu0 %v2464
      %v2466 = vpop.xlane.xlu0 %2465
      %vm2467 = vcmp.eq.f32.partialorder %v2464, %v2466
      %v2468 = vsel %vm2467, %v2463, inf
      %2469 = vmin.xlane.f32.xlu0 %v2468
      %v2470 = vpop.xlane.xlu0 %2469
      %v2471 = vcvt.f32.s32 %v2470
      %v2472 = vcvt.f32.s32 %v2466
      %v2473 = vshll.u32 %v2472, 16
      %v2474 = vadd.s32 %v2473, %v2471
      %v2475 = vand.u32 %v2446, 65535
      %v2476 = vshra.s32 %v2446, 16
      %v2477 = vcvt.s32.f32 %v2475
      %v2478 = vcvt.s32.f32 %v2476
      %2479 = vmin.xlane.f32.xlu0 %v2478
      %v2480 = vpop.xlane.xlu0 %2479
      %vm2481 = vcmp.eq.f32.partialorder %v2478, %v2480
      %v2482 = vsel %vm2481, %v2477, inf
      %2483 = vmin.xlane.f32.xlu0 %v2482
      %v2484 = vpop.xlane.xlu0 %2483
      %v2485 = vcvt.f32.s32 %v2484
      %v2486 = vcvt.f32.s32 %v2480
      %v2487 = vshll.u32 %v2486, 16
      %v2488 = vadd.s32 %v2487, %v2485
      %v2489 = vand.u32 %v2447, 65535
      %v2490 = vshra.s32 %v2447, 16
      %v2491 = vcvt.s32.f32 %v2489
      %v2492 = vcvt.s32.f32 %v2490
      %2493 = vmin.xlane.f32.xlu0 %v2492
      %v2494 = vpop.xlane.xlu0 %2493
      %vm2495 = vcmp.eq.f32.partialorder %v2492, %v2494
      %v2496 = vsel %vm2495, %v2491, inf
      %2497 = vmin.xlane.f32.xlu0 %v2496
      %v2498 = vpop.xlane.xlu0 %2497
      %v2499 = vcvt.f32.s32 %v2498
      %v2500 = vcvt.f32.s32 %v2494
      %v2501 = vshll.u32 %v2500, 16
      %v2502 = vadd.s32 %v2501, %v2499
      %v2503 = vand.u32 %v2448, 65535
      %v2504 = vshra.s32 %v2448, 16
      %v2505 = vcvt.s32.f32 %v2503
      %v2506 = vcvt.s32.f32 %v2504
      %2507 = vmin.xlane.f32.xlu0 %v2506
      %v2508 = vpop.xlane.xlu0 %2507
      %vm2509 = vcmp.eq.f32.partialorder %v2506, %v2508
      %v2510 = vsel %vm2509, %v2505, inf
      %2511 = vmin.xlane.f32.xlu0 %v2510
      %v2512 = vpop.xlane.xlu0 %2511
      %v2513 = vcvt.f32.s32 %v2512
      %v2514 = vcvt.f32.s32 %v2508
      %v2515 = vshll.u32 %v2514, 16
      %v2516 = vadd.s32 %v2515, %v2513
      %v2517 = vand.u32 %v2449, 65535
      %v2518 = vshra.s32 %v2449, 16
      %v2519 = vcvt.s32.f32 %v2517
      %v2520 = vcvt.s32.f32 %v2518
      %2521 = vmin.xlane.f32.xlu0 %v2520
      %v2522 = vpop.xlane.xlu0 %2521
      %vm2523 = vcmp.eq.f32.partialorder %v2520, %v2522
      %v2524 = vsel %vm2523, %v2519, inf
      %2525 = vmin.xlane.f32.xlu0 %v2524
      %v2526 = vpop.xlane.xlu0 %2525
      %v2527 = vcvt.f32.s32 %v2526
      %v2528 = vcvt.f32.s32 %v2522
      %v2529 = vshll.u32 %v2528, 16
      %v2530 = vadd.s32 %v2529, %v2527
      %v2531 = vand.u32 %v2450, 65535
      %v2532 = vshra.s32 %v2450, 16
      %v2533 = vcvt.s32.f32 %v2531
      %v2534 = vcvt.s32.f32 %v2532
      %2535 = vmin.xlane.f32.xlu0 %v2534
      %v2536 = vpop.xlane.xlu0 %2535
      %vm2537 = vcmp.eq.f32.partialorder %v2534, %v2536
      %v2538 = vsel %vm2537, %v2533, inf
      %2539 = vmin.xlane.f32.xlu0 %v2538
      %v2540 = vpop.xlane.xlu0 %2539
      %v2541 = vcvt.f32.s32 %v2540
      %v2542 = vcvt.f32.s32 %v2536
      %v2543 = vshll.u32 %v2542, 16
      %v2544 = vadd.s32 %v2543, %v2541
      %v2545 = vand.u32 %v2451, 65535
      %v2546 = vshra.s32 %v2451, 16
      %v2547 = vcvt.s32.f32 %v2545
      %v2548 = vcvt.s32.f32 %v2546
      %2549 = vmin.xlane.f32.xlu0 %v2548
      %v2550 = vpop.xlane.xlu0 %2549
      %vm2551 = vcmp.eq.f32.partialorder %v2548, %v2550
      %v2552 = vsel %vm2551, %v2547, inf
      %2553 = vmin.xlane.f32.xlu0 %v2552
      %v2554 = vpop.xlane.xlu0 %2553
      %v2555 = vcvt.f32.s32 %v2554
      %v2556 = vcvt.f32.s32 %v2550
      %v2557 = vshll.u32 %v2556, 16
      %v2558 = vadd.s32 %v2557, %v2555
      %v2559 = vand.u32 %v2452, 65535
      %v2560 = vshra.s32 %v2452, 16
      %v2561 = vcvt.s32.f32 %v2559
      %v2562 = vcvt.s32.f32 %v2560
      %2563 = vmin.xlane.f32.xlu0 %v2562
      %v2564 = vpop.xlane.xlu0 %2563
      %vm2565 = vcmp.eq.f32.partialorder %v2562, %v2564
      %v2566 = vsel %vm2565, %v2561, inf
      %2567 = vmin.xlane.f32.xlu0 %v2566
      %v2568 = vpop.xlane.xlu0 %2567
      %v2569 = vcvt.f32.s32 %v2568
      %v2570 = vcvt.f32.s32 %v2564
      %v2571 = vshll.u32 %v2570, 16
      %v2572 = vadd.s32 %v2571, %v2569
      %v2573 = vand.u32 %v2453, 65535
      %v2574 = vshra.s32 %v2453, 16
      %v2575 = vcvt.s32.f32 %v2573
      %v2576 = vcvt.s32.f32 %v2574
      %2577 = vmin.xlane.f32.xlu0 %v2576
      %v2578 = vpop.xlane.xlu0 %2577
      %vm2579 = vcmp.eq.f32.partialorder %v2576, %v2578
      %v2580 = vsel %vm2579, %v2575, inf
      %2581 = vmin.xlane.f32.xlu0 %v2580
      %v2582 = vpop.xlane.xlu0 %2581
      %v2583 = vcvt.f32.s32 %v2582
      %v2584 = vcvt.f32.s32 %v2578
      %v2585 = vshll.u32 %v2584, 16
      %v2586 = vadd.s32 %v2585, %v2583
      %v2587 = vand.u32 %v2454, 65535
      %v2588 = vshra.s32 %v2454, 16
      %v2589 = vcvt.s32.f32 %v2587
      %v2590 = vcvt.s32.f32 %v2588
      %2591 = vmin.xlane.f32.xlu0 %v2590
      %v2592 = vpop.xlane.xlu0 %2591
      %vm2593 = vcmp.eq.f32.partialorder %v2590, %v2592
      %v2594 = vsel %vm2593, %v2589, inf
      %2595 = vmin.xlane.f32.xlu0 %v2594
      %v2596 = vpop.xlane.xlu0 %2595
      %v2597 = vcvt.f32.s32 %v2596
      %v2598 = vcvt.f32.s32 %v2592
      %v2599 = vshll.u32 %v2598, 16
      %v2600 = vadd.s32 %v2599, %v2597
      %v2601 = vand.u32 %v2455, 65535
      %v2602 = vshra.s32 %v2455, 16
      %v2603 = vcvt.s32.f32 %v2601
      %v2604 = vcvt.s32.f32 %v2602
      %2605 = vmin.xlane.f32.xlu0 %v2604
      %v2606 = vpop.xlane.xlu0 %2605
      %vm2607 = vcmp.eq.f32.partialorder %v2604, %v2606
      %v2608 = vsel %vm2607, %v2603, inf
      %2609 = vmin.xlane.f32.xlu0 %v2608
      %v2610 = vpop.xlane.xlu0 %2609
      %v2611 = vcvt.f32.s32 %v2610
      %v2612 = vcvt.f32.s32 %v2606
      %v2613 = vshll.u32 %v2612, 16
      %v2614 = vadd.s32 %v2613, %v2611
      %v2615 = vand.u32 %v2456, 65535
      %v2616 = vshra.s32 %v2456, 16
      %v2617 = vcvt.s32.f32 %v2615
      %v2618 = vcvt.s32.f32 %v2616
      %2619 = vmin.xlane.f32.xlu0 %v2618
      %v2620 = vpop.xlane.xlu0 %2619
      %vm2621 = vcmp.eq.f32.partialorder %v2618, %v2620
      %v2622 = vsel %vm2621, %v2617, inf
      %2623 = vmin.xlane.f32.xlu0 %v2622
      %v2624 = vpop.xlane.xlu0 %2623
      %v2625 = vcvt.f32.s32 %v2624
      %v2626 = vcvt.f32.s32 %v2620
      %v2627 = vshll.u32 %v2626, 16
      %v2628 = vadd.s32 %v2627, %v2625
      %v2629 = vand.u32 %v2457, 65535
      %v2630 = vshra.s32 %v2457, 16
      %v2631 = vcvt.s32.f32 %v2629
      %v2632 = vcvt.s32.f32 %v2630
      %2633 = vmin.xlane.f32.xlu0 %v2632
      %v2634 = vpop.xlane.xlu0 %2633
      %vm2635 = vcmp.eq.f32.partialorder %v2632, %v2634
      %v2636 = vsel %vm2635, %v2631, inf
      %2637 = vmin.xlane.f32.xlu0 %v2636
      %v2638 = vpop.xlane.xlu0 %2637
      %v2639 = vcvt.f32.s32 %v2638
      %v2640 = vcvt.f32.s32 %v2634
      %v2641 = vshll.u32 %v2640, 16
      %v2642 = vadd.s32 %v2641, %v2639
      %v2643 = vand.u32 %v2458, 65535
      %v2644 = vshra.s32 %v2458, 16
      %v2645 = vcvt.s32.f32 %v2643
      %v2646 = vcvt.s32.f32 %v2644
      %2647 = vmin.xlane.f32.xlu0 %v2646
      %v2648 = vpop.xlane.xlu0 %2647
      %vm2649 = vcmp.eq.f32.partialorder %v2646, %v2648
      %v2650 = vsel %vm2649, %v2645, inf
      %2651 = vmin.xlane.f32.xlu0 %v2650
      %v2652 = vpop.xlane.xlu0 %2651
      %v2653 = vcvt.f32.s32 %v2652
      %v2654 = vcvt.f32.s32 %v2648
      %v2655 = vshll.u32 %v2654, 16
      %v2656 = vadd.s32 %v2655, %v2653
      %v2657 = vand.u32 %v2459, 65535
      %v2658 = vshra.s32 %v2459, 16
      %v2659 = vcvt.s32.f32 %v2657
      %v2660 = vcvt.s32.f32 %v2658
      %2661 = vmin.xlane.f32.xlu0 %v2660
      %v2662 = vpop.xlane.xlu0 %2661
      %vm2663 = vcmp.eq.f32.partialorder %v2660, %v2662
      %v2664 = vsel %vm2663, %v2659, inf
      %2665 = vmin.xlane.f32.xlu0 %v2664
      %v2666 = vpop.xlane.xlu0 %2665
      %v2667 = vcvt.f32.s32 %v2666
      %v2668 = vcvt.f32.s32 %v2662
      %v2669 = vshll.u32 %v2668, 16
      %v2670 = vadd.s32 %v2669, %v2667
      %v2671 = vand.u32 %v2460, 65535
      %v2672 = vshra.s32 %v2460, 16
      %v2673 = vcvt.s32.f32 %v2671
      %v2674 = vcvt.s32.f32 %v2672
      %2675 = vmin.xlane.f32.xlu0 %v2674
      %v2676 = vpop.xlane.xlu0 %2675
      %vm2677 = vcmp.eq.f32.partialorder %v2674, %v2676
      %v2678 = vsel %vm2677, %v2673, inf
      %2679 = vmin.xlane.f32.xlu0 %v2678
      %v2680 = vpop.xlane.xlu0 %2679
      %v2681 = vcvt.f32.s32 %v2680
      %v2682 = vcvt.f32.s32 %v2676
      %v2683 = vshll.u32 %v2682, 16
      %v2684 = vadd.s32 %v2683, %v2681
      %vm2685 = vcmp.eq.f32.partialorder %v2317, %v2413
      %vm2686 = vcmp.eq.f32.partialorder %v2318, %v2414
      %vm2687 = vcmp.eq.f32.partialorder %v2319, %v2415
      %vm2688 = vcmp.eq.f32.partialorder %v2320, %v2416
      %vm2689 = vcmp.eq.f32.partialorder %v2321, %v2417
      %vm2690 = vcmp.eq.f32.partialorder %v2322, %v2418
      %vm2691 = vcmp.eq.f32.partialorder %v2323, %v2419
      %vm2692 = vcmp.eq.f32.partialorder %v2324, %v2420
      %vm2693 = vcmp.eq.f32.partialorder %v2325, %v2421
      %vm2694 = vcmp.eq.f32.partialorder %v2326, %v2422
      %vm2695 = vcmp.eq.f32.partialorder %v2327, %v2423
      %vm2696 = vcmp.eq.f32.partialorder %v2328, %v2424
      %vm2697 = vcmp.eq.f32.partialorder %v2329, %v2425
      %vm2698 = vcmp.eq.f32.partialorder %v2330, %v2426
      %vm2699 = vcmp.eq.f32.partialorder %v2331, %v2427
      %vm2700 = vcmp.eq.f32.partialorder %v2332, %v2428
      %v2701 = vsel %vm2685, %v2333, 1073741824
      %v2702 = vsel %vm2686, %v2334, 1073741824
      %v2703 = vsel %vm2687, %v2335, 1073741824
      %v2704 = vsel %vm2688, %v2336, 1073741824
      %v2705 = vsel %vm2689, %v2337, 1073741824
      %v2706 = vsel %vm2690, %v2338, 1073741824
      %v2707 = vsel %vm2691, %v2339, 1073741824
      %v2708 = vsel %vm2692, %v2340, 1073741824
      %v2709 = vsel %vm2693, %v2341, 1073741824
      %v2710 = vsel %vm2694, %v2342, 1073741824
      %v2711 = vsel %vm2695, %v2343, 1073741824
      %v2712 = vsel %vm2696, %v2344, 1073741824
      %v2713 = vsel %vm2697, %v2345, 1073741824
      %v2714 = vsel %vm2698, %v2346, 1073741824
      %v2715 = vsel %vm2699, %v2347, 1073741824
      %v2716 = vsel %vm2700, %v2348, 1073741824
      %v2717 = vand.u32 %v2701, 65535
      %v2718 = vshra.s32 %v2701, 16
      %v2719 = vcvt.s32.f32 %v2717
      %v2720 = vcvt.s32.f32 %v2718
      %2721 = vmin.xlane.f32.xlu0 %v2720
      %v2722 = vpop.xlane.xlu0 %2721
      %vm2723 = vcmp.eq.f32.partialorder %v2720, %v2722
      %v2724 = vsel %vm2723, %v2719, inf
      %2725 = vmin.xlane.f32.xlu0 %v2724
      %v2726 = vpop.xlane.xlu0 %2725
      %v2727 = vcvt.f32.s32 %v2726
      %v2728 = vcvt.f32.s32 %v2722
      %v2729 = vshll.u32 %v2728, 16
      %v2730 = vadd.s32 %v2729, %v2727
      %v2731 = vand.u32 %v2702, 65535
      %v2732 = vshra.s32 %v2702, 16
      %v2733 = vcvt.s32.f32 %v2731
      %v2734 = vcvt.s32.f32 %v2732
      %2735 = vmin.xlane.f32.xlu0 %v2734
      %v2736 = vpop.xlane.xlu0 %2735
      %vm2737 = vcmp.eq.f32.partialorder %v2734, %v2736
      %v2738 = vsel %vm2737, %v2733, inf
      %2739 = vmin.xlane.f32.xlu0 %v2738
      %v2740 = vpop.xlane.xlu0 %2739
      %v2741 = vcvt.f32.s32 %v2740
      %v2742 = vcvt.f32.s32 %v2736
      %v2743 = vshll.u32 %v2742, 16
      %v2744 = vadd.s32 %v2743, %v2741
      %v2745 = vand.u32 %v2703, 65535
      %v2746 = vshra.s32 %v2703, 16
      %v2747 = vcvt.s32.f32 %v2745
      %v2748 = vcvt.s32.f32 %v2746
      %2749 = vmin.xlane.f32.xlu0 %v2748
      %v2750 = vpop.xlane.xlu0 %2749
      %vm2751 = vcmp.eq.f32.partialorder %v2748, %v2750
      %v2752 = vsel %vm2751, %v2747, inf
      %2753 = vmin.xlane.f32.xlu0 %v2752
      %v2754 = vpop.xlane.xlu0 %2753
      %v2755 = vcvt.f32.s32 %v2754
      %v2756 = vcvt.f32.s32 %v2750
      %v2757 = vshll.u32 %v2756, 16
      %v2758 = vadd.s32 %v2757, %v2755
      %v2759 = vand.u32 %v2704, 65535
      %v2760 = vshra.s32 %v2704, 16
      %v2761 = vcvt.s32.f32 %v2759
      %v2762 = vcvt.s32.f32 %v2760
      %2763 = vmin.xlane.f32.xlu0 %v2762
      %v2764 = vpop.xlane.xlu0 %2763
      %vm2765 = vcmp.eq.f32.partialorder %v2762, %v2764
      %v2766 = vsel %vm2765, %v2761, inf
      %2767 = vmin.xlane.f32.xlu0 %v2766
      %v2768 = vpop.xlane.xlu0 %2767
      %v2769 = vcvt.f32.s32 %v2768
      %v2770 = vcvt.f32.s32 %v2764
      %v2771 = vshll.u32 %v2770, 16
      %v2772 = vadd.s32 %v2771, %v2769
      %v2773 = vand.u32 %v2705, 65535
      %v2774 = vshra.s32 %v2705, 16
      %v2775 = vcvt.s32.f32 %v2773
      %v2776 = vcvt.s32.f32 %v2774
      %2777 = vmin.xlane.f32.xlu0 %v2776
      %v2778 = vpop.xlane.xlu0 %2777
      %vm2779 = vcmp.eq.f32.partialorder %v2776, %v2778
      %v2780 = vsel %vm2779, %v2775, inf
      %2781 = vmin.xlane.f32.xlu0 %v2780
      %v2782 = vpop.xlane.xlu0 %2781
      %v2783 = vcvt.f32.s32 %v2782
      %v2784 = vcvt.f32.s32 %v2778
      %v2785 = vshll.u32 %v2784, 16
      %v2786 = vadd.s32 %v2785, %v2783
      %v2787 = vand.u32 %v2706, 65535
      %v2788 = vshra.s32 %v2706, 16
      %v2789 = vcvt.s32.f32 %v2787
      %v2790 = vcvt.s32.f32 %v2788
      %2791 = vmin.xlane.f32.xlu0 %v2790
      %v2792 = vpop.xlane.xlu0 %2791
      %vm2793 = vcmp.eq.f32.partialorder %v2790, %v2792
      %v2794 = vsel %vm2793, %v2789, inf
      %2795 = vmin.xlane.f32.xlu0 %v2794
      %v2796 = vpop.xlane.xlu0 %2795
      %v2797 = vcvt.f32.s32 %v2796
      %v2798 = vcvt.f32.s32 %v2792
      %v2799 = vshll.u32 %v2798, 16
      %v2800 = vadd.s32 %v2799, %v2797
      %v2801 = vand.u32 %v2707, 65535
      %v2802 = vshra.s32 %v2707, 16
      %v2803 = vcvt.s32.f32 %v2801
      %v2804 = vcvt.s32.f32 %v2802
      %2805 = vmin.xlane.f32.xlu0 %v2804
      %v2806 = vpop.xlane.xlu0 %2805
      %vm2807 = vcmp.eq.f32.partialorder %v2804, %v2806
      %v2808 = vsel %vm2807, %v2803, inf
      %2809 = vmin.xlane.f32.xlu0 %v2808
      %v2810 = vpop.xlane.xlu0 %2809
      %v2811 = vcvt.f32.s32 %v2810
      %v2812 = vcvt.f32.s32 %v2806
      %v2813 = vshll.u32 %v2812, 16
      %v2814 = vadd.s32 %v2813, %v2811
      %v2815 = vand.u32 %v2708, 65535
      %v2816 = vshra.s32 %v2708, 16
      %v2817 = vcvt.s32.f32 %v2815
      %v2818 = vcvt.s32.f32 %v2816
      %2819 = vmin.xlane.f32.xlu0 %v2818
      %v2820 = vpop.xlane.xlu0 %2819
      %vm2821 = vcmp.eq.f32.partialorder %v2818, %v2820
      %v2822 = vsel %vm2821, %v2817, inf
      %2823 = vmin.xlane.f32.xlu0 %v2822
      %v2824 = vpop.xlane.xlu0 %2823
      %v2825 = vcvt.f32.s32 %v2824
      %v2826 = vcvt.f32.s32 %v2820
      %v2827 = vshll.u32 %v2826, 16
      %v2828 = vadd.s32 %v2827, %v2825
      %v2829 = vand.u32 %v2709, 65535
      %v2830 = vshra.s32 %v2709, 16
      %v2831 = vcvt.s32.f32 %v2829
      %v2832 = vcvt.s32.f32 %v2830
      %2833 = vmin.xlane.f32.xlu0 %v2832
      %v2834 = vpop.xlane.xlu0 %2833
      %vm2835 = vcmp.eq.f32.partialorder %v2832, %v2834
      %v2836 = vsel %vm2835, %v2831, inf
      %2837 = vmin.xlane.f32.xlu0 %v2836
      %v2838 = vpop.xlane.xlu0 %2837
      %v2839 = vcvt.f32.s32 %v2838
      %v2840 = vcvt.f32.s32 %v2834
      %v2841 = vshll.u32 %v2840, 16
      %v2842 = vadd.s32 %v2841, %v2839
      %v2843 = vand.u32 %v2710, 65535
      %v2844 = vshra.s32 %v2710, 16
      %v2845 = vcvt.s32.f32 %v2843
      %v2846 = vcvt.s32.f32 %v2844
      %2847 = vmin.xlane.f32.xlu0 %v2846
      %v2848 = vpop.xlane.xlu0 %2847
      %vm2849 = vcmp.eq.f32.partialorder %v2846, %v2848
      %v2850 = vsel %vm2849, %v2845, inf
      %2851 = vmin.xlane.f32.xlu0 %v2850
      %v2852 = vpop.xlane.xlu0 %2851
      %v2853 = vcvt.f32.s32 %v2852
      %v2854 = vcvt.f32.s32 %v2848
      %v2855 = vshll.u32 %v2854, 16
      %v2856 = vadd.s32 %v2855, %v2853
      %v2857 = vand.u32 %v2711, 65535
      %v2858 = vshra.s32 %v2711, 16
      %v2859 = vcvt.s32.f32 %v2857
      %v2860 = vcvt.s32.f32 %v2858
      %2861 = vmin.xlane.f32.xlu0 %v2860
      %v2862 = vpop.xlane.xlu0 %2861
      %vm2863 = vcmp.eq.f32.partialorder %v2860, %v2862
      %v2864 = vsel %vm2863, %v2859, inf
      %2865 = vmin.xlane.f32.xlu0 %v2864
      %v2866 = vpop.xlane.xlu0 %2865
      %v2867 = vcvt.f32.s32 %v2866
      %v2868 = vcvt.f32.s32 %v2862
      %v2869 = vshll.u32 %v2868, 16
      %v2870 = vadd.s32 %v2869, %v2867
      %v2871 = vand.u32 %v2712, 65535
      %v2872 = vshra.s32 %v2712, 16
      %v2873 = vcvt.s32.f32 %v2871
      %v2874 = vcvt.s32.f32 %v2872
      %2875 = vmin.xlane.f32.xlu0 %v2874
      %v2876 = vpop.xlane.xlu0 %2875
      %vm2877 = vcmp.eq.f32.partialorder %v2874, %v2876
      %v2878 = vsel %vm2877, %v2873, inf
      %2879 = vmin.xlane.f32.xlu0 %v2878
      %v2880 = vpop.xlane.xlu0 %2879
      %v2881 = vcvt.f32.s32 %v2880
      %v2882 = vcvt.f32.s32 %v2876
      %v2883 = vshll.u32 %v2882, 16
      %v2884 = vadd.s32 %v2883, %v2881
      %v2885 = vand.u32 %v2713, 65535
      %v2886 = vshra.s32 %v2713, 16
      %v2887 = vcvt.s32.f32 %v2885
      %v2888 = vcvt.s32.f32 %v2886
      %2889 = vmin.xlane.f32.xlu0 %v2888
      %v2890 = vpop.xlane.xlu0 %2889
      %vm2891 = vcmp.eq.f32.partialorder %v2888, %v2890
      %v2892 = vsel %vm2891, %v2887, inf
      %2893 = vmin.xlane.f32.xlu0 %v2892
      %v2894 = vpop.xlane.xlu0 %2893
      %v2895 = vcvt.f32.s32 %v2894
      %v2896 = vcvt.f32.s32 %v2890
      %v2897 = vshll.u32 %v2896, 16
      %v2898 = vadd.s32 %v2897, %v2895
      %v2899 = vand.u32 %v2714, 65535
      %v2900 = vshra.s32 %v2714, 16
      %v2901 = vcvt.s32.f32 %v2899
      %v2902 = vcvt.s32.f32 %v2900
      %2903 = vmin.xlane.f32.xlu0 %v2902
      %v2904 = vpop.xlane.xlu0 %2903
      %vm2905 = vcmp.eq.f32.partialorder %v2902, %v2904
      %v2906 = vsel %vm2905, %v2901, inf
      %2907 = vmin.xlane.f32.xlu0 %v2906
      %v2908 = vpop.xlane.xlu0 %2907
      %v2909 = vcvt.f32.s32 %v2908
      %v2910 = vcvt.f32.s32 %v2904
      %v2911 = vshll.u32 %v2910, 16
      %v2912 = vadd.s32 %v2911, %v2909
      %v2913 = vand.u32 %v2715, 65535
      %v2914 = vshra.s32 %v2715, 16
      %v2915 = vcvt.s32.f32 %v2913
      %v2916 = vcvt.s32.f32 %v2914
      %2917 = vmin.xlane.f32.xlu0 %v2916
      %v2918 = vpop.xlane.xlu0 %2917
      %vm2919 = vcmp.eq.f32.partialorder %v2916, %v2918
      %v2920 = vsel %vm2919, %v2915, inf
      %2921 = vmin.xlane.f32.xlu0 %v2920
      %v2922 = vpop.xlane.xlu0 %2921
      %v2923 = vcvt.f32.s32 %v2922
      %v2924 = vcvt.f32.s32 %v2918
      %v2925 = vshll.u32 %v2924, 16
      %v2926 = vadd.s32 %v2925, %v2923
      %v2927 = vand.u32 %v2716, 65535
      %v2928 = vshra.s32 %v2716, 16
      %v2929 = vcvt.s32.f32 %v2927
      %v2930 = vcvt.s32.f32 %v2928
      %2931 = vmin.xlane.f32.xlu0 %v2930
      %v2932 = vpop.xlane.xlu0 %2931
      %vm2933 = vcmp.eq.f32.partialorder %v2930, %v2932
      %v2934 = vsel %vm2933, %v2929, inf
      %2935 = vmin.xlane.f32.xlu0 %v2934
      %v2936 = vpop.xlane.xlu0 %2935
      %v2937 = vcvt.f32.s32 %v2936
      %v2938 = vcvt.f32.s32 %v2932
      %v2939 = vshll.u32 %v2938, 16
      %v2940 = vadd.s32 %v2939, %v2937
      %vm2941 = vcmp.lt.s32.totalorder %v2474, %v2730
      %v2942 = vsel %vm2941, %v2474, %v2730
      %vm2943 = vcmp.lt.s32.totalorder %v2488, %v2744
      %v2944 = vsel %vm2943, %v2488, %v2744
      %vm2945 = vcmp.lt.s32.totalorder %v2502, %v2758
      %v2946 = vsel %vm2945, %v2502, %v2758
      %vm2947 = vcmp.lt.s32.totalorder %v2516, %v2772
      %v2948 = vsel %vm2947, %v2516, %v2772
      %vm2949 = vcmp.lt.s32.totalorder %v2530, %v2786
      %v2950 = vsel %vm2949, %v2530, %v2786
      %vm2951 = vcmp.lt.s32.totalorder %v2544, %v2800
      %v2952 = vsel %vm2951, %v2544, %v2800
      %vm2953 = vcmp.lt.s32.totalorder %v2558, %v2814
      %v2954 = vsel %vm2953, %v2558, %v2814
      %vm2955 = vcmp.lt.s32.totalorder %v2572, %v2828
      %v2956 = vsel %vm2955, %v2572, %v2828
      %vm2957 = vcmp.lt.s32.totalorder %v2586, %v2842
      %v2958 = vsel %vm2957, %v2586, %v2842
      %vm2959 = vcmp.lt.s32.totalorder %v2600, %v2856
      %v2960 = vsel %vm2959, %v2600, %v2856
      %vm2961 = vcmp.lt.s32.totalorder %v2614, %v2870
      %v2962 = vsel %vm2961, %v2614, %v2870
      %vm2963 = vcmp.lt.s32.totalorder %v2628, %v2884
      %v2964 = vsel %vm2963, %v2628, %v2884
      %vm2965 = vcmp.lt.s32.totalorder %v2642, %v2898
      %v2966 = vsel %vm2965, %v2642, %v2898
      %vm2967 = vcmp.lt.s32.totalorder %v2656, %v2912
      %v2968 = vsel %vm2967, %v2656, %v2912
      %vm2969 = vcmp.lt.s32.totalorder %v2670, %v2926
      %v2970 = vsel %vm2969, %v2670, %v2926
      %vm2971 = vcmp.lt.s32.totalorder %v2684, %v2940
      %v2972 = vsel %vm2971, %v2684, %v2940
      %vm2973 = vcmask 23568
      %2974 = vst.msk [vmem:[#allocation5] sm:$0xff] %vm2973, %v2413
      %2975 = vst.msk [vmem:[#allocation5 + $0x8] sm:$0xff] %vm2973, %v2414
      %2976 = vst.msk [vmem:[#allocation5 + $0x10] sm:$0xff] %vm2973, %v2415
      %2977 = vst.msk [vmem:[#allocation5 + $0x18] sm:$0xff] %vm2973, %v2416
      %2978 = vst.msk [vmem:[#allocation5 + $0x20] sm:$0xff] %vm2973, %v2417
      %2979 = vst.msk [vmem:[#allocation5 + $0x28] sm:$0xff] %vm2973, %v2418
      %2980 = vst.msk [vmem:[#allocation5 + $0x30] sm:$0xff] %vm2973, %v2419
      %2981 = vst.msk [vmem:[#allocation5 + $0x38] sm:$0xff] %vm2973, %v2420
      %2982 = vst.msk [vmem:[#allocation5 + $0x40] sm:$0xff] %vm2973, %v2421
      %2983 = vst.msk [vmem:[#allocation5 + $0x48] sm:$0xff] %vm2973, %v2422
      %2984 = vst.msk [vmem:[#allocation5 + $0x50] sm:$0xff] %vm2973, %v2423
      %2985 = vst.msk [vmem:[#allocation5 + $0x58] sm:$0xff] %vm2973, %v2424
      %2986 = vst.msk [vmem:[#allocation5 + $0x60] sm:$0xff] %vm2973, %v2425
      %2987 = vst.msk [vmem:[#allocation5 + $0x68] sm:$0xff] %vm2973, %v2426
      %2988 = vst.msk [vmem:[#allocation5 + $0x70] sm:$0xff] %vm2973, %v2427
      %2989 = vst.msk [vmem:[#allocation5 + $0x78] sm:$0xff] %vm2973, %v2428
      %2990 = vst.msk [vmem:[#allocation6] sm:$0xff] %vm2973, %v2942
      %2991 = vst.msk [vmem:[#allocation6 + $0x8] sm:$0xff] %vm2973, %v2944
      %2992 = vst.msk [vmem:[#allocation6 + $0x10] sm:$0xff] %vm2973, %v2946
      %2993 = vst.msk [vmem:[#allocation6 + $0x18] sm:$0xff] %vm2973, %v2948
      %2994 = vst.msk [vmem:[#allocation6 + $0x20] sm:$0xff] %vm2973, %v2950
      %2995 = vst.msk [vmem:[#allocation6 + $0x28] sm:$0xff] %vm2973, %v2952
      %2996 = vst.msk [vmem:[#allocation6 + $0x30] sm:$0xff] %vm2973, %v2954
      %2997 = vst.msk [vmem:[#allocation6 + $0x38] sm:$0xff] %vm2973, %v2956
      %2998 = vst.msk [vmem:[#allocation6 + $0x40] sm:$0xff] %vm2973, %v2958
      %2999 = vst.msk [vmem:[#allocation6 + $0x48] sm:$0xff] %vm2973, %v2960
      %3000 = vst.msk [vmem:[#allocation6 + $0x50] sm:$0xff] %vm2973, %v2962
      %3001 = vst.msk [vmem:[#allocation6 + $0x58] sm:$0xff] %vm2973, %v2964
      %3002 = vst.msk [vmem:[#allocation6 + $0x60] sm:$0xff] %vm2973, %v2966
      %3003 = vst.msk [vmem:[#allocation6 + $0x68] sm:$0xff] %vm2973, %v2968
      %3004 = vst.msk [vmem:[#allocation6 + $0x70] sm:$0xff] %vm2973, %v2970
      %3005 = vst.msk [vmem:[#allocation6 + $0x78] sm:$0xff] %vm2973, %v2972
      %vm3006 = vcmp.eq.s32.totalorder %v663, %v2942
      %vm3007 = vcmp.eq.s32.totalorder %v663, %v2944
      %vm3008 = vcmp.eq.s32.totalorder %v663, %v2946
      %vm3009 = vcmp.eq.s32.totalorder %v663, %v2948
      %vm3010 = vcmp.eq.s32.totalorder %v663, %v2950
      %vm3011 = vcmp.eq.s32.totalorder %v663, %v2952
      %vm3012 = vcmp.eq.s32.totalorder %v663, %v2954
      %vm3013 = vcmp.eq.s32.totalorder %v663, %v2956
      %vm3014 = vcmp.eq.s32.totalorder %v663, %v2958
      %vm3015 = vcmp.eq.s32.totalorder %v663, %v2960
      %vm3016 = vcmp.eq.s32.totalorder %v663, %v2962
      %vm3017 = vcmp.eq.s32.totalorder %v663, %v2964
      %vm3018 = vcmp.eq.s32.totalorder %v663, %v2966
      %vm3019 = vcmp.eq.s32.totalorder %v663, %v2968
      %vm3020 = vcmp.eq.s32.totalorder %v663, %v2970
      %vm3021 = vcmp.eq.s32.totalorder %v663, %v2972
      %v3022 = vsel %vm3006, -inf, %v2301
      %v3023 = vsel %vm3007, -inf, %v2302
      %v3024 = vsel %vm3008, -inf, %v2303
      %v3025 = vsel %vm3009, -inf, %v2304
      %v3026 = vsel %vm3010, -inf, %v2305
      %v3027 = vsel %vm3011, -inf, %v2306
      %v3028 = vsel %vm3012, -inf, %v2307
      %v3029 = vsel %vm3013, -inf, %v2308
      %v3030 = vsel %vm3014, -inf, %v2309
      %v3031 = vsel %vm3015, -inf, %v2310
      %v3032 = vsel %vm3016, -inf, %v2311
      %v3033 = vsel %vm3017, -inf, %v2312
      %v3034 = vsel %vm3018, -inf, %v2313
      %v3035 = vsel %vm3019, -inf, %v2314
      %v3036 = vsel %vm3020, -inf, %v2315
      %v3037 = vsel %vm3021, -inf, %v2316
      %3038 = vst [vmem:[#allocation2] sm:$0xff] %v3022
      %3039 = vst [vmem:[#allocation2 + $0x8] sm:$0xff] %v3023
      %3040 = vst [vmem:[#allocation2 + $0x10] sm:$0xff] %v3024
      %3041 = vst [vmem:[#allocation2 + $0x18] sm:$0xff] %v3025
      %3042 = vst [vmem:[#allocation2 + $0x20] sm:$0xff] %v3026
      %3043 = vst [vmem:[#allocation2 + $0x28] sm:$0xff] %v3027
      %3044 = vst [vmem:[#allocation2 + $0x30] sm:$0xff] %v3028
      %3045 = vst [vmem:[#allocation2 + $0x38] sm:$0xff] %v3029
      %3046 = vst [vmem:[#allocation2 + $0x40] sm:$0xff] %v3030
      %3047 = vst [vmem:[#allocation2 + $0x48] sm:$0xff] %v3031
      %3048 = vst [vmem:[#allocation2 + $0x50] sm:$0xff] %v3032
      %3049 = vst [vmem:[#allocation2 + $0x58] sm:$0xff] %v3033
      %3050 = vst [vmem:[#allocation2 + $0x60] sm:$0xff] %v3034
      %3051 = vst [vmem:[#allocation2 + $0x68] sm:$0xff] %v3035
      %3052 = vst [vmem:[#allocation2 + $0x70] sm:$0xff] %v3036
      %3053 = vst [vmem:[#allocation2 + $0x78] sm:$0xff] %v3037
      %vm3054 = vcmp.eq.s32.totalorder %v2333, %v2942
      %vm3055 = vcmp.eq.s32.totalorder %v2334, %v2944
      %vm3056 = vcmp.eq.s32.totalorder %v2335, %v2946
      %vm3057 = vcmp.eq.s32.totalorder %v2336, %v2948
      %vm3058 = vcmp.eq.s32.totalorder %v2337, %v2950
      %vm3059 = vcmp.eq.s32.totalorder %v2338, %v2952
      %vm3060 = vcmp.eq.s32.totalorder %v2339, %v2954
      %vm3061 = vcmp.eq.s32.totalorder %v2340, %v2956
      %vm3062 = vcmp.eq.s32.totalorder %v2341, %v2958
      %vm3063 = vcmp.eq.s32.totalorder %v2342, %v2960
      %vm3064 = vcmp.eq.s32.totalorder %v2343, %v2962
      %vm3065 = vcmp.eq.s32.totalorder %v2344, %v2964
      %vm3066 = vcmp.eq.s32.totalorder %v2345, %v2966
      %vm3067 = vcmp.eq.s32.totalorder %v2346, %v2968
      %vm3068 = vcmp.eq.s32.totalorder %v2347, %v2970
      %vm3069 = vcmp.eq.s32.totalorder %v2348, %v2972
      %v3070 = vsel %vm3054, -inf, %v2317
      %v3071 = vsel %vm3055, -inf, %v2318
      %v3072 = vsel %vm3056, -inf, %v2319
      %v3073 = vsel %vm3057, -inf, %v2320
      %v3074 = vsel %vm3058, -inf, %v2321
      %v3075 = vsel %vm3059, -inf, %v2322
      %v3076 = vsel %vm3060, -inf, %v2323
      %v3077 = vsel %vm3061, -inf, %v2324
      %v3078 = vsel %vm3062, -inf, %v2325
      %v3079 = vsel %vm3063, -inf, %v2326
      %v3080 = vsel %vm3064, -inf, %v2327
      %v3081 = vsel %vm3065, -inf, %v2328
      %v3082 = vsel %vm3066, -inf, %v2329
      %v3083 = vsel %vm3067, -inf, %v2330
      %v3084 = vsel %vm3068, -inf, %v2331
      %v3085 = vsel %vm3069, -inf, %v2332
      %3086 = vst [vmem:[#allocation3] sm:$0xff] %v3070
      %3087 = vst [vmem:[#allocation3 + $0x8] sm:$0xff] %v3071
      %3088 = vst [vmem:[#allocation3 + $0x10] sm:$0xff] %v3072
      %3089 = vst [vmem:[#allocation3 + $0x18] sm:$0xff] %v3073
      %3090 = vst [vmem:[#allocation3 + $0x20] sm:$0xff] %v3074
      %3091 = vst [vmem:[#allocation3 + $0x28] sm:$0xff] %v3075
      %3092 = vst [vmem:[#allocation3 + $0x30] sm:$0xff] %v3076
      %3093 = vst [vmem:[#allocation3 + $0x38] sm:$0xff] %v3077
      %3094 = vst [vmem:[#allocation3 + $0x40] sm:$0xff] %v3078
      %3095 = vst [vmem:[#allocation3 + $0x48] sm:$0xff] %v3079
      %3096 = vst [vmem:[#allocation3 + $0x50] sm:$0xff] %v3080
      %3097 = vst [vmem:[#allocation3 + $0x58] sm:$0xff] %v3081
      %3098 = vst [vmem:[#allocation3 + $0x60] sm:$0xff] %v3082
      %3099 = vst [vmem:[#allocation3 + $0x68] sm:$0xff] %v3083
      %3100 = vst [vmem:[#allocation3 + $0x70] sm:$0xff] %v3084
      %3101 = vst [vmem:[#allocation3 + $0x78] sm:$0xff] %v3085
      %v3102 = vld [vmem:[#allocation2] sm:$0xff]
      %v3103 = vld [vmem:[#allocation2 + $0x8] sm:$0xff]
      %v3104 = vld [vmem:[#allocation2 + $0x10] sm:$0xff]
      %v3105 = vld [vmem:[#allocation2 + $0x18] sm:$0xff]
      %v3106 = vld [vmem:[#allocation2 + $0x20] sm:$0xff]
      %v3107 = vld [vmem:[#allocation2 + $0x28] sm:$0xff]
      %v3108 = vld [vmem:[#allocation2 + $0x30] sm:$0xff]
      %v3109 = vld [vmem:[#allocation2 + $0x38] sm:$0xff]
      %v3110 = vld [vmem:[#allocation2 + $0x40] sm:$0xff]
      %v3111 = vld [vmem:[#allocation2 + $0x48] sm:$0xff]
      %v3112 = vld [vmem:[#allocation2 + $0x50] sm:$0xff]
      %v3113 = vld [vmem:[#allocation2 + $0x58] sm:$0xff]
      %v3114 = vld [vmem:[#allocation2 + $0x60] sm:$0xff]
      %v3115 = vld [vmem:[#allocation2 + $0x68] sm:$0xff]
      %v3116 = vld [vmem:[#allocation2 + $0x70] sm:$0xff]
      %v3117 = vld [vmem:[#allocation2 + $0x78] sm:$0xff]
      %v3118 = vld [vmem:[#allocation3] sm:$0xff]
      %v3119 = vld [vmem:[#allocation3 + $0x8] sm:$0xff]
      %v3120 = vld [vmem:[#allocation3 + $0x10] sm:$0xff]
      %v3121 = vld [vmem:[#allocation3 + $0x18] sm:$0xff]
      %v3122 = vld [vmem:[#allocation3 + $0x20] sm:$0xff]
      %v3123 = vld [vmem:[#allocation3 + $0x28] sm:$0xff]
      %v3124 = vld [vmem:[#allocation3 + $0x30] sm:$0xff]
      %v3125 = vld [vmem:[#allocation3 + $0x38] sm:$0xff]
      %v3126 = vld [vmem:[#allocation3 + $0x40] sm:$0xff]
      %v3127 = vld [vmem:[#allocation3 + $0x48] sm:$0xff]
      %v3128 = vld [vmem:[#allocation3 + $0x50] sm:$0xff]
      %v3129 = vld [vmem:[#allocation3 + $0x58] sm:$0xff]
      %v3130 = vld [vmem:[#allocation3 + $0x60] sm:$0xff]
      %v3131 = vld [vmem:[#allocation3 + $0x68] sm:$0xff]
      %v3132 = vld [vmem:[#allocation3 + $0x70] sm:$0xff]
      %v3133 = vld [vmem:[#allocation3 + $0x78] sm:$0xff]
      %v3134 = vld [vmem:[#allocation4] sm:$0xff]
      %v3135 = vld [vmem:[#allocation4 + $0x8] sm:$0xff]
      %v3136 = vld [vmem:[#allocation4 + $0x10] sm:$0xff]
      %v3137 = vld [vmem:[#allocation4 + $0x18] sm:$0xff]
      %v3138 = vld [vmem:[#allocation4 + $0x20] sm:$0xff]
      %v3139 = vld [vmem:[#allocation4 + $0x28] sm:$0xff]
      %v3140 = vld [vmem:[#allocation4 + $0x30] sm:$0xff]
      %v3141 = vld [vmem:[#allocation4 + $0x38] sm:$0xff]
      %v3142 = vld [vmem:[#allocation4 + $0x40] sm:$0xff]
      %v3143 = vld [vmem:[#allocation4 + $0x48] sm:$0xff]
      %v3144 = vld [vmem:[#allocation4 + $0x50] sm:$0xff]
      %v3145 = vld [vmem:[#allocation4 + $0x58] sm:$0xff]
      %v3146 = vld [vmem:[#allocation4 + $0x60] sm:$0xff]
      %v3147 = vld [vmem:[#allocation4 + $0x68] sm:$0xff]
      %v3148 = vld [vmem:[#allocation4 + $0x70] sm:$0xff]
      %v3149 = vld [vmem:[#allocation4 + $0x78] sm:$0xff]
      %3150 = vmax.xlane.f32.xlu0 %v3102
      %v3151 = vpop.xlane.xlu0 %3150
      %3152 = vmax.xlane.f32.xlu0 %v3103
      %v3153 = vpop.xlane.xlu0 %3152
      %3154 = vmax.xlane.f32.xlu0 %v3104
      %v3155 = vpop.xlane.xlu0 %3154
      %3156 = vmax.xlane.f32.xlu0 %v3105
      %v3157 = vpop.xlane.xlu0 %3156
      %3158 = vmax.xlane.f32.xlu0 %v3106
      %v3159 = vpop.xlane.xlu0 %3158
      %3160 = vmax.xlane.f32.xlu0 %v3107
      %v3161 = vpop.xlane.xlu0 %3160
      %3162 = vmax.xlane.f32.xlu0 %v3108
      %v3163 = vpop.xlane.xlu0 %3162
      %3164 = vmax.xlane.f32.xlu0 %v3109
      %v3165 = vpop.xlane.xlu0 %3164
      %3166 = vmax.xlane.f32.xlu0 %v3110
      %v3167 = vpop.xlane.xlu0 %3166
      %3168 = vmax.xlane.f32.xlu0 %v3111
      %v3169 = vpop.xlane.xlu0 %3168
      %3170 = vmax.xlane.f32.xlu0 %v3112
      %v3171 = vpop.xlane.xlu0 %3170
      %3172 = vmax.xlane.f32.xlu0 %v3113
      %v3173 = vpop.xlane.xlu0 %3172
      %3174 = vmax.xlane.f32.xlu0 %v3114
      %v3175 = vpop.xlane.xlu0 %3174
      %3176 = vmax.xlane.f32.xlu0 %v3115
      %v3177 = vpop.xlane.xlu0 %3176
      %3178 = vmax.xlane.f32.xlu0 %v3116
      %v3179 = vpop.xlane.xlu0 %3178
      %3180 = vmax.xlane.f32.xlu0 %v3117
      %v3181 = vpop.xlane.xlu0 %3180
      %3182 = vmax.xlane.f32.xlu0 %v3118
      %v3183 = vpop.xlane.xlu0 %3182
      %3184 = vmax.xlane.f32.xlu0 %v3119
      %v3185 = vpop.xlane.xlu0 %3184
      %3186 = vmax.xlane.f32.xlu0 %v3120
      %v3187 = vpop.xlane.xlu0 %3186
      %3188 = vmax.xlane.f32.xlu0 %v3121
      %v3189 = vpop.xlane.xlu0 %3188
      %3190 = vmax.xlane.f32.xlu0 %v3122
      %v3191 = vpop.xlane.xlu0 %3190
      %3192 = vmax.xlane.f32.xlu0 %v3123
      %v3193 = vpop.xlane.xlu0 %3192
      %3194 = vmax.xlane.f32.xlu0 %v3124
      %v3195 = vpop.xlane.xlu0 %3194
      %3196 = vmax.xlane.f32.xlu0 %v3125
      %v3197 = vpop.xlane.xlu0 %3196
      %3198 = vmax.xlane.f32.xlu0 %v3126
      %v3199 = vpop.xlane.xlu0 %3198
      %3200 = vmax.xlane.f32.xlu0 %v3127
      %v3201 = vpop.xlane.xlu0 %3200
      %3202 = vmax.xlane.f32.xlu0 %v3128
      %v3203 = vpop.xlane.xlu0 %3202
      %3204 = vmax.xlane.f32.xlu0 %v3129
      %v3205 = vpop.xlane.xlu0 %3204
      %3206 = vmax.xlane.f32.xlu0 %v3130
      %v3207 = vpop.xlane.xlu0 %3206
      %3208 = vmax.xlane.f32.xlu0 %v3131
      %v3209 = vpop.xlane.xlu0 %3208
      %3210 = vmax.xlane.f32.xlu0 %v3132
      %v3211 = vpop.xlane.xlu0 %3210
      %3212 = vmax.xlane.f32.xlu0 %v3133
      %v3213 = vpop.xlane.xlu0 %3212
      %v3214 = vmax.f32 %v3151, %v3183
      %v3215 = vmax.f32 %v3153, %v3185
      %v3216 = vmax.f32 %v3155, %v3187
      %v3217 = vmax.f32 %v3157, %v3189
      %v3218 = vmax.f32 %v3159, %v3191
      %v3219 = vmax.f32 %v3161, %v3193
      %v3220 = vmax.f32 %v3163, %v3195
      %v3221 = vmax.f32 %v3165, %v3197
      %v3222 = vmax.f32 %v3167, %v3199
      %v3223 = vmax.f32 %v3169, %v3201
      %v3224 = vmax.f32 %v3171, %v3203
      %v3225 = vmax.f32 %v3173, %v3205
      %v3226 = vmax.f32 %v3175, %v3207
      %v3227 = vmax.f32 %v3177, %v3209
      %v3228 = vmax.f32 %v3179, %v3211
      %v3229 = vmax.f32 %v3181, %v3213
      %vm3230 = vcmp.eq.f32.partialorder %v3102, %v3214
      %vm3231 = vcmp.eq.f32.partialorder %v3103, %v3215
      %vm3232 = vcmp.eq.f32.partialorder %v3104, %v3216
      %vm3233 = vcmp.eq.f32.partialorder %v3105, %v3217
      %vm3234 = vcmp.eq.f32.partialorder %v3106, %v3218
      %vm3235 = vcmp.eq.f32.partialorder %v3107, %v3219
      %vm3236 = vcmp.eq.f32.partialorder %v3108, %v3220
      %vm3237 = vcmp.eq.f32.partialorder %v3109, %v3221
      %vm3238 = vcmp.eq.f32.partialorder %v3110, %v3222
      %vm3239 = vcmp.eq.f32.partialorder %v3111, %v3223
      %vm3240 = vcmp.eq.f32.partialorder %v3112, %v3224
      %vm3241 = vcmp.eq.f32.partialorder %v3113, %v3225
      %vm3242 = vcmp.eq.f32.partialorder %v3114, %v3226
      %vm3243 = vcmp.eq.f32.partialorder %v3115, %v3227
      %vm3244 = vcmp.eq.f32.partialorder %v3116, %v3228
      %vm3245 = vcmp.eq.f32.partialorder %v3117, %v3229
      %v3246 = vsel %vm3230, %v663, 1073741824
      %v3247 = vsel %vm3231, %v663, 1073741824
      %v3248 = vsel %vm3232, %v663, 1073741824
      %v3249 = vsel %vm3233, %v663, 1073741824
      %v3250 = vsel %vm3234, %v663, 1073741824
      %v3251 = vsel %vm3235, %v663, 1073741824
      %v3252 = vsel %vm3236, %v663, 1073741824
      %v3253 = vsel %vm3237, %v663, 1073741824
      %v3254 = vsel %vm3238, %v663, 1073741824
      %v3255 = vsel %vm3239, %v663, 1073741824
      %v3256 = vsel %vm3240, %v663, 1073741824
      %v3257 = vsel %vm3241, %v663, 1073741824
      %v3258 = vsel %vm3242, %v663, 1073741824
      %v3259 = vsel %vm3243, %v663, 1073741824
      %v3260 = vsel %vm3244, %v663, 1073741824
      %v3261 = vsel %vm3245, %v663, 1073741824
      %v3262 = vand.u32 %v3246, 65535
      %v3263 = vshra.s32 %v3246, 16
      %v3264 = vcvt.s32.f32 %v3262
      %v3265 = vcvt.s32.f32 %v3263
      %3266 = vmin.xlane.f32.xlu0 %v3265
      %v3267 = vpop.xlane.xlu0 %3266
      %vm3268 = vcmp.eq.f32.partialorder %v3265, %v3267
      %v3269 = vsel %vm3268, %v3264, inf
      %3270 = vmin.xlane.f32.xlu0 %v3269
      %v3271 = vpop.xlane.xlu0 %3270
      %v3272 = vcvt.f32.s32 %v3271
      %v3273 = vcvt.f32.s32 %v3267
      %v3274 = vshll.u32 %v3273, 16
      %v3275 = vadd.s32 %v3274, %v3272
      %v3276 = vand.u32 %v3247, 65535
      %v3277 = vshra.s32 %v3247, 16
      %v3278 = vcvt.s32.f32 %v3276
      %v3279 = vcvt.s32.f32 %v3277
      %3280 = vmin.xlane.f32.xlu0 %v3279
      %v3281 = vpop.xlane.xlu0 %3280
      %vm3282 = vcmp.eq.f32.partialorder %v3279, %v3281
      %v3283 = vsel %vm3282, %v3278, inf
      %3284 = vmin.xlane.f32.xlu0 %v3283
      %v3285 = vpop.xlane.xlu0 %3284
      %v3286 = vcvt.f32.s32 %v3285
      %v3287 = vcvt.f32.s32 %v3281
      %v3288 = vshll.u32 %v3287, 16
      %v3289 = vadd.s32 %v3288, %v3286
      %v3290 = vand.u32 %v3248, 65535
      %v3291 = vshra.s32 %v3248, 16
      %v3292 = vcvt.s32.f32 %v3290
      %v3293 = vcvt.s32.f32 %v3291
      %3294 = vmin.xlane.f32.xlu0 %v3293
      %v3295 = vpop.xlane.xlu0 %3294
      %vm3296 = vcmp.eq.f32.partialorder %v3293, %v3295
      %v3297 = vsel %vm3296, %v3292, inf
      %3298 = vmin.xlane.f32.xlu0 %v3297
      %v3299 = vpop.xlane.xlu0 %3298
      %v3300 = vcvt.f32.s32 %v3299
      %v3301 = vcvt.f32.s32 %v3295
      %v3302 = vshll.u32 %v3301, 16
      %v3303 = vadd.s32 %v3302, %v3300
      %v3304 = vand.u32 %v3249, 65535
      %v3305 = vshra.s32 %v3249, 16
      %v3306 = vcvt.s32.f32 %v3304
      %v3307 = vcvt.s32.f32 %v3305
      %3308 = vmin.xlane.f32.xlu0 %v3307
      %v3309 = vpop.xlane.xlu0 %3308
      %vm3310 = vcmp.eq.f32.partialorder %v3307, %v3309
      %v3311 = vsel %vm3310, %v3306, inf
      %3312 = vmin.xlane.f32.xlu0 %v3311
      %v3313 = vpop.xlane.xlu0 %3312
      %v3314 = vcvt.f32.s32 %v3313
      %v3315 = vcvt.f32.s32 %v3309
      %v3316 = vshll.u32 %v3315, 16
      %v3317 = vadd.s32 %v3316, %v3314
      %v3318 = vand.u32 %v3250, 65535
      %v3319 = vshra.s32 %v3250, 16
      %v3320 = vcvt.s32.f32 %v3318
      %v3321 = vcvt.s32.f32 %v3319
      %3322 = vmin.xlane.f32.xlu0 %v3321
      %v3323 = vpop.xlane.xlu0 %3322
      %vm3324 = vcmp.eq.f32.partialorder %v3321, %v3323
      %v3325 = vsel %vm3324, %v3320, inf
      %3326 = vmin.xlane.f32.xlu0 %v3325
      %v3327 = vpop.xlane.xlu0 %3326
      %v3328 = vcvt.f32.s32 %v3327
      %v3329 = vcvt.f32.s32 %v3323
      %v3330 = vshll.u32 %v3329, 16
      %v3331 = vadd.s32 %v3330, %v3328
      %v3332 = vand.u32 %v3251, 65535
      %v3333 = vshra.s32 %v3251, 16
      %v3334 = vcvt.s32.f32 %v3332
      %v3335 = vcvt.s32.f32 %v3333
      %3336 = vmin.xlane.f32.xlu0 %v3335
      %v3337 = vpop.xlane.xlu0 %3336
      %vm3338 = vcmp.eq.f32.partialorder %v3335, %v3337
      %v3339 = vsel %vm3338, %v3334, inf
      %3340 = vmin.xlane.f32.xlu0 %v3339
      %v3341 = vpop.xlane.xlu0 %3340
      %v3342 = vcvt.f32.s32 %v3341
      %v3343 = vcvt.f32.s32 %v3337
      %v3344 = vshll.u32 %v3343, 16
      %v3345 = vadd.s32 %v3344, %v3342
      %v3346 = vand.u32 %v3252, 65535
      %v3347 = vshra.s32 %v3252, 16
      %v3348 = vcvt.s32.f32 %v3346
      %v3349 = vcvt.s32.f32 %v3347
      %3350 = vmin.xlane.f32.xlu0 %v3349
      %v3351 = vpop.xlane.xlu0 %3350
      %vm3352 = vcmp.eq.f32.partialorder %v3349, %v3351
      %v3353 = vsel %vm3352, %v3348, inf
      %3354 = vmin.xlane.f32.xlu0 %v3353
      %v3355 = vpop.xlane.xlu0 %3354
      %v3356 = vcvt.f32.s32 %v3355
      %v3357 = vcvt.f32.s32 %v3351
      %v3358 = vshll.u32 %v3357, 16
      %v3359 = vadd.s32 %v3358, %v3356
      %v3360 = vand.u32 %v3253, 65535
      %v3361 = vshra.s32 %v3253, 16
      %v3362 = vcvt.s32.f32 %v3360
      %v3363 = vcvt.s32.f32 %v3361
      %3364 = vmin.xlane.f32.xlu0 %v3363
      %v3365 = vpop.xlane.xlu0 %3364
      %vm3366 = vcmp.eq.f32.partialorder %v3363, %v3365
      %v3367 = vsel %vm3366, %v3362, inf
      %3368 = vmin.xlane.f32.xlu0 %v3367
      %v3369 = vpop.xlane.xlu0 %3368
      %v3370 = vcvt.f32.s32 %v3369
      %v3371 = vcvt.f32.s32 %v3365
      %v3372 = vshll.u32 %v3371, 16
      %v3373 = vadd.s32 %v3372, %v3370
      %v3374 = vand.u32 %v3254, 65535
      %v3375 = vshra.s32 %v3254, 16
      %v3376 = vcvt.s32.f32 %v3374
      %v3377 = vcvt.s32.f32 %v3375
      %3378 = vmin.xlane.f32.xlu0 %v3377
      %v3379 = vpop.xlane.xlu0 %3378
      %vm3380 = vcmp.eq.f32.partialorder %v3377, %v3379
      %v3381 = vsel %vm3380, %v3376, inf
      %3382 = vmin.xlane.f32.xlu0 %v3381
      %v3383 = vpop.xlane.xlu0 %3382
      %v3384 = vcvt.f32.s32 %v3383
      %v3385 = vcvt.f32.s32 %v3379
      %v3386 = vshll.u32 %v3385, 16
      %v3387 = vadd.s32 %v3386, %v3384
      %v3388 = vand.u32 %v3255, 65535
      %v3389 = vshra.s32 %v3255, 16
      %v3390 = vcvt.s32.f32 %v3388
      %v3391 = vcvt.s32.f32 %v3389
      %3392 = vmin.xlane.f32.xlu0 %v3391
      %v3393 = vpop.xlane.xlu0 %3392
      %vm3394 = vcmp.eq.f32.partialorder %v3391, %v3393
      %v3395 = vsel %vm3394, %v3390, inf
      %3396 = vmin.xlane.f32.xlu0 %v3395
      %v3397 = vpop.xlane.xlu0 %3396
      %v3398 = vcvt.f32.s32 %v3397
      %v3399 = vcvt.f32.s32 %v3393
      %v3400 = vshll.u32 %v3399, 16
      %v3401 = vadd.s32 %v3400, %v3398
      %v3402 = vand.u32 %v3256, 65535
      %v3403 = vshra.s32 %v3256, 16
      %v3404 = vcvt.s32.f32 %v3402
      %v3405 = vcvt.s32.f32 %v3403
      %3406 = vmin.xlane.f32.xlu0 %v3405
      %v3407 = vpop.xlane.xlu0 %3406
      %vm3408 = vcmp.eq.f32.partialorder %v3405, %v3407
      %v3409 = vsel %vm3408, %v3404, inf
      %3410 = vmin.xlane.f32.xlu0 %v3409
      %v3411 = vpop.xlane.xlu0 %3410
      %v3412 = vcvt.f32.s32 %v3411
      %v3413 = vcvt.f32.s32 %v3407
      %v3414 = vshll.u32 %v3413, 16
      %v3415 = vadd.s32 %v3414, %v3412
      %v3416 = vand.u32 %v3257, 65535
      %v3417 = vshra.s32 %v3257, 16
      %v3418 = vcvt.s32.f32 %v3416
      %v3419 = vcvt.s32.f32 %v3417
      %3420 = vmin.xlane.f32.xlu0 %v3419
      %v3421 = vpop.xlane.xlu0 %3420
      %vm3422 = vcmp.eq.f32.partialorder %v3419, %v3421
      %v3423 = vsel %vm3422, %v3418, inf
      %3424 = vmin.xlane.f32.xlu0 %v3423
      %v3425 = vpop.xlane.xlu0 %3424
      %v3426 = vcvt.f32.s32 %v3425
      %v3427 = vcvt.f32.s32 %v3421
      %v3428 = vshll.u32 %v3427, 16
      %v3429 = vadd.s32 %v3428, %v3426
      %v3430 = vand.u32 %v3258, 65535
      %v3431 = vshra.s32 %v3258, 16
      %v3432 = vcvt.s32.f32 %v3430
      %v3433 = vcvt.s32.f32 %v3431
      %3434 = vmin.xlane.f32.xlu0 %v3433
      %v3435 = vpop.xlane.xlu0 %3434
      %vm3436 = vcmp.eq.f32.partialorder %v3433, %v3435
      %v3437 = vsel %vm3436, %v3432, inf
      %3438 = vmin.xlane.f32.xlu0 %v3437
      %v3439 = vpop.xlane.xlu0 %3438
      %v3440 = vcvt.f32.s32 %v3439
      %v3441 = vcvt.f32.s32 %v3435
      %v3442 = vshll.u32 %v3441, 16
      %v3443 = vadd.s32 %v3442, %v3440
      %v3444 = vand.u32 %v3259, 65535
      %v3445 = vshra.s32 %v3259, 16
      %v3446 = vcvt.s32.f32 %v3444
      %v3447 = vcvt.s32.f32 %v3445
      %3448 = vmin.xlane.f32.xlu0 %v3447
      %v3449 = vpop.xlane.xlu0 %3448
      %vm3450 = vcmp.eq.f32.partialorder %v3447, %v3449
      %v3451 = vsel %vm3450, %v3446, inf
      %3452 = vmin.xlane.f32.xlu0 %v3451
      %v3453 = vpop.xlane.xlu0 %3452
      %v3454 = vcvt.f32.s32 %v3453
      %v3455 = vcvt.f32.s32 %v3449
      %v3456 = vshll.u32 %v3455, 16
      %v3457 = vadd.s32 %v3456, %v3454
      %v3458 = vand.u32 %v3260, 65535
      %v3459 = vshra.s32 %v3260, 16
      %v3460 = vcvt.s32.f32 %v3458
      %v3461 = vcvt.s32.f32 %v3459
      %3462 = vmin.xlane.f32.xlu0 %v3461
      %v3463 = vpop.xlane.xlu0 %3462
      %vm3464 = vcmp.eq.f32.partialorder %v3461, %v3463
      %v3465 = vsel %vm3464, %v3460, inf
      %3466 = vmin.xlane.f32.xlu0 %v3465
      %v3467 = vpop.xlane.xlu0 %3466
      %v3468 = vcvt.f32.s32 %v3467
      %v3469 = vcvt.f32.s32 %v3463
      %v3470 = vshll.u32 %v3469, 16
      %v3471 = vadd.s32 %v3470, %v3468
      %v3472 = vand.u32 %v3261, 65535
      %v3473 = vshra.s32 %v3261, 16
      %v3474 = vcvt.s32.f32 %v3472
      %v3475 = vcvt.s32.f32 %v3473
      %3476 = vmin.xlane.f32.xlu0 %v3475
      %v3477 = vpop.xlane.xlu0 %3476
      %vm3478 = vcmp.eq.f32.partialorder %v3475, %v3477
      %v3479 = vsel %vm3478, %v3474, inf
      %3480 = vmin.xlane.f32.xlu0 %v3479
      %v3481 = vpop.xlane.xlu0 %3480
      %v3482 = vcvt.f32.s32 %v3481
      %v3483 = vcvt.f32.s32 %v3477
      %v3484 = vshll.u32 %v3483, 16
      %v3485 = vadd.s32 %v3484, %v3482
      %vm3486 = vcmp.eq.f32.partialorder %v3118, %v3214
      %vm3487 = vcmp.eq.f32.partialorder %v3119, %v3215
      %vm3488 = vcmp.eq.f32.partialorder %v3120, %v3216
      %vm3489 = vcmp.eq.f32.partialorder %v3121, %v3217
      %vm3490 = vcmp.eq.f32.partialorder %v3122, %v3218
      %vm3491 = vcmp.eq.f32.partialorder %v3123, %v3219
      %vm3492 = vcmp.eq.f32.partialorder %v3124, %v3220
      %vm3493 = vcmp.eq.f32.partialorder %v3125, %v3221
      %vm3494 = vcmp.eq.f32.partialorder %v3126, %v3222
      %vm3495 = vcmp.eq.f32.partialorder %v3127, %v3223
      %vm3496 = vcmp.eq.f32.partialorder %v3128, %v3224
      %vm3497 = vcmp.eq.f32.partialorder %v3129, %v3225
      %vm3498 = vcmp.eq.f32.partialorder %v3130, %v3226
      %vm3499 = vcmp.eq.f32.partialorder %v3131, %v3227
      %vm3500 = vcmp.eq.f32.partialorder %v3132, %v3228
      %vm3501 = vcmp.eq.f32.partialorder %v3133, %v3229
      %v3502 = vsel %vm3486, %v3134, 1073741824
      %v3503 = vsel %vm3487, %v3135, 1073741824
      %v3504 = vsel %vm3488, %v3136, 1073741824
      %v3505 = vsel %vm3489, %v3137, 1073741824
      %v3506 = vsel %vm3490, %v3138, 1073741824
      %v3507 = vsel %vm3491, %v3139, 1073741824
      %v3508 = vsel %vm3492, %v3140, 1073741824
      %v3509 = vsel %vm3493, %v3141, 1073741824
      %v3510 = vsel %vm3494, %v3142, 1073741824
      %v3511 = vsel %vm3495, %v3143, 1073741824
      %v3512 = vsel %vm3496, %v3144, 1073741824
      %v3513 = vsel %vm3497, %v3145, 1073741824
      %v3514 = vsel %vm3498, %v3146, 1073741824
      %v3515 = vsel %vm3499, %v3147, 1073741824
      %v3516 = vsel %vm3500, %v3148, 1073741824
      %v3517 = vsel %vm3501, %v3149, 1073741824
      %v3518 = vand.u32 %v3502, 65535
      %v3519 = vshra.s32 %v3502, 16
      %v3520 = vcvt.s32.f32 %v3518
      %v3521 = vcvt.s32.f32 %v3519
      %3522 = vmin.xlane.f32.xlu0 %v3521
      %v3523 = vpop.xlane.xlu0 %3522
      %vm3524 = vcmp.eq.f32.partialorder %v3521, %v3523
      %v3525 = vsel %vm3524, %v3520, inf
      %3526 = vmin.xlane.f32.xlu0 %v3525
      %v3527 = vpop.xlane.xlu0 %3526
      %v3528 = vcvt.f32.s32 %v3527
      %v3529 = vcvt.f32.s32 %v3523
      %v3530 = vshll.u32 %v3529, 16
      %v3531 = vadd.s32 %v3530, %v3528
      %v3532 = vand.u32 %v3503, 65535
      %v3533 = vshra.s32 %v3503, 16
      %v3534 = vcvt.s32.f32 %v3532
      %v3535 = vcvt.s32.f32 %v3533
      %3536 = vmin.xlane.f32.xlu0 %v3535
      %v3537 = vpop.xlane.xlu0 %3536
      %vm3538 = vcmp.eq.f32.partialorder %v3535, %v3537
      %v3539 = vsel %vm3538, %v3534, inf
      %3540 = vmin.xlane.f32.xlu0 %v3539
      %v3541 = vpop.xlane.xlu0 %3540
      %v3542 = vcvt.f32.s32 %v3541
      %v3543 = vcvt.f32.s32 %v3537
      %v3544 = vshll.u32 %v3543, 16
      %v3545 = vadd.s32 %v3544, %v3542
      %v3546 = vand.u32 %v3504, 65535
      %v3547 = vshra.s32 %v3504, 16
      %v3548 = vcvt.s32.f32 %v3546
      %v3549 = vcvt.s32.f32 %v3547
      %3550 = vmin.xlane.f32.xlu0 %v3549
      %v3551 = vpop.xlane.xlu0 %3550
      %vm3552 = vcmp.eq.f32.partialorder %v3549, %v3551
      %v3553 = vsel %vm3552, %v3548, inf
      %3554 = vmin.xlane.f32.xlu0 %v3553
      %v3555 = vpop.xlane.xlu0 %3554
      %v3556 = vcvt.f32.s32 %v3555
      %v3557 = vcvt.f32.s32 %v3551
      %v3558 = vshll.u32 %v3557, 16
      %v3559 = vadd.s32 %v3558, %v3556
      %v3560 = vand.u32 %v3505, 65535
      %v3561 = vshra.s32 %v3505, 16
      %v3562 = vcvt.s32.f32 %v3560
      %v3563 = vcvt.s32.f32 %v3561
      %3564 = vmin.xlane.f32.xlu0 %v3563
      %v3565 = vpop.xlane.xlu0 %3564
      %vm3566 = vcmp.eq.f32.partialorder %v3563, %v3565
      %v3567 = vsel %vm3566, %v3562, inf
      %3568 = vmin.xlane.f32.xlu0 %v3567
      %v3569 = vpop.xlane.xlu0 %3568
      %v3570 = vcvt.f32.s32 %v3569
      %v3571 = vcvt.f32.s32 %v3565
      %v3572 = vshll.u32 %v3571, 16
      %v3573 = vadd.s32 %v3572, %v3570
      %v3574 = vand.u32 %v3506, 65535
      %v3575 = vshra.s32 %v3506, 16
      %v3576 = vcvt.s32.f32 %v3574
      %v3577 = vcvt.s32.f32 %v3575
      %3578 = vmin.xlane.f32.xlu0 %v3577
      %v3579 = vpop.xlane.xlu0 %3578
      %vm3580 = vcmp.eq.f32.partialorder %v3577, %v3579
      %v3581 = vsel %vm3580, %v3576, inf
      %3582 = vmin.xlane.f32.xlu0 %v3581
      %v3583 = vpop.xlane.xlu0 %3582
      %v3584 = vcvt.f32.s32 %v3583
      %v3585 = vcvt.f32.s32 %v3579
      %v3586 = vshll.u32 %v3585, 16
      %v3587 = vadd.s32 %v3586, %v3584
      %v3588 = vand.u32 %v3507, 65535
      %v3589 = vshra.s32 %v3507, 16
      %v3590 = vcvt.s32.f32 %v3588
      %v3591 = vcvt.s32.f32 %v3589
      %3592 = vmin.xlane.f32.xlu0 %v3591
      %v3593 = vpop.xlane.xlu0 %3592
      %vm3594 = vcmp.eq.f32.partialorder %v3591, %v3593
      %v3595 = vsel %vm3594, %v3590, inf
      %3596 = vmin.xlane.f32.xlu0 %v3595
      %v3597 = vpop.xlane.xlu0 %3596
      %v3598 = vcvt.f32.s32 %v3597
      %v3599 = vcvt.f32.s32 %v3593
      %v3600 = vshll.u32 %v3599, 16
      %v3601 = vadd.s32 %v3600, %v3598
      %v3602 = vand.u32 %v3508, 65535
      %v3603 = vshra.s32 %v3508, 16
      %v3604 = vcvt.s32.f32 %v3602
      %v3605 = vcvt.s32.f32 %v3603
      %3606 = vmin.xlane.f32.xlu0 %v3605
      %v3607 = vpop.xlane.xlu0 %3606
      %vm3608 = vcmp.eq.f32.partialorder %v3605, %v3607
      %v3609 = vsel %vm3608, %v3604, inf
      %3610 = vmin.xlane.f32.xlu0 %v3609
      %v3611 = vpop.xlane.xlu0 %3610
      %v3612 = vcvt.f32.s32 %v3611
      %v3613 = vcvt.f32.s32 %v3607
      %v3614 = vshll.u32 %v3613, 16
      %v3615 = vadd.s32 %v3614, %v3612
      %v3616 = vand.u32 %v3509, 65535
      %v3617 = vshra.s32 %v3509, 16
      %v3618 = vcvt.s32.f32 %v3616
      %v3619 = vcvt.s32.f32 %v3617
      %3620 = vmin.xlane.f32.xlu0 %v3619
      %v3621 = vpop.xlane.xlu0 %3620
      %vm3622 = vcmp.eq.f32.partialorder %v3619, %v3621
      %v3623 = vsel %vm3622, %v3618, inf
      %3624 = vmin.xlane.f32.xlu0 %v3623
      %v3625 = vpop.xlane.xlu0 %3624
      %v3626 = vcvt.f32.s32 %v3625
      %v3627 = vcvt.f32.s32 %v3621
      %v3628 = vshll.u32 %v3627, 16
      %v3629 = vadd.s32 %v3628, %v3626
      %v3630 = vand.u32 %v3510, 65535
      %v3631 = vshra.s32 %v3510, 16
      %v3632 = vcvt.s32.f32 %v3630
      %v3633 = vcvt.s32.f32 %v3631
      %3634 = vmin.xlane.f32.xlu0 %v3633
      %v3635 = vpop.xlane.xlu0 %3634
      %vm3636 = vcmp.eq.f32.partialorder %v3633, %v3635
      %v3637 = vsel %vm3636, %v3632, inf
      %3638 = vmin.xlane.f32.xlu0 %v3637
      %v3639 = vpop.xlane.xlu0 %3638
      %v3640 = vcvt.f32.s32 %v3639
      %v3641 = vcvt.f32.s32 %v3635
      %v3642 = vshll.u32 %v3641, 16
      %v3643 = vadd.s32 %v3642, %v3640
      %v3644 = vand.u32 %v3511, 65535
      %v3645 = vshra.s32 %v3511, 16
      %v3646 = vcvt.s32.f32 %v3644
      %v3647 = vcvt.s32.f32 %v3645
      %3648 = vmin.xlane.f32.xlu0 %v3647
      %v3649 = vpop.xlane.xlu0 %3648
      %vm3650 = vcmp.eq.f32.partialorder %v3647, %v3649
      %v3651 = vsel %vm3650, %v3646, inf
      %3652 = vmin.xlane.f32.xlu0 %v3651
      %v3653 = vpop.xlane.xlu0 %3652
      %v3654 = vcvt.f32.s32 %v3653
      %v3655 = vcvt.f32.s32 %v3649
      %v3656 = vshll.u32 %v3655, 16
      %v3657 = vadd.s32 %v3656, %v3654
      %v3658 = vand.u32 %v3512, 65535
      %v3659 = vshra.s32 %v3512, 16
      %v3660 = vcvt.s32.f32 %v3658
      %v3661 = vcvt.s32.f32 %v3659
      %3662 = vmin.xlane.f32.xlu0 %v3661
      %v3663 = vpop.xlane.xlu0 %3662
      %vm3664 = vcmp.eq.f32.partialorder %v3661, %v3663
      %v3665 = vsel %vm3664, %v3660, inf
      %3666 = vmin.xlane.f32.xlu0 %v3665
      %v3667 = vpop.xlane.xlu0 %3666
      %v3668 = vcvt.f32.s32 %v3667
      %v3669 = vcvt.f32.s32 %v3663
      %v3670 = vshll.u32 %v3669, 16
      %v3671 = vadd.s32 %v3670, %v3668
      %v3672 = vand.u32 %v3513, 65535
      %v3673 = vshra.s32 %v3513, 16
      %v3674 = vcvt.s32.f32 %v3672
      %v3675 = vcvt.s32.f32 %v3673
      %3676 = vmin.xlane.f32.xlu0 %v3675
      %v3677 = vpop.xlane.xlu0 %3676
      %vm3678 = vcmp.eq.f32.partialorder %v3675, %v3677
      %v3679 = vsel %vm3678, %v3674, inf
      %3680 = vmin.xlane.f32.xlu0 %v3679
      %v3681 = vpop.xlane.xlu0 %3680
      %v3682 = vcvt.f32.s32 %v3681
      %v3683 = vcvt.f32.s32 %v3677
      %v3684 = vshll.u32 %v3683, 16
      %v3685 = vadd.s32 %v3684, %v3682
      %v3686 = vand.u32 %v3514, 65535
      %v3687 = vshra.s32 %v3514, 16
      %v3688 = vcvt.s32.f32 %v3686
      %v3689 = vcvt.s32.f32 %v3687
      %3690 = vmin.xlane.f32.xlu0 %v3689
      %v3691 = vpop.xlane.xlu0 %3690
      %vm3692 = vcmp.eq.f32.partialorder %v3689, %v3691
      %v3693 = vsel %vm3692, %v3688, inf
      %3694 = vmin.xlane.f32.xlu0 %v3693
      %v3695 = vpop.xlane.xlu0 %3694
      %v3696 = vcvt.f32.s32 %v3695
      %v3697 = vcvt.f32.s32 %v3691
      %v3698 = vshll.u32 %v3697, 16
      %v3699 = vadd.s32 %v3698, %v3696
      %v3700 = vand.u32 %v3515, 65535
      %v3701 = vshra.s32 %v3515, 16
      %v3702 = vcvt.s32.f32 %v3700
      %v3703 = vcvt.s32.f32 %v3701
      %3704 = vmin.xlane.f32.xlu0 %v3703
      %v3705 = vpop.xlane.xlu0 %3704
      %vm3706 = vcmp.eq.f32.partialorder %v3703, %v3705
      %v3707 = vsel %vm3706, %v3702, inf
      %3708 = vmin.xlane.f32.xlu0 %v3707
      %v3709 = vpop.xlane.xlu0 %3708
      %v3710 = vcvt.f32.s32 %v3709
      %v3711 = vcvt.f32.s32 %v3705
      %v3712 = vshll.u32 %v3711, 16
      %v3713 = vadd.s32 %v3712, %v3710
      %v3714 = vand.u32 %v3516, 65535
      %v3715 = vshra.s32 %v3516, 16
      %v3716 = vcvt.s32.f32 %v3714
      %v3717 = vcvt.s32.f32 %v3715
      %3718 = vmin.xlane.f32.xlu0 %v3717
      %v3719 = vpop.xlane.xlu0 %3718
      %vm3720 = vcmp.eq.f32.partialorder %v3717, %v3719
      %v3721 = vsel %vm3720, %v3716, inf
      %3722 = vmin.xlane.f32.xlu0 %v3721
      %v3723 = vpop.xlane.xlu0 %3722
      %v3724 = vcvt.f32.s32 %v3723
      %v3725 = vcvt.f32.s32 %v3719
      %v3726 = vshll.u32 %v3725, 16
      %v3727 = vadd.s32 %v3726, %v3724
      %v3728 = vand.u32 %v3517, 65535
      %v3729 = vshra.s32 %v3517, 16
      %v3730 = vcvt.s32.f32 %v3728
      %v3731 = vcvt.s32.f32 %v3729
      %3732 = vmin.xlane.f32.xlu0 %v3731
      %v3733 = vpop.xlane.xlu0 %3732
      %vm3734 = vcmp.eq.f32.partialorder %v3731, %v3733
      %v3735 = vsel %vm3734, %v3730, inf
      %3736 = vmin.xlane.f32.xlu0 %v3735
      %v3737 = vpop.xlane.xlu0 %3736
      %v3738 = vcvt.f32.s32 %v3737
      %v3739 = vcvt.f32.s32 %v3733
      %v3740 = vshll.u32 %v3739, 16
      %v3741 = vadd.s32 %v3740, %v3738
      %vm3742 = vcmp.lt.s32.totalorder %v3275, %v3531
      %v3743 = vsel %vm3742, %v3275, %v3531
      %vm3744 = vcmp.lt.s32.totalorder %v3289, %v3545
      %v3745 = vsel %vm3744, %v3289, %v3545
      %vm3746 = vcmp.lt.s32.totalorder %v3303, %v3559
      %v3747 = vsel %vm3746, %v3303, %v3559
      %vm3748 = vcmp.lt.s32.totalorder %v3317, %v3573
      %v3749 = vsel %vm3748, %v3317, %v3573
      %vm3750 = vcmp.lt.s32.totalorder %v3331, %v3587
      %v3751 = vsel %vm3750, %v3331, %v3587
      %vm3752 = vcmp.lt.s32.totalorder %v3345, %v3601
      %v3753 = vsel %vm3752, %v3345, %v3601
      %vm3754 = vcmp.lt.s32.totalorder %v3359, %v3615
      %v3755 = vsel %vm3754, %v3359, %v3615
      %vm3756 = vcmp.lt.s32.totalorder %v3373, %v3629
      %v3757 = vsel %vm3756, %v3373, %v3629
      %vm3758 = vcmp.lt.s32.totalorder %v3387, %v3643
      %v3759 = vsel %vm3758, %v3387, %v3643
      %vm3760 = vcmp.lt.s32.totalorder %v3401, %v3657
      %v3761 = vsel %vm3760, %v3401, %v3657
      %vm3762 = vcmp.lt.s32.totalorder %v3415, %v3671
      %v3763 = vsel %vm3762, %v3415, %v3671
      %vm3764 = vcmp.lt.s32.totalorder %v3429, %v3685
      %v3765 = vsel %vm3764, %v3429, %v3685
      %vm3766 = vcmp.lt.s32.totalorder %v3443, %v3699
      %v3767 = vsel %vm3766, %v3443, %v3699
      %vm3768 = vcmp.lt.s32.totalorder %v3457, %v3713
      %v3769 = vsel %vm3768, %v3457, %v3713
      %vm3770 = vcmp.lt.s32.totalorder %v3471, %v3727
      %v3771 = vsel %vm3770, %v3471, %v3727
      %vm3772 = vcmp.lt.s32.totalorder %v3485, %v3741
      %v3773 = vsel %vm3772, %v3485, %v3741
      %vm3774 = vcmask 31768
      %3775 = vst.msk [vmem:[#allocation5] sm:$0xff] %vm3774, %v3214
      %3776 = vst.msk [vmem:[#allocation5 + $0x8] sm:$0xff] %vm3774, %v3215
      %3777 = vst.msk [vmem:[#allocation5 + $0x10] sm:$0xff] %vm3774, %v3216
      %3778 = vst.msk [vmem:[#allocation5 + $0x18] sm:$0xff] %vm3774, %v3217
      %3779 = vst.msk [vmem:[#allocation5 + $0x20] sm:$0xff] %vm3774, %v3218
      %3780 = vst.msk [vmem:[#allocation5 + $0x28] sm:$0xff] %vm3774, %v3219
      %3781 = vst.msk [vmem:[#allocation5 + $0x30] sm:$0xff] %vm3774, %v3220
      %3782 = vst.msk [vmem:[#allocation5 + $0x38] sm:$0xff] %vm3774, %v3221
      %3783 = vst.msk [vmem:[#allocation5 + $0x40] sm:$0xff] %vm3774, %v3222
      %3784 = vst.msk [vmem:[#allocation5 + $0x48] sm:$0xff] %vm3774, %v3223
      %3785 = vst.msk [vmem:[#allocation5 + $0x50] sm:$0xff] %vm3774, %v3224
      %3786 = vst.msk [vmem:[#allocation5 + $0x58] sm:$0xff] %vm3774, %v3225
      %3787 = vst.msk [vmem:[#allocation5 + $0x60] sm:$0xff] %vm3774, %v3226
      %3788 = vst.msk [vmem:[#allocation5 + $0x68] sm:$0xff] %vm3774, %v3227
      %3789 = vst.msk [vmem:[#allocation5 + $0x70] sm:$0xff] %vm3774, %v3228
      %3790 = vst.msk [vmem:[#allocation5 + $0x78] sm:$0xff] %vm3774, %v3229
      %3791 = vst.msk [vmem:[#allocation6] sm:$0xff] %vm3774, %v3743
      %3792 = vst.msk [vmem:[#allocation6 + $0x8] sm:$0xff] %vm3774, %v3745
      %3793 = vst.msk [vmem:[#allocation6 + $0x10] sm:$0xff] %vm3774, %v3747
      %3794 = vst.msk [vmem:[#allocation6 + $0x18] sm:$0xff] %vm3774, %v3749
      %3795 = vst.msk [vmem:[#allocation6 + $0x20] sm:$0xff] %vm3774, %v3751
      %3796 = vst.msk [vmem:[#allocation6 + $0x28] sm:$0xff] %vm3774, %v3753
      %3797 = vst.msk [vmem:[#allocation6 + $0x30] sm:$0xff] %vm3774, %v3755
      %3798 = vst.msk [vmem:[#allocation6 + $0x38] sm:$0xff] %vm3774, %v3757
      %3799 = vst.msk [vmem:[#allocation6 + $0x40] sm:$0xff] %vm3774, %v3759
      %3800 = vst.msk [vmem:[#allocation6 + $0x48] sm:$0xff] %vm3774, %v3761
      %3801 = vst.msk [vmem:[#allocation6 + $0x50] sm:$0xff] %vm3774, %v3763
      %3802 = vst.msk [vmem:[#allocation6 + $0x58] sm:$0xff] %vm3774, %v3765
      %3803 = vst.msk [vmem:[#allocation6 + $0x60] sm:$0xff] %vm3774, %v3767
      %3804 = vst.msk [vmem:[#allocation6 + $0x68] sm:$0xff] %vm3774, %v3769
      %3805 = vst.msk [vmem:[#allocation6 + $0x70] sm:$0xff] %vm3774, %v3771
      %3806 = vst.msk [vmem:[#allocation6 + $0x78] sm:$0xff] %vm3774, %v3773
      %vm3807 = vcmp.lt.s32.totalorder %v661, 4
      %v3808 = vld [vmem:[#allocation5] sm:$0xff]
      %v3809 = vld [vmem:[#allocation5 + $0x8] sm:$0xff]
      %v3810 = vld [vmem:[#allocation5 + $0x10] sm:$0xff]
      %v3811 = vld [vmem:[#allocation5 + $0x18] sm:$0xff]
      %v3812 = vld [vmem:[#allocation5 + $0x20] sm:$0xff]
      %v3813 = vld [vmem:[#allocation5 + $0x28] sm:$0xff]
      %v3814 = vld [vmem:[#allocation5 + $0x30] sm:$0xff]
      %v3815 = vld [vmem:[#allocation5 + $0x38] sm:$0xff]
      %v3816 = vld [vmem:[#allocation5 + $0x40] sm:$0xff]
      %v3817 = vld [vmem:[#allocation5 + $0x48] sm:$0xff]
      %v3818 = vld [vmem:[#allocation5 + $0x50] sm:$0xff]
      %v3819 = vld [vmem:[#allocation5 + $0x58] sm:$0xff]
      %v3820 = vld [vmem:[#allocation5 + $0x60] sm:$0xff]
      %v3821 = vld [vmem:[#allocation5 + $0x68] sm:$0xff]
      %v3822 = vld [vmem:[#allocation5 + $0x70] sm:$0xff]
      %v3823 = vld [vmem:[#allocation5 + $0x78] sm:$0xff]
      %v3824 = vsel %vm3807, 1, 0
      %vm3825 = vcmp.eq.s32.totalorder %v3824, 1
      %v3826 = vsel %vm3825, %v3808, -inf
      %v3827 = vsel %vm3825, %v3809, -inf
      %v3828 = vsel %vm3825, %v3810, -inf
      %v3829 = vsel %vm3825, %v3811, -inf
      %v3830 = vsel %vm3825, %v3812, -inf
      %v3831 = vsel %vm3825, %v3813, -inf
      %v3832 = vsel %vm3825, %v3814, -inf
      %v3833 = vsel %vm3825, %v3815, -inf
      %v3834 = vsel %vm3825, %v3816, -inf
      %v3835 = vsel %vm3825, %v3817, -inf
      %v3836 = vsel %vm3825, %v3818, -inf
      %v3837 = vsel %vm3825, %v3819, -inf
      %v3838 = vsel %vm3825, %v3820, -inf
      %v3839 = vsel %vm3825, %v3821, -inf
      %v3840 = vsel %vm3825, %v3822, -inf
      %v3841 = vsel %vm3825, %v3823, -inf
      %3842 = vst [vmem:[#allocation3] sm:$0xff] %v3826
      %3843 = vst [vmem:[#allocation3 + $0x8] sm:$0xff] %v3827
      %3844 = vst [vmem:[#allocation3 + $0x10] sm:$0xff] %v3828
      %3845 = vst [vmem:[#allocation3 + $0x18] sm:$0xff] %v3829
      %3846 = vst [vmem:[#allocation3 + $0x20] sm:$0xff] %v3830
      %3847 = vst [vmem:[#allocation3 + $0x28] sm:$0xff] %v3831
      %3848 = vst [vmem:[#allocation3 + $0x30] sm:$0xff] %v3832
      %3849 = vst [vmem:[#allocation3 + $0x38] sm:$0xff] %v3833
      %3850 = vst [vmem:[#allocation3 + $0x40] sm:$0xff] %v3834
      %3851 = vst [vmem:[#allocation3 + $0x48] sm:$0xff] %v3835
      %3852 = vst [vmem:[#allocation3 + $0x50] sm:$0xff] %v3836
      %3853 = vst [vmem:[#allocation3 + $0x58] sm:$0xff] %v3837
      %3854 = vst [vmem:[#allocation3 + $0x60] sm:$0xff] %v3838
      %3855 = vst [vmem:[#allocation3 + $0x68] sm:$0xff] %v3839
      %3856 = vst [vmem:[#allocation3 + $0x70] sm:$0xff] %v3840
      %3857 = vst [vmem:[#allocation3 + $0x78] sm:$0xff] %v3841
      %v3858 = vld [vmem:[#allocation6] sm:$0xff]
      %v3859 = vld [vmem:[#allocation6 + $0x8] sm:$0xff]
      %v3860 = vld [vmem:[#allocation6 + $0x10] sm:$0xff]
      %v3861 = vld [vmem:[#allocation6 + $0x18] sm:$0xff]
      %v3862 = vld [vmem:[#allocation6 + $0x20] sm:$0xff]
      %v3863 = vld [vmem:[#allocation6 + $0x28] sm:$0xff]
      %v3864 = vld [vmem:[#allocation6 + $0x30] sm:$0xff]
      %v3865 = vld [vmem:[#allocation6 + $0x38] sm:$0xff]
      %v3866 = vld [vmem:[#allocation6 + $0x40] sm:$0xff]
      %v3867 = vld [vmem:[#allocation6 + $0x48] sm:$0xff]
      %v3868 = vld [vmem:[#allocation6 + $0x50] sm:$0xff]
      %v3869 = vld [vmem:[#allocation6 + $0x58] sm:$0xff]
      %v3870 = vld [vmem:[#allocation6 + $0x60] sm:$0xff]
      %v3871 = vld [vmem:[#allocation6 + $0x68] sm:$0xff]
      %v3872 = vld [vmem:[#allocation6 + $0x70] sm:$0xff]
      %v3873 = vld [vmem:[#allocation6 + $0x78] sm:$0xff]
      %v3874 = vsel %vm3825, %v3858, 4294967295
      %v3875 = vsel %vm3825, %v3859, 4294967295
      %v3876 = vsel %vm3825, %v3860, 4294967295
      %v3877 = vsel %vm3825, %v3861, 4294967295
      %v3878 = vsel %vm3825, %v3862, 4294967295
      %v3879 = vsel %vm3825, %v3863, 4294967295
      %v3880 = vsel %vm3825, %v3864, 4294967295
      %v3881 = vsel %vm3825, %v3865, 4294967295
      %v3882 = vsel %vm3825, %v3866, 4294967295
      %v3883 = vsel %vm3825, %v3867, 4294967295
      %v3884 = vsel %vm3825, %v3868, 4294967295
      %v3885 = vsel %vm3825, %v3869, 4294967295
      %v3886 = vsel %vm3825, %v3870, 4294967295
      %v3887 = vsel %vm3825, %v3871, 4294967295
      %v3888 = vsel %vm3825, %v3872, 4294967295
      %v3889 = vsel %vm3825, %v3873, 4294967295
      %3890 = vst [vmem:[#allocation4] sm:$0xff] %v3874
      %3891 = vst [vmem:[#allocation4 + $0x8] sm:$0xff] %v3875
      %3892 = vst [vmem:[#allocation4 + $0x10] sm:$0xff] %v3876
      %3893 = vst [vmem:[#allocation4 + $0x18] sm:$0xff] %v3877
      %3894 = vst [vmem:[#allocation4 + $0x20] sm:$0xff] %v3878
      %3895 = vst [vmem:[#allocation4 + $0x28] sm:$0xff] %v3879
      %3896 = vst [vmem:[#allocation4 + $0x30] sm:$0xff] %v3880
      %3897 = vst [vmem:[#allocation4 + $0x38] sm:$0xff] %v3881
      %3898 = vst [vmem:[#allocation4 + $0x40] sm:$0xff] %v3882
      %3899 = vst [vmem:[#allocation4 + $0x48] sm:$0xff] %v3883
      %3900 = vst [vmem:[#allocation4 + $0x50] sm:$0xff] %v3884
      %3901 = vst [vmem:[#allocation4 + $0x58] sm:$0xff] %v3885
      %3902 = vst [vmem:[#allocation4 + $0x60] sm:$0xff] %v3886
      %3903 = vst [vmem:[#allocation4 + $0x68] sm:$0xff] %v3887
      %3904 = vst [vmem:[#allocation4 + $0x70] sm:$0xff] %v3888
      %3905 = vst [vmem:[#allocation4 + $0x78] sm:$0xff] %v3889
      // Predicated region
      $region33: #{tpu_custom_call.1} parent=27 // pred_check
        %p3906 = pneg %p219
      $region34: #{tpu_custom_call.1} parent=27 // pred_check_branch
        %3908 = sbr.rel (%p3906) target = $region36
      $region35: #{tpu_custom_call.1} parent=27 // pred_region
        %v3909 = vld [vmem:[#allocation4] sm:$0xff]
        %v3910 = vld [vmem:[#allocation4 + $0x8] sm:$0xff]
        %v3911 = vld [vmem:[#allocation4 + $0x10] sm:$0xff]
        %v3912 = vld [vmem:[#allocation4 + $0x18] sm:$0xff]
        %v3913 = vld [vmem:[#allocation4 + $0x20] sm:$0xff]
        %v3914 = vld [vmem:[#allocation4 + $0x28] sm:$0xff]
        %v3915 = vld [vmem:[#allocation4 + $0x30] sm:$0xff]
        %v3916 = vld [vmem:[#allocation4 + $0x38] sm:$0xff]
        %v3917 = vld [vmem:[#allocation4 + $0x40] sm:$0xff]
        %v3918 = vld [vmem:[#allocation4 + $0x48] sm:$0xff]
        %v3919 = vld [vmem:[#allocation4 + $0x50] sm:$0xff]
        %v3920 = vld [vmem:[#allocation4 + $0x58] sm:$0xff]
        %v3921 = vld [vmem:[#allocation4 + $0x60] sm:$0xff]
        %v3922 = vld [vmem:[#allocation4 + $0x68] sm:$0xff]
        %v3923 = vld [vmem:[#allocation4 + $0x70] sm:$0xff]
        %v3924 = vld [vmem:[#allocation4 + $0x78] sm:$0xff]
        %vm3925 = vcmask 31744
        %3926 = vst.msk [vmem:[%s216] sm:$0xff] %vm3925, %v3909
        %3927 = vst.msk [vmem:[%s216 + $0x8] sm:$0xff] %vm3925, %v3910
        %3928 = vst.msk [vmem:[%s216 + $0x10] sm:$0xff] %vm3925, %v3911
        %3929 = vst.msk [vmem:[%s216 + $0x18] sm:$0xff] %vm3925, %v3912
        %3930 = vst.msk [vmem:[%s216 + $0x20] sm:$0xff] %vm3925, %v3913
        %3931 = vst.msk [vmem:[%s216 + $0x28] sm:$0xff] %vm3925, %v3914
        %3932 = vst.msk [vmem:[%s216 + $0x30] sm:$0xff] %vm3925, %v3915
        %3933 = vst.msk [vmem:[%s216 + $0x38] sm:$0xff] %vm3925, %v3916
        %3934 = vst.msk [vmem:[%s216 + $0x40] sm:$0xff] %vm3925, %v3917
        %3935 = vst.msk [vmem:[%s216 + $0x48] sm:$0xff] %vm3925, %v3918
        %3936 = vst.msk [vmem:[%s216 + $0x50] sm:$0xff] %vm3925, %v3919
        %3937 = vst.msk [vmem:[%s216 + $0x58] sm:$0xff] %vm3925, %v3920
        %3938 = vst.msk [vmem:[%s216 + $0x60] sm:$0xff] %vm3925, %v3921
        %3939 = vst.msk [vmem:[%s216 + $0x68] sm:$0xff] %vm3925, %v3922
        %3940 = vst.msk [vmem:[%s216 + $0x70] sm:$0xff] %vm3925, %v3923
        %3941 = vst.msk [vmem:[%s216 + $0x78] sm:$0xff] %vm3925, %v3924
      $region36: #{tpu_custom_call.1} parent=27 // pred_fallthru
        _
      %s3942 = smul.u32 16, %s19
      %p3943 = scmp.lt.s32.totalorder %s18, 1
      %s3944 = scalar_select %p3943, %s18, 1
      %p3945 = scmp.lt.s32.totalorder %s3942, 15
      %s3946 = scalar_select %p3945, %s3942, 15
      %s3947 = smul.addr %s3944, 16
      %s3948 = sadd.s32 %s3946, %s3947
      %s3949 = smul.addr %s3948, 8
      %s3950 = scalar_lea.vmem %s2, %s3949
      // Predicated region
      $region37: #{tpu_custom_call.1} parent=27 // pred_check
        %p3951 = pneg %p108
      $region38: #{tpu_custom_call.1} parent=27 // pred_check_branch
        %3953 = sbr.rel (%p3951) target = $region40
      $region39: #{tpu_custom_call.1} parent=27 // pred_region
        %s3954 = smul.u32 16, %s19
      $region40: #{tpu_custom_call.1} parent=27 // pred_fallthru
        _
    $region28: #{tpu_custom_call.1} parent=5 // pred_fallthru
      _
    %p3955 = scmp.le.s32.totalorder 2, %s8
    // Predicated region
    $region41: #{tpu_custom_call.1} parent=5 // pred_check
      %p3956 = pneg %p3955
    $region42: #{tpu_custom_call.1} parent=5 // pred_check_branch
      %3958 = sbr.rel (%p3956) target = $region44
    $region43: #{tpu_custom_call.1} parent=5 // pred_region
      %s3959 = ssub.s32 %s8, 2
      // Predicated region
      $region45: #{tpu_custom_call.1} parent=43 // pred_check
        %p3960 = pneg %p114
      $region46: #{tpu_custom_call.1} parent=43 // pred_check_branch
        %3962 = sbr.rel (%p3960) target = $region48
      $region47: #{tpu_custom_call.1} parent=43 // pred_region
        %s3963 = smul.u32 16, %s22
        %p3964 = scmp.lt.s32.totalorder %s21, 1
        %s3965 = scalar_select %p3964, %s21, 1
        %p3966 = scmp.lt.s32.totalorder %s3963, 15
        %s3967 = scalar_select %p3966, %s3963, 15
        %s3968 = smul.addr %s3965, 16
        %s3969 = sadd.s32 %s3967, %s3968
        %s3970 = smul.addr %s3969, 8
        %s3971 = scalar_lea.vmem %s2, %s3970
      $region48: #{tpu_custom_call.1} parent=43 // pred_fallthru
        _
    $region44: #{tpu_custom_call.1} parent=5 // pred_fallthru
      _
  $region6: #{tpu_custom_call.1} parent=0 // loop_footer
    %s12 = sadd.s32 1, %s8
  $region7: #{tpu_custom_call.1} parent=0 // loop_footer_branch
    %7 = sbr.rel target = $region3
  $region8: #{tpu_custom_call.1} parent=0 // loop_exit
    _

</llo_original>
